<compile_context>
chip_gen: v7x
topology: tpu7x:2x2x1
jax: 0.10.0
libtpu: 0.0.40
codegen_flags: <defaults>
</compile_context>

<pallas_src>
import jax
import jax.numpy as jnp
from jax.experimental import pallas as pl
from jax.experimental.pallas import tpu as pltpu


NEG_SLOPE = 0.01   # torch.nn.LeakyReLU default negative_slope
LANE = 128         # TPU lane width; logits dim padded to a multiple of this.


def classifier_kernel(f1_ref, f2_ref, w1_ref, b_ref, w2_ref, o_ref):
    # f1,f2: [B,S,H] f32   w1: [2H,D] bf16   b: [1,D+Cp] f32
    # w2:    [D,Cp] bf16   o: [B,Cp] f32
    H = f1_ref.shape[2]
    D = w1_ref.shape[1]

    # CLS-token extraction fused into the kernel (no standalone XLA slice).
    x1 = f1_ref[:, 0, :].astype(jnp.bfloat16)
    x2 = f2_ref[:, 0, :].astype(jnp.bfloat16)

    # Fused concat: [x1 | x2] @ W1 == x1 @ W1[:H] + x2 @ W1[H:]
    # (static slices of the single contiguous W1 ref; sublane/lane aligned).
    h = (jnp.dot(x1, w1_ref[:H, :], preferred_element_type=jnp.float32)
         + jnp.dot(x2, w1_ref[H:, :], preferred_element_type=jnp.float32)
         + b_ref[:, :D])

    # Dropout(p=0.3) -> identity in eval mode.
    # LeakyReLU kept in f32 on the VPU (v5e has no bf16 VALUs).
    h = jnp.where(h > 0, h, NEG_SLOPE * h)

    y = (jnp.dot(h.astype(jnp.bfloat16), w2_ref[...],
                 preferred_element_type=jnp.float32)
         + b_ref[:, D:])
    o_ref[...] = y.astype(o_ref.dtype)


def prepare_params(w1, b1, w2, b2):
    """One-time weight prep: bf16 storage, single contiguous W1, packed bias
    row, lane-padded logits dim."""
    twoH, D = w1.shape
    C = w2.shape[1]
    Cp = ((C + LANE - 1) // LANE) * LANE

    w1_bf = jnp.asarray(w1, jnp.bfloat16)                          # [2H, D]
    w2_p = jnp.zeros((D, Cp), jnp.bfloat16).at[:, :C].set(
        jnp.asarray(w2, jnp.bfloat16))
    # Packed biases: [b1 (D) | b2 padded to Cp].  Padded logit columns have
    # weight 0 / bias 0 -> logit 0; safe because the wrapper slices back to C.
    # (Pad with -inf instead if the padded [B,Cp] output is consumed directly.)
    b = jnp.zeros((1, D + Cp), jnp.float32)
    b = b.at[:, :D].set(jnp.asarray(b1, jnp.float32).reshape(1, D))
    b = b.at[:, D:D + C].set(jnp.asarray(b2, jnp.float32).reshape(1, C))
    return dict(w1=w1_bf, b=b, w2=w2_p, n_classes=C, inner_dim=D)


def pooler_forward(features1, features2, params):
    """Mirror Pooler.forward on pre-extracted encoder features ([B, S, H] each).

    Returns logits [B, n_classes] f32.
    """
    B, S, H = features1.shape
    D = params["inner_dim"]
    Cp = params["w2"].shape[1]
    C = params["n_classes"]

    cost = pl.CostEstimate(
        flops=2 * B * (2 * H) * D + 2 * B * D * Cp,
        transcendentals=0,
        bytes_accessed=(features1.size + features2.size) * 4
                       + params["w1"].size * 2 + params["w2"].size * 2
                       + params["b"].size * 4 + B * Cp * 4,
    )

    # Whole problem (~2.6 MiB) fits comfortably in VMEM on every generation
    # (v7x 64 MiB, v5e/v6e 128 MiB): no grid, full-array VMEM-resident blocks.
    in_specs = [pl.BlockSpec(memory_space=pltpu.MemorySpace.VMEM)
                for _ in range(5)]
    out_padded = pl.pallas_call(
        classifier_kernel,
        out_shape=jax.ShapeDtypeStruct((B, Cp), jnp.float32),
        in_specs=in_specs,
        out_specs=pl.BlockSpec(memory_space=pltpu.MemorySpace.VMEM),
        cost_estimate=cost,
    )(features1, features2, params["w1"], params["b"], params["w2"])
    return out_padded[:, :C]


if __name__ == "__main__":
    # Module-consistent shapes: hidden H = 768 (RoBERTa base), inner_dim = 768,
    # small batch / seq / classes.
    B, S, H = 2, 8, 768
    inner_dim = 768
    n_classes = 8

    key = jax.random.PRNGKey(0)
    k_f1, k_f2, k_w1, k_b1, k_w2, k_b2 = jax.random.split(key, 6)

    # Synthetic encoder outputs (deterministic stand-ins for extract_features).
    features1 = jax.random.normal(k_f1, (B, S, H), dtype=jnp.float32)
    features2 = jax.random.normal(k_f2, (B, S, H), dtype=jnp.float32)

    # Deterministic classifier parameters (shapes from the module __init__).
    w1 = jax.random.normal(k_w1, (2 * H, inner_dim), dtype=jnp.float32) * 0.02
    b1 = jax.random.normal(k_b1, (1, inner_dim), dtype=jnp.float32) * 0.02
    w2 = jax.random.normal(k_w2, (inner_dim, n_classes), dtype=jnp.float32) * 0.02
    b2 = jax.random.normal(k_b2, (1, n_classes), dtype=jnp.float32) * 0.02

    params = prepare_params(w1, b1, w2, b2)

    out = pooler_forward(features1, features2, params)
    out = jax.block_until_ready(out)
    assert out.shape == (B, n_classes)

    # Reference 1: mirror the kernel's bf16-weight / f32-accumulate math.
    D = inner_dim
    x1r = features1[:, 0, :].astype(jnp.bfloat16)
    x2r = features2[:, 0, :].astype(jnp.bfloat16)
    h_ref = (jnp.dot(x1r, params["w1"][:H], preferred_element_type=jnp.float32)
             + jnp.dot(x2r, params["w1"][H:], preferred_element_type=jnp.float32)
             + params["b"][:, :D])
    h_ref = jnp.where(h_ref > 0, h_ref, NEG_SLOPE * h_ref)
    y_ref = (jnp.dot(h_ref.astype(jnp.bfloat16), params["w2"],
                     preferred_element_type=jnp.float32)
             + params["b"][:, D:])[:, :n_classes]
    assert jnp.allclose(out, y_ref, atol=1e-2, rtol=1e-2)

    # Reference 2 (loose): original full-f32 module math; difference is only
    # the bf16 weight/activation quantization.
    x_f32 = jnp.concatenate((features1[:, 0, :], features2[:, 0, :]), axis=1)
    h_f32 = x_f32 @ w1 + b1
    h_f32 = jnp.where(h_f32 > 0, h_f32, NEG_SLOPE * h_f32)
    y_f32 = h_f32 @ w2 + b2
    assert jnp.allclose(out, y_f32, atol=5e-2, rtol=5e-2)

    print("KERNEL_OK")
</pallas_src>

<mosaic_0001>
module attributes {stable_mosaic.version = 11 : i64} {
  func.func @classifier_kernel(%arg0: memref<2x8x768xf32, #tpu.memory_space<vmem>>, %arg1: memref<2x8x768xf32, #tpu.memory_space<vmem>>, %arg2: memref<1536x768xbf16, #tpu.memory_space<vmem>>, %arg3: memref<1x896xf32, #tpu.memory_space<vmem>>, %arg4: memref<768x128xbf16, #tpu.memory_space<vmem>>, %arg5: memref<2x128xf32, #tpu.memory_space<vmem>>) attributes {dimension_semantics = [], scalar_prefetch = 0 : i64, scratch_operands = 0 : i64, tpu.core_type = #tpu.core_type<tc>} {
    %c0 = arith.constant 0 : index
    %c0_0 = arith.constant 0 : index
    %c0_1 = arith.constant 0 : index
    %0 = vector.load %arg0[%c0, %c0_0, %c0_1] : memref<2x8x768xf32, #tpu.memory_space<vmem>>, vector<2x1x768xf32>
    %1 = vector.shape_cast %0 : vector<2x1x768xf32> to vector<2x768xf32>
    %2 = arith.truncf %1 : vector<2x768xf32> to vector<2x768xbf16>
    %c0_2 = arith.constant 0 : index
    %c0_3 = arith.constant 0 : index
    %c0_4 = arith.constant 0 : index
    %3 = vector.load %arg1[%c0_2, %c0_3, %c0_4] : memref<2x8x768xf32, #tpu.memory_space<vmem>>, vector<2x1x768xf32>
    %4 = vector.shape_cast %3 : vector<2x1x768xf32> to vector<2x768xf32>
    %5 = arith.truncf %4 : vector<2x768xf32> to vector<2x768xbf16>
    %c0_5 = arith.constant 0 : index
    %c0_6 = arith.constant 0 : index
    %6 = vector.load %arg2[%c0_5, %c0_6] : memref<1536x768xbf16, #tpu.memory_space<vmem>>, vector<768x768xbf16>
    %cst = arith.constant dense<0.000000e+00> : vector<2x768xf32>
    %7 = tpu.matmul %2, %6, %cst {dimension_numbers = #tpu.dot_dimension_numbers<[1], [0], [0], [1], [0, 0, 1, 1], [], []>} : vector<2x768xbf16>, vector<768x768xbf16>, vector<2x768xf32> -> vector<2x768xf32>
    %c768 = arith.constant 768 : index
    %c0_7 = arith.constant 0 : index
    %8 = vector.load %arg2[%c768, %c0_7] : memref<1536x768xbf16, #tpu.memory_space<vmem>>, vector<768x768xbf16>
    %cst_8 = arith.constant dense<0.000000e+00> : vector<2x768xf32>
    %9 = tpu.matmul %5, %8, %cst_8 {dimension_numbers = #tpu.dot_dimension_numbers<[1], [0], [0], [1], [0, 0, 1, 1], [], []>} : vector<2x768xbf16>, vector<768x768xbf16>, vector<2x768xf32> -> vector<2x768xf32>
    %10 = arith.addf %7, %9 : vector<2x768xf32>
    %c0_9 = arith.constant 0 : index
    %c0_10 = arith.constant 0 : index
    %11 = vector.load %arg3[%c0_9, %c0_10] : memref<1x896xf32, #tpu.memory_space<vmem>>, vector<1x768xf32>
    %12 = vector.broadcast %11 : vector<1x768xf32> to vector<2x768xf32>
    %13 = arith.addf %10, %12 : vector<2x768xf32>
    %cst_11 = arith.constant 0.000000e+00 : f32
    %14 = vector.broadcast %cst_11 : f32 to vector<2x768xf32>
    %15 = arith.cmpf ogt, %13, %14 : vector<2x768xf32>
    %cst_12 = arith.constant 0.00999999977 : f32
    %16 = vector.broadcast %cst_12 : f32 to vector<2x768xf32>
    %17 = arith.mulf %16, %13 : vector<2x768xf32>
    %18 = arith.select %15, %13, %17 : vector<2x768xi1>, vector<2x768xf32>
    %19 = arith.truncf %18 : vector<2x768xf32> to vector<2x768xbf16>
    %c0_13 = arith.constant 0 : index
    %c0_14 = arith.constant 0 : index
    %20 = vector.load %arg4[%c0_13, %c0_14] : memref<768x128xbf16, #tpu.memory_space<vmem>>, vector<768x128xbf16>
    %cst_15 = arith.constant dense<0.000000e+00> : vector<2x128xf32>
    %21 = tpu.matmul %19, %20, %cst_15 {dimension_numbers = #tpu.dot_dimension_numbers<[1], [0], [0], [1], [0, 0, 1, 1], [], []>} : vector<2x768xbf16>, vector<768x128xbf16>, vector<2x128xf32> -> vector<2x128xf32>
    %c0_16 = arith.constant 0 : index
    %c768_17 = arith.constant 768 : index
    %22 = vector.load %arg3[%c0_16, %c768_17] : memref<1x896xf32, #tpu.memory_space<vmem>>, vector<1x128xf32>
    %23 = vector.broadcast %22 : vector<1x128xf32> to vector<2x128xf32>
    %24 = arith.addf %21, %23 : vector<2x128xf32>
    %c0_18 = arith.constant 0 : index
    %c0_19 = arith.constant 0 : index
    %25 = vector.load %arg5[%c0_18, %c0_19] : memref<2x128xf32, #tpu.memory_space<vmem>>, vector<2x128xf32>
    tpu.vector_store %arg5[%c0_18, %c0_19], %24 {strides = array<i32>} : memref<2x128xf32, #tpu.memory_space<vmem>>, vector<2x128xf32>,
    return
  }
}

</mosaic_0001>

<llo_original>
// kernel: tpu_custom_call.1
$region0: #{tpu_custom_call.1}
  #allocation0 [shape = 'u32[]', space=smem, size = 0x4, offset = 0x4, fixed_abs, tag = 'smem constant byte address 0x4 - core index']
  #allocation1 [shape = 'u32[144,128]{1,0:T(1,128)}', space=vmem, size = 0x12000, scoped, tag = 'internal scratch']
  %s0 = inlined_call_operand.hbm [shape: f32[2,8,768], index: 0, kind: input, shape index: {}]
  %s1 = inlined_call_operand.hbm [shape: f32[2,8,768], index: 1, kind: input, shape index: {}]
  %s2 = inlined_call_operand.hbm [shape: bf16[1536,768], index: 2, kind: input, shape index: {}]
  %s3 = inlined_call_operand.hbm [shape: f32[1,896], index: 3, kind: input, shape index: {}]
  %s4 = inlined_call_operand.hbm [shape: bf16[768,128], index: 4, kind: input, shape index: {}]
  %s5 = inlined_call_operand.hbm [shape: f32[2,128], index: 5, kind: output, shape index: {}]
  %s6 = sld [smem:[#allocation0]]
  $region50: #{tpu_custom_call.1} parent=0
    _
  %s8 = ssub.s32 1, %s6
  %s9 = scalar_select 0, %s8, %s6
  $region1: #{tpu_custom_call.1} parent=0
    #allocation2 [shape = 'u8[49152]{0}', space=vmem, size = 0xc000, scoped, tag = 'input window, operand 0, single buffered']
    #allocation3 [shape = 's32[1]{0}', space=sflag, size = 0x4, scoped, tag = 'scoped memory for tpu_custom_call.1']
    #allocation4 [shape = 's32[1]{0}', space=sflag, size = 0x4, scoped, tag = 'scoped memory for tpu_custom_call.1']
    #allocation5 [shape = 'u8[49152]{0}', space=vmem, size = 0xc000, scoped, tag = 'input window, operand 1, single buffered']
    #allocation6 [shape = 's32[1]{0}', space=sflag, size = 0x4, scoped, tag = 'scoped memory for tpu_custom_call.1']
    #allocation7 [shape = 'u8[2359296]{0}', space=vmem, size = 0x240000, scoped, tag = 'input window, operand 2, single buffered']
    #allocation8 [shape = 'u8[3584]{0}', space=vmem, size = 0x1000, scoped, tag = 'input window, operand 3, single buffered']
    #allocation9 [shape = 's32[1]{0}', space=sflag, size = 0x4, scoped, tag = 'scoped memory for tpu_custom_call.1']
    #allocation10 [shape = 'u8[196608]{0}', space=vmem, size = 0x30000, scoped, tag = 'input window, operand 4, single buffered']
    #allocation11 [shape = 'u8[1024]{0}', space=vmem, size = 0x400, scoped, tag = 'output window, operand 0, single buffered']
    %10 = vsyncpa [#allocation3], 0
    %11 = vsyncpa [#allocation6], 0
    %12 = vsyncpa [#allocation9], 0
    %13 = vsyncpa [#allocation4], 0
    // Predicated region
    $region2: #{tpu_custom_call.1} parent=1 // pred_check
      _
    $region3: #{tpu_custom_call.1} parent=1 // pred_check_branch
      %15 = sbr.rel (0) target = $region5
    $region4: #{tpu_custom_call.1} parent=1 // pred_region
      %s17 = ssub.s32 1536, 1536
      %18 = vsyncadd [#allocation3], %s17
      %s19 = sshll.u32 [#allocation2], 4
      %s20 = int_to_ptr.vmem [resolvable:$true] %s19
      %25 = dma.hbm_to_vmem [thread:$0]  %s0, 1536, %s20, [#allocation3], 768, 768, 48
    $region5: #{tpu_custom_call.1} parent=1 // pred_fallthru
      _
    // Predicated region
    $region6: #{tpu_custom_call.1} parent=1 // pred_check
      _
    $region7: #{tpu_custom_call.1} parent=1 // pred_check_branch
      %27 = sbr.rel (0) target = $region9
    $region8: #{tpu_custom_call.1} parent=1 // pred_region
      %s29 = ssub.s32 1536, 1536
      %30 = vsyncadd [#allocation6], %s29
      %s31 = sshll.u32 [#allocation5], 4
      %s32 = int_to_ptr.vmem [resolvable:$true] %s31
      %37 = dma.hbm_to_vmem [thread:$0]  %s1, 1536, %s32, [#allocation6], 768, 768, 48
    $region9: #{tpu_custom_call.1} parent=1 // pred_fallthru
      _
    // Predicated region
    $region10: #{tpu_custom_call.1} parent=1 // pred_check
      _
    $region11: #{tpu_custom_call.1} parent=1 // pred_check_branch
      %39 = sbr.rel (0) target = $region13
    $region12: #{tpu_custom_call.1} parent=1 // pred_region
      %s41 = ssub.s32 73728, 73728
      %42 = vsyncadd [#allocation6], %s41
      %s43 = sshll.u32 [#allocation7], 4
      %s44 = int_to_ptr.vmem [resolvable:$true] %s43
      %49 = dma.hbm_to_vmem [thread:$0]  %s2, 73728, %s44, [#allocation6], 384, 384, 24
    $region13: #{tpu_custom_call.1} parent=1 // pred_fallthru
      _
    // Predicated region
    $region14: #{tpu_custom_call.1} parent=1 // pred_check
      _
    $region15: #{tpu_custom_call.1} parent=1 // pred_check_branch
      %51 = sbr.rel (0) target = $region17
    $region16: #{tpu_custom_call.1} parent=1 // pred_region
      %s53 = ssub.s32 112, 112
      %54 = vsyncadd [#allocation9], %s53
      %s56 = sshll.u32 [#allocation8], 4
      %s57 = int_to_ptr.vmem [resolvable:$true] %s56
      %59 = dma.hbm_to_vmem [thread:$0]  %s3, 112, %s57, [#allocation9]
    $region17: #{tpu_custom_call.1} parent=1 // pred_fallthru
      _
    // Predicated region
    $region18: #{tpu_custom_call.1} parent=1 // pred_check
      _
    $region19: #{tpu_custom_call.1} parent=1 // pred_check_branch
      %61 = sbr.rel (0) target = $region21
    $region20: #{tpu_custom_call.1} parent=1 // pred_region
      %s63 = ssub.s32 6144, 6144
      %64 = vsyncadd [#allocation9], %s63
      %s65 = sshll.u32 [#allocation10], 4
      %s66 = int_to_ptr.vmem [resolvable:$true] %s65
      %71 = dma.hbm_to_vmem [thread:$0]  %s4, 6144, %s66, [#allocation9], 64, 64, 4
    $region21: #{tpu_custom_call.1} parent=1 // pred_fallthru
      _
    // Predicated region
    $region22: #{tpu_custom_call.1} parent=1 // pred_check
      _
    $region23: #{tpu_custom_call.1} parent=1 // pred_check_branch
      %73 = sbr.rel (0) target = $region25
    $region24: #{tpu_custom_call.1} parent=1 // pred_region
      %74 = dma.done [#allocation3], 1536
    $region25: #{tpu_custom_call.1} parent=1 // pred_fallthru
      _
    // Predicated region
    $region26: #{tpu_custom_call.1} parent=1 // pred_check
      _
    $region27: #{tpu_custom_call.1} parent=1 // pred_check_branch
      %76 = sbr.rel (0) target = $region29
    $region28: #{tpu_custom_call.1} parent=1 // pred_region
      %77 = dma.done [#allocation6], 1536
    $region29: #{tpu_custom_call.1} parent=1 // pred_fallthru
      _
    // Predicated region
    $region30: #{tpu_custom_call.1} parent=1 // pred_check
      _
    $region31: #{tpu_custom_call.1} parent=1 // pred_check_branch
      %79 = sbr.rel (0) target = $region33
    $region32: #{tpu_custom_call.1} parent=1 // pred_region
      %80 = dma.done [#allocation6], 73728
    $region33: #{tpu_custom_call.1} parent=1 // pred_fallthru
      _
    // Predicated region
    $region34: #{tpu_custom_call.1} parent=1 // pred_check
      _
    $region35: #{tpu_custom_call.1} parent=1 // pred_check_branch
      %82 = sbr.rel (0) target = $region37
    $region36: #{tpu_custom_call.1} parent=1 // pred_region
      %83 = dma.done [#allocation9], 112
    $region37: #{tpu_custom_call.1} parent=1 // pred_fallthru
      _
    // Predicated region
    $region38: #{tpu_custom_call.1} parent=1 // pred_check
      _
    $region39: #{tpu_custom_call.1} parent=1 // pred_check_branch
      %85 = sbr.rel (0) target = $region41
    $region40: #{tpu_custom_call.1} parent=1 // pred_region
      %86 = dma.done [#allocation9], 6144
    $region41: #{tpu_custom_call.1} parent=1 // pred_fallthru
      _
    %v88 = vld [vmem:[#allocation2] ss:$8 sm:$0xf]
    %v89 = vld [vmem:[#allocation2] ss:$8 sm:$0x30]
    %v90 = vor.u32 %v88, %v89
    %s91 = scalar_lea.vmem [#allocation2], 48
    %v92 = vld [vmem:[%s91] ss:$8 sm:$0xf]
    %v93 = vld [vmem:[%s91] ss:$8 sm:$0x30]
    %v94 = vor.u32 %v92, %v93
    %v97 = vlaneseq
    %v98 = vshrl.u32 %v97, 7
    %v99 = vsub.s32 0, %v98
    %v100 = vrot.slane %v90, %v99
    %v101 = vlaneseq
    %v102 = vshrl.u32 %v101, 7
    %v103 = vsub.s32 1, %v102
    %v104 = vrot.slane %v90, %v103
    %v105 = vlaneseq
    %v106 = vshrl.u32 %v105, 7
    %v107 = vsub.s32 2, %v106
    %v108 = vrot.slane %v90, %v107
    %v109 = vlaneseq
    %v110 = vshrl.u32 %v109, 7
    %v111 = vsub.s32 3, %v110
    %v112 = vrot.slane %v90, %v111
    %v113 = vlaneseq
    %v114 = vshrl.u32 %v113, 7
    %v115 = vsub.s32 4, %v114
    %v116 = vrot.slane %v90, %v115
    %v117 = vlaneseq
    %v118 = vshrl.u32 %v117, 7
    %v119 = vsub.s32 5, %v118
    %v120 = vrot.slane %v90, %v119
    %v121 = vlaneseq
    %v122 = vshrl.u32 %v121, 7
    %v123 = vsub.s32 0, %v122
    %v124 = vrot.slane %v94, %v123
    %v125 = vlaneseq
    %v126 = vshrl.u32 %v125, 7
    %v127 = vsub.s32 1, %v126
    %v128 = vrot.slane %v94, %v127
    %v129 = vlaneseq
    %v130 = vshrl.u32 %v129, 7
    %v131 = vsub.s32 2, %v130
    %v132 = vrot.slane %v94, %v131
    %v133 = vlaneseq
    %v134 = vshrl.u32 %v133, 7
    %v135 = vsub.s32 3, %v134
    %v136 = vrot.slane %v94, %v135
    %v137 = vlaneseq
    %v138 = vshrl.u32 %v137, 7
    %v139 = vsub.s32 4, %v138
    %v140 = vrot.slane %v94, %v139
    %v141 = vlaneseq
    %v142 = vshrl.u32 %v141, 7
    %v143 = vsub.s32 5, %v142
    %v144 = vrot.slane %v94, %v143
    %v157 = vpack.c.bf16 %v100, %v100
    %v158 = vpack.c.bf16 %v104, %v104
    %v159 = vpack.c.bf16 %v108, %v108
    %v160 = vpack.c.bf16 %v112, %v112
    %v161 = vpack.c.bf16 %v116, %v116
    %v162 = vpack.c.bf16 %v120, %v120
    %v163 = vpack.c.bf16 %v124, %v124
    %v164 = vpack.c.bf16 %v128, %v128
    %v165 = vpack.c.bf16 %v132, %v132
    %v166 = vpack.c.bf16 %v136, %v136
    %v167 = vpack.c.bf16 %v140, %v140
    %v168 = vpack.c.bf16 %v144, %v144
    %v169 = vld [vmem:[#allocation5] ss:$8 sm:$0xf]
    %v170 = vld [vmem:[#allocation5] ss:$8 sm:$0x30]
    %v171 = vor.u32 %v169, %v170
    %s172 = scalar_lea.vmem [#allocation5], 48
    %v173 = vld [vmem:[%s172] ss:$8 sm:$0xf]
    %v174 = vld [vmem:[%s172] ss:$8 sm:$0x30]
    %v175 = vor.u32 %v173, %v174
    %v178 = vlaneseq
    %v179 = vshrl.u32 %v178, 7
    %v180 = vsub.s32 0, %v179
    %v181 = vrot.slane %v171, %v180
    %v182 = vlaneseq
    %v183 = vshrl.u32 %v182, 7
    %v184 = vsub.s32 1, %v183
    %v185 = vrot.slane %v171, %v184
    %v186 = vlaneseq
    %v187 = vshrl.u32 %v186, 7
    %v188 = vsub.s32 2, %v187
    %v189 = vrot.slane %v171, %v188
    %v190 = vlaneseq
    %v191 = vshrl.u32 %v190, 7
    %v192 = vsub.s32 3, %v191
    %v193 = vrot.slane %v171, %v192
    %v194 = vlaneseq
    %v195 = vshrl.u32 %v194, 7
    %v196 = vsub.s32 4, %v195
    %v197 = vrot.slane %v171, %v196
    %v198 = vlaneseq
    %v199 = vshrl.u32 %v198, 7
    %v200 = vsub.s32 5, %v199
    %v201 = vrot.slane %v171, %v200
    %v202 = vlaneseq
    %v203 = vshrl.u32 %v202, 7
    %v204 = vsub.s32 0, %v203
    %v205 = vrot.slane %v175, %v204
    %v206 = vlaneseq
    %v207 = vshrl.u32 %v206, 7
    %v208 = vsub.s32 1, %v207
    %v209 = vrot.slane %v175, %v208
    %v210 = vlaneseq
    %v211 = vshrl.u32 %v210, 7
    %v212 = vsub.s32 2, %v211
    %v213 = vrot.slane %v175, %v212
    %v214 = vlaneseq
    %v215 = vshrl.u32 %v214, 7
    %v216 = vsub.s32 3, %v215
    %v217 = vrot.slane %v175, %v216
    %v218 = vlaneseq
    %v219 = vshrl.u32 %v218, 7
    %v220 = vsub.s32 4, %v219
    %v221 = vrot.slane %v175, %v220
    %v222 = vlaneseq
    %v223 = vshrl.u32 %v222, 7
    %v224 = vsub.s32 5, %v223
    %v225 = vrot.slane %v175, %v224
    %v238 = vpack.c.bf16 %v181, %v181
    %v239 = vpack.c.bf16 %v185, %v185
    %v240 = vpack.c.bf16 %v189, %v189
    %v241 = vpack.c.bf16 %v193, %v193
    %v242 = vpack.c.bf16 %v197, %v197
    %v243 = vpack.c.bf16 %v201, %v201
    %v244 = vpack.c.bf16 %v205, %v205
    %v245 = vpack.c.bf16 %v209, %v209
    %v246 = vpack.c.bf16 %v213, %v213
    %v247 = vpack.c.bf16 %v217, %v217
    %v248 = vpack.c.bf16 %v221, %v221
    %v249 = vpack.c.bf16 %v225, %v225
    %v250 = vld [vmem:[#allocation7] sm:$0xff]
    %v251 = vld [vmem:[#allocation7 + $0x8] sm:$0xff]
    %v252 = vld [vmem:[#allocation7 + $0x10] sm:$0xff]
    %v253 = vld [vmem:[#allocation7 + $0x18] sm:$0xff]
    %v254 = vld [vmem:[#allocation7 + $0x20] sm:$0xff]
    %v255 = vld [vmem:[#allocation7 + $0x28] sm:$0xff]
    %v256 = vld [vmem:[#allocation7 + $0x30] sm:$0xff]
    %v257 = vld [vmem:[#allocation7 + $0x38] sm:$0xff]
    %v258 = vld [vmem:[#allocation7 + $0x40] sm:$0xff]
    %v259 = vld [vmem:[#allocation7 + $0x48] sm:$0xff]
    %v260 = vld [vmem:[#allocation7 + $0x50] sm:$0xff]
    %v261 = vld [vmem:[#allocation7 + $0x58] sm:$0xff]
    %v262 = vld [vmem:[#allocation7 + $0x60] sm:$0xff]
    %v263 = vld [vmem:[#allocation7 + $0x68] sm:$0xff]
    %v264 = vld [vmem:[#allocation7 + $0x70] sm:$0xff]
    %v265 = vld [vmem:[#allocation7 + $0x78] sm:$0xff]
    %v266 = vld [vmem:[#allocation7 + $0x80] sm:$0xff]
    %v267 = vld [vmem:[#allocation7 + $0x88] sm:$0xff]
    %v268 = vld [vmem:[#allocation7 + $0x90] sm:$0xff]
    %v269 = vld [vmem:[#allocation7 + $0x98] sm:$0xff]
    %v270 = vld [vmem:[#allocation7 + $0xa0] sm:$0xff]
    %v271 = vld [vmem:[#allocation7 + $0xa8] sm:$0xff]
    %v272 = vld [vmem:[#allocation7 + $0xb0] sm:$0xff]
    %v273 = vld [vmem:[#allocation7 + $0xb8] sm:$0xff]
    %v274 = vld [vmem:[#allocation7 + $0xc0] sm:$0xff]
    %v275 = vld [vmem:[#allocation7 + $0xc8] sm:$0xff]
    %v276 = vld [vmem:[#allocation7 + $0xd0] sm:$0xff]
    %v277 = vld [vmem:[#allocation7 + $0xd8] sm:$0xff]
    %v278 = vld [vmem:[#allocation7 + $0xe0] sm:$0xff]
    %v279 = vld [vmem:[#allocation7 + $0xe8] sm:$0xff]
    %v280 = vld [vmem:[#allocation7 + $0xf0] sm:$0xff]
    %v281 = vld [vmem:[#allocation7 + $0xf8] sm:$0xff]
    %v282 = vld [vmem:[#allocation7 + $0x100] sm:$0xff]
    %v283 = vld [vmem:[#allocation7 + $0x108] sm:$0xff]
    %v284 = vld [vmem:[#allocation7 + $0x110] sm:$0xff]
    %v285 = vld [vmem:[#allocation7 + $0x118] sm:$0xff]
    %v286 = vld [vmem:[#allocation7 + $0x120] sm:$0xff]
    %v287 = vld [vmem:[#allocation7 + $0x128] sm:$0xff]
    %v288 = vld [vmem:[#allocation7 + $0x130] sm:$0xff]
    %v289 = vld [vmem:[#allocation7 + $0x138] sm:$0xff]
    %v290 = vld [vmem:[#allocation7 + $0x140] sm:$0xff]
    %v291 = vld [vmem:[#allocation7 + $0x148] sm:$0xff]
    %v292 = vld [vmem:[#allocation7 + $0x150] sm:$0xff]
    %v293 = vld [vmem:[#allocation7 + $0x158] sm:$0xff]
    %v294 = vld [vmem:[#allocation7 + $0x160] sm:$0xff]
    %v295 = vld [vmem:[#allocation7 + $0x168] sm:$0xff]
    %v296 = vld [vmem:[#allocation7 + $0x170] sm:$0xff]
    %v297 = vld [vmem:[#allocation7 + $0x178] sm:$0xff]
    %v298 = vld [vmem:[#allocation7 + $0x180] sm:$0xff]
    %v299 = vld [vmem:[#allocation7 + $0x188] sm:$0xff]
    %v300 = vld [vmem:[#allocation7 + $0x190] sm:$0xff]
    %v301 = vld [vmem:[#allocation7 + $0x198] sm:$0xff]
    %v302 = vld [vmem:[#allocation7 + $0x1a0] sm:$0xff]
    %v303 = vld [vmem:[#allocation7 + $0x1a8] sm:$0xff]
    %v304 = vld [vmem:[#allocation7 + $0x1b0] sm:$0xff]
    %v305 = vld [vmem:[#allocation7 + $0x1b8] sm:$0xff]
    %v306 = vld [vmem:[#allocation7 + $0x1c0] sm:$0xff]
    %v307 = vld [vmem:[#allocation7 + $0x1c8] sm:$0xff]
    %v308 = vld [vmem:[#allocation7 + $0x1d0] sm:$0xff]
    %v309 = vld [vmem:[#allocation7 + $0x1d8] sm:$0xff]
    %v310 = vld [vmem:[#allocation7 + $0x1e0] sm:$0xff]
    %v311 = vld [vmem:[#allocation7 + $0x1e8] sm:$0xff]
    %v312 = vld [vmem:[#allocation7 + $0x1f0] sm:$0xff]
    %v313 = vld [vmem:[#allocation7 + $0x1f8] sm:$0xff]
    %v314 = vld [vmem:[#allocation7 + $0x200] sm:$0xff]
    %v315 = vld [vmem:[#allocation7 + $0x208] sm:$0xff]
    %v316 = vld [vmem:[#allocation7 + $0x210] sm:$0xff]
    %v317 = vld [vmem:[#allocation7 + $0x218] sm:$0xff]
    %v318 = vld [vmem:[#allocation7 + $0x220] sm:$0xff]
    %v319 = vld [vmem:[#allocation7 + $0x228] sm:$0xff]
    %v320 = vld [vmem:[#allocation7 + $0x230] sm:$0xff]
    %v321 = vld [vmem:[#allocation7 + $0x238] sm:$0xff]
    %v322 = vld [vmem:[#allocation7 + $0x240] sm:$0xff]
    %v323 = vld [vmem:[#allocation7 + $0x248] sm:$0xff]
    %v324 = vld [vmem:[#allocation7 + $0x250] sm:$0xff]
    %v325 = vld [vmem:[#allocation7 + $0x258] sm:$0xff]
    %v326 = vld [vmem:[#allocation7 + $0x260] sm:$0xff]
    %v327 = vld [vmem:[#allocation7 + $0x268] sm:$0xff]
    %v328 = vld [vmem:[#allocation7 + $0x270] sm:$0xff]
    %v329 = vld [vmem:[#allocation7 + $0x278] sm:$0xff]
    %v330 = vld [vmem:[#allocation7 + $0x280] sm:$0xff]
    %v331 = vld [vmem:[#allocation7 + $0x288] sm:$0xff]
    %v332 = vld [vmem:[#allocation7 + $0x290] sm:$0xff]
    %v333 = vld [vmem:[#allocation7 + $0x298] sm:$0xff]
    %v334 = vld [vmem:[#allocation7 + $0x2a0] sm:$0xff]
    %v335 = vld [vmem:[#allocation7 + $0x2a8] sm:$0xff]
    %v336 = vld [vmem:[#allocation7 + $0x2b0] sm:$0xff]
    %v337 = vld [vmem:[#allocation7 + $0x2b8] sm:$0xff]
    %v338 = vld [vmem:[#allocation7 + $0x2c0] sm:$0xff]
    %v339 = vld [vmem:[#allocation7 + $0x2c8] sm:$0xff]
    %v340 = vld [vmem:[#allocation7 + $0x2d0] sm:$0xff]
    %v341 = vld [vmem:[#allocation7 + $0x2d8] sm:$0xff]
    %v342 = vld [vmem:[#allocation7 + $0x2e0] sm:$0xff]
    %v343 = vld [vmem:[#allocation7 + $0x2e8] sm:$0xff]
    %v344 = vld [vmem:[#allocation7 + $0x2f0] sm:$0xff]
    %v345 = vld [vmem:[#allocation7 + $0x2f8] sm:$0xff]
    %v346 = vld [vmem:[#allocation7 + $0x300] sm:$0xff]
    %v347 = vld [vmem:[#allocation7 + $0x308] sm:$0xff]
    %v348 = vld [vmem:[#allocation7 + $0x310] sm:$0xff]
    %v349 = vld [vmem:[#allocation7 + $0x318] sm:$0xff]
    %v350 = vld [vmem:[#allocation7 + $0x320] sm:$0xff]
    %v351 = vld [vmem:[#allocation7 + $0x328] sm:$0xff]
    %v352 = vld [vmem:[#allocation7 + $0x330] sm:$0xff]
    %v353 = vld [vmem:[#allocation7 + $0x338] sm:$0xff]
    %v354 = vld [vmem:[#allocation7 + $0x340] sm:$0xff]
    %v355 = vld [vmem:[#allocation7 + $0x348] sm:$0xff]
    %v356 = vld [vmem:[#allocation7 + $0x350] sm:$0xff]
    %v357 = vld [vmem:[#allocation7 + $0x358] sm:$0xff]
    %v358 = vld [vmem:[#allocation7 + $0x360] sm:$0xff]
    %v359 = vld [vmem:[#allocation7 + $0x368] sm:$0xff]
    %v360 = vld [vmem:[#allocation7 + $0x370] sm:$0xff]
    %v361 = vld [vmem:[#allocation7 + $0x378] sm:$0xff]
    %v362 = vld [vmem:[#allocation7 + $0x380] sm:$0xff]
    %v363 = vld [vmem:[#allocation7 + $0x388] sm:$0xff]
    %v364 = vld [vmem:[#allocation7 + $0x390] sm:$0xff]
    %v365 = vld [vmem:[#allocation7 + $0x398] sm:$0xff]
    %v366 = vld [vmem:[#allocation7 + $0x3a0] sm:$0xff]
    %v367 = vld [vmem:[#allocation7 + $0x3a8] sm:$0xff]
    %v368 = vld [vmem:[#allocation7 + $0x3b0] sm:$0xff]
    %v369 = vld [vmem:[#allocation7 + $0x3b8] sm:$0xff]
    %v370 = vld [vmem:[#allocation7 + $0x3c0] sm:$0xff]
    %v371 = vld [vmem:[#allocation7 + $0x3c8] sm:$0xff]
    %v372 = vld [vmem:[#allocation7 + $0x3d0] sm:$0xff]
    %v373 = vld [vmem:[#allocation7 + $0x3d8] sm:$0xff]
    %v374 = vld [vmem:[#allocation7 + $0x3e0] sm:$0xff]
    %v375 = vld [vmem:[#allocation7 + $0x3e8] sm:$0xff]
    %v376 = vld [vmem:[#allocation7 + $0x3f0] sm:$0xff]
    %v377 = vld [vmem:[#allocation7 + $0x3f8] sm:$0xff]
    %v378 = vld [vmem:[#allocation7 + $0x400] sm:$0xff]
    %v379 = vld [vmem:[#allocation7 + $0x408] sm:$0xff]
    %v380 = vld [vmem:[#allocation7 + $0x410] sm:$0xff]
    %v381 = vld [vmem:[#allocation7 + $0x418] sm:$0xff]
    %v382 = vld [vmem:[#allocation7 + $0x420] sm:$0xff]
    %v383 = vld [vmem:[#allocation7 + $0x428] sm:$0xff]
    %v384 = vld [vmem:[#allocation7 + $0x430] sm:$0xff]
    %v385 = vld [vmem:[#allocation7 + $0x438] sm:$0xff]
    %v386 = vld [vmem:[#allocation7 + $0x440] sm:$0xff]
    %v387 = vld [vmem:[#allocation7 + $0x448] sm:$0xff]
    %v388 = vld [vmem:[#allocation7 + $0x450] sm:$0xff]
    %v389 = vld [vmem:[#allocation7 + $0x458] sm:$0xff]
    %v390 = vld [vmem:[#allocation7 + $0x460] sm:$0xff]
    %v391 = vld [vmem:[#allocation7 + $0x468] sm:$0xff]
    %v392 = vld [vmem:[#allocation7 + $0x470] sm:$0xff]
    %v393 = vld [vmem:[#allocation7 + $0x478] sm:$0xff]
    %v394 = vld [vmem:[#allocation7 + $0x480] sm:$0xff]
    %v395 = vld [vmem:[#allocation7 + $0x488] sm:$0xff]
    %v396 = vld [vmem:[#allocation7 + $0x490] sm:$0xff]
    %v397 = vld [vmem:[#allocation7 + $0x498] sm:$0xff]
    %v398 = vld [vmem:[#allocation7 + $0x4a0] sm:$0xff]
    %v399 = vld [vmem:[#allocation7 + $0x4a8] sm:$0xff]
    %v400 = vld [vmem:[#allocation7 + $0x4b0] sm:$0xff]
    %v401 = vld [vmem:[#allocation7 + $0x4b8] sm:$0xff]
    %v402 = vld [vmem:[#allocation7 + $0x4c0] sm:$0xff]
    %v403 = vld [vmem:[#allocation7 + $0x4c8] sm:$0xff]
    %v404 = vld [vmem:[#allocation7 + $0x4d0] sm:$0xff]
    %v405 = vld [vmem:[#allocation7 + $0x4d8] sm:$0xff]
    %v406 = vld [vmem:[#allocation7 + $0x4e0] sm:$0xff]
    %v407 = vld [vmem:[#allocation7 + $0x4e8] sm:$0xff]
    %v408 = vld [vmem:[#allocation7 + $0x4f0] sm:$0xff]
    %v409 = vld [vmem:[#allocation7 + $0x4f8] sm:$0xff]
    %v410 = vld [vmem:[#allocation7 + $0x500] sm:$0xff]
    %v411 = vld [vmem:[#allocation7 + $0x508] sm:$0xff]
    %v412 = vld [vmem:[#allocation7 + $0x510] sm:$0xff]
    %v413 = vld [vmem:[#allocation7 + $0x518] sm:$0xff]
    %v414 = vld [vmem:[#allocation7 + $0x520] sm:$0xff]
    %v415 = vld [vmem:[#allocation7 + $0x528] sm:$0xff]
    %v416 = vld [vmem:[#allocation7 + $0x530] sm:$0xff]
    %v417 = vld [vmem:[#allocation7 + $0x538] sm:$0xff]
    %v418 = vld [vmem:[#allocation7 + $0x540] sm:$0xff]
    %v419 = vld [vmem:[#allocation7 + $0x548] sm:$0xff]
    %v420 = vld [vmem:[#allocation7 + $0x550] sm:$0xff]
    %v421 = vld [vmem:[#allocation7 + $0x558] sm:$0xff]
    %v422 = vld [vmem:[#allocation7 + $0x560] sm:$0xff]
    %v423 = vld [vmem:[#allocation7 + $0x568] sm:$0xff]
    %v424 = vld [vmem:[#allocation7 + $0x570] sm:$0xff]
    %v425 = vld [vmem:[#allocation7 + $0x578] sm:$0xff]
    %v426 = vld [vmem:[#allocation7 + $0x580] sm:$0xff]
    %v427 = vld [vmem:[#allocation7 + $0x588] sm:$0xff]
    %v428 = vld [vmem:[#allocation7 + $0x590] sm:$0xff]
    %v429 = vld [vmem:[#allocation7 + $0x598] sm:$0xff]
    %v430 = vld [vmem:[#allocation7 + $0x5a0] sm:$0xff]
    %v431 = vld [vmem:[#allocation7 + $0x5a8] sm:$0xff]
    %v432 = vld [vmem:[#allocation7 + $0x5b0] sm:$0xff]
    %v433 = vld [vmem:[#allocation7 + $0x5b8] sm:$0xff]
    %v434 = vld [vmem:[#allocation7 + $0x5c0] sm:$0xff]
    %v435 = vld [vmem:[#allocation7 + $0x5c8] sm:$0xff]
    %v436 = vld [vmem:[#allocation7 + $0x5d0] sm:$0xff]
    %v437 = vld [vmem:[#allocation7 + $0x5d8] sm:$0xff]
    %v438 = vld [vmem:[#allocation7 + $0x5e0] sm:$0xff]
    %v439 = vld [vmem:[#allocation7 + $0x5e8] sm:$0xff]
    %v440 = vld [vmem:[#allocation7 + $0x5f0] sm:$0xff]
    %v441 = vld [vmem:[#allocation7 + $0x5f8] sm:$0xff]
    %v442 = vld [vmem:[#allocation7 + $0x600] sm:$0xff]
    %v443 = vld [vmem:[#allocation7 + $0x608] sm:$0xff]
    %v444 = vld [vmem:[#allocation7 + $0x610] sm:$0xff]
    %v445 = vld [vmem:[#allocation7 + $0x618] sm:$0xff]
    %v446 = vld [vmem:[#allocation7 + $0x620] sm:$0xff]
    %v447 = vld [vmem:[#allocation7 + $0x628] sm:$0xff]
    %v448 = vld [vmem:[#allocation7 + $0x630] sm:$0xff]
    %v449 = vld [vmem:[#allocation7 + $0x638] sm:$0xff]
    %v450 = vld [vmem:[#allocation7 + $0x640] sm:$0xff]
    %v451 = vld [vmem:[#allocation7 + $0x648] sm:$0xff]
    %v452 = vld [vmem:[#allocation7 + $0x650] sm:$0xff]
    %v453 = vld [vmem:[#allocation7 + $0x658] sm:$0xff]
    %v454 = vld [vmem:[#allocation7 + $0x660] sm:$0xff]
    %v455 = vld [vmem:[#allocation7 + $0x668] sm:$0xff]
    %v456 = vld [vmem:[#allocation7 + $0x670] sm:$0xff]
    %v457 = vld [vmem:[#allocation7 + $0x678] sm:$0xff]
    %v458 = vld [vmem:[#allocation7 + $0x680] sm:$0xff]
    %v459 = vld [vmem:[#allocation7 + $0x688] sm:$0xff]
    %v460 = vld [vmem:[#allocation7 + $0x690] sm:$0xff]
    %v461 = vld [vmem:[#allocation7 + $0x698] sm:$0xff]
    %v462 = vld [vmem:[#allocation7 + $0x6a0] sm:$0xff]
    %v463 = vld [vmem:[#allocation7 + $0x6a8] sm:$0xff]
    %v464 = vld [vmem:[#allocation7 + $0x6b0] sm:$0xff]
    %v465 = vld [vmem:[#allocation7 + $0x6b8] sm:$0xff]
    %v466 = vld [vmem:[#allocation7 + $0x6c0] sm:$0xff]
    %v467 = vld [vmem:[#allocation7 + $0x6c8] sm:$0xff]
    %v468 = vld [vmem:[#allocation7 + $0x6d0] sm:$0xff]
    %v469 = vld [vmem:[#allocation7 + $0x6d8] sm:$0xff]
    %v470 = vld [vmem:[#allocation7 + $0x6e0] sm:$0xff]
    %v471 = vld [vmem:[#allocation7 + $0x6e8] sm:$0xff]
    %v472 = vld [vmem:[#allocation7 + $0x6f0] sm:$0xff]
    %v473 = vld [vmem:[#allocation7 + $0x6f8] sm:$0xff]
    %v474 = vld [vmem:[#allocation7 + $0x700] sm:$0xff]
    %v475 = vld [vmem:[#allocation7 + $0x708] sm:$0xff]
    %v476 = vld [vmem:[#allocation7 + $0x710] sm:$0xff]
    %v477 = vld [vmem:[#allocation7 + $0x718] sm:$0xff]
    %v478 = vld [vmem:[#allocation7 + $0x720] sm:$0xff]
    %v479 = vld [vmem:[#allocation7 + $0x728] sm:$0xff]
    %v480 = vld [vmem:[#allocation7 + $0x730] sm:$0xff]
    %v481 = vld [vmem:[#allocation7 + $0x738] sm:$0xff]
    %v482 = vld [vmem:[#allocation7 + $0x740] sm:$0xff]
    %v483 = vld [vmem:[#allocation7 + $0x748] sm:$0xff]
    %v484 = vld [vmem:[#allocation7 + $0x750] sm:$0xff]
    %v485 = vld [vmem:[#allocation7 + $0x758] sm:$0xff]
    %v486 = vld [vmem:[#allocation7 + $0x760] sm:$0xff]
    %v487 = vld [vmem:[#allocation7 + $0x768] sm:$0xff]
    %v488 = vld [vmem:[#allocation7 + $0x770] sm:$0xff]
    %v489 = vld [vmem:[#allocation7 + $0x778] sm:$0xff]
    %v490 = vld [vmem:[#allocation7 + $0x780] sm:$0xff]
    %v491 = vld [vmem:[#allocation7 + $0x788] sm:$0xff]
    %v492 = vld [vmem:[#allocation7 + $0x790] sm:$0xff]
    %v493 = vld [vmem:[#allocation7 + $0x798] sm:$0xff]
    %v494 = vld [vmem:[#allocation7 + $0x7a0] sm:$0xff]
    %v495 = vld [vmem:[#allocation7 + $0x7a8] sm:$0xff]
    %v496 = vld [vmem:[#allocation7 + $0x7b0] sm:$0xff]
    %v497 = vld [vmem:[#allocation7 + $0x7b8] sm:$0xff]
    %v498 = vld [vmem:[#allocation7 + $0x7c0] sm:$0xff]
    %v499 = vld [vmem:[#allocation7 + $0x7c8] sm:$0xff]
    %v500 = vld [vmem:[#allocation7 + $0x7d0] sm:$0xff]
    %v501 = vld [vmem:[#allocation7 + $0x7d8] sm:$0xff]
    %v502 = vld [vmem:[#allocation7 + $0x7e0] sm:$0xff]
    %v503 = vld [vmem:[#allocation7 + $0x7e8] sm:$0xff]
    %v504 = vld [vmem:[#allocation7 + $0x7f0] sm:$0xff]
    %v505 = vld [vmem:[#allocation7 + $0x7f8] sm:$0xff]
    %v506 = vld [vmem:[#allocation7 + $0x800] sm:$0xff]
    %v507 = vld [vmem:[#allocation7 + $0x808] sm:$0xff]
    %v508 = vld [vmem:[#allocation7 + $0x810] sm:$0xff]
    %v509 = vld [vmem:[#allocation7 + $0x818] sm:$0xff]
    %v510 = vld [vmem:[#allocation7 + $0x820] sm:$0xff]
    %v511 = vld [vmem:[#allocation7 + $0x828] sm:$0xff]
    %v512 = vld [vmem:[#allocation7 + $0x830] sm:$0xff]
    %v513 = vld [vmem:[#allocation7 + $0x838] sm:$0xff]
    %v514 = vld [vmem:[#allocation7 + $0x840] sm:$0xff]
    %v515 = vld [vmem:[#allocation7 + $0x848] sm:$0xff]
    %v516 = vld [vmem:[#allocation7 + $0x850] sm:$0xff]
    %v517 = vld [vmem:[#allocation7 + $0x858] sm:$0xff]
    %v518 = vld [vmem:[#allocation7 + $0x860] sm:$0xff]
    %v519 = vld [vmem:[#allocation7 + $0x868] sm:$0xff]
    %v520 = vld [vmem:[#allocation7 + $0x870] sm:$0xff]
    %v521 = vld [vmem:[#allocation7 + $0x878] sm:$0xff]
    %v522 = vld [vmem:[#allocation7 + $0x880] sm:$0xff]
    %v523 = vld [vmem:[#allocation7 + $0x888] sm:$0xff]
    %v524 = vld [vmem:[#allocation7 + $0x890] sm:$0xff]
    %v525 = vld [vmem:[#allocation7 + $0x898] sm:$0xff]
    %v526 = vld [vmem:[#allocation7 + $0x8a0] sm:$0xff]
    %v527 = vld [vmem:[#allocation7 + $0x8a8] sm:$0xff]
    %v528 = vld [vmem:[#allocation7 + $0x8b0] sm:$0xff]
    %v529 = vld [vmem:[#allocation7 + $0x8b8] sm:$0xff]
    %v530 = vld [vmem:[#allocation7 + $0x8c0] sm:$0xff]
    %v531 = vld [vmem:[#allocation7 + $0x8c8] sm:$0xff]
    %v532 = vld [vmem:[#allocation7 + $0x8d0] sm:$0xff]
    %v533 = vld [vmem:[#allocation7 + $0x8d8] sm:$0xff]
    %v534 = vld [vmem:[#allocation7 + $0x8e0] sm:$0xff]
    %v535 = vld [vmem:[#allocation7 + $0x8e8] sm:$0xff]
    %v536 = vld [vmem:[#allocation7 + $0x8f0] sm:$0xff]
    %v537 = vld [vmem:[#allocation7 + $0x8f8] sm:$0xff]
    %v538 = vld [vmem:[#allocation7 + $0x900] sm:$0xff]
    %v539 = vld [vmem:[#allocation7 + $0x908] sm:$0xff]
    %v540 = vld [vmem:[#allocation7 + $0x910] sm:$0xff]
    %v541 = vld [vmem:[#allocation7 + $0x918] sm:$0xff]
    %v542 = vld [vmem:[#allocation7 + $0x920] sm:$0xff]
    %v543 = vld [vmem:[#allocation7 + $0x928] sm:$0xff]
    %v544 = vld [vmem:[#allocation7 + $0x930] sm:$0xff]
    %v545 = vld [vmem:[#allocation7 + $0x938] sm:$0xff]
    %v546 = vld [vmem:[#allocation7 + $0x940] sm:$0xff]
    %v547 = vld [vmem:[#allocation7 + $0x948] sm:$0xff]
    %v548 = vld [vmem:[#allocation7 + $0x950] sm:$0xff]
    %v549 = vld [vmem:[#allocation7 + $0x958] sm:$0xff]
    %v550 = vld [vmem:[#allocation7 + $0x960] sm:$0xff]
    %v551 = vld [vmem:[#allocation7 + $0x968] sm:$0xff]
    %v552 = vld [vmem:[#allocation7 + $0x970] sm:$0xff]
    %v553 = vld [vmem:[#allocation7 + $0x978] sm:$0xff]
    %v554 = vld [vmem:[#allocation7 + $0x980] sm:$0xff]
    %v555 = vld [vmem:[#allocation7 + $0x988] sm:$0xff]
    %v556 = vld [vmem:[#allocation7 + $0x990] sm:$0xff]
    %v557 = vld [vmem:[#allocation7 + $0x998] sm:$0xff]
    %v558 = vld [vmem:[#allocation7 + $0x9a0] sm:$0xff]
    %v559 = vld [vmem:[#allocation7 + $0x9a8] sm:$0xff]
    %v560 = vld [vmem:[#allocation7 + $0x9b0] sm:$0xff]
    %v561 = vld [vmem:[#allocation7 + $0x9b8] sm:$0xff]
    %v562 = vld [vmem:[#allocation7 + $0x9c0] sm:$0xff]
    %v563 = vld [vmem:[#allocation7 + $0x9c8] sm:$0xff]
    %v564 = vld [vmem:[#allocation7 + $0x9d0] sm:$0xff]
    %v565 = vld [vmem:[#allocation7 + $0x9d8] sm:$0xff]
    %v566 = vld [vmem:[#allocation7 + $0x9e0] sm:$0xff]
    %v567 = vld [vmem:[#allocation7 + $0x9e8] sm:$0xff]
    %v568 = vld [vmem:[#allocation7 + $0x9f0] sm:$0xff]
    %v569 = vld [vmem:[#allocation7 + $0x9f8] sm:$0xff]
    %v570 = vld [vmem:[#allocation7 + $0xa00] sm:$0xff]
    %v571 = vld [vmem:[#allocation7 + $0xa08] sm:$0xff]
    %v572 = vld [vmem:[#allocation7 + $0xa10] sm:$0xff]
    %v573 = vld [vmem:[#allocation7 + $0xa18] sm:$0xff]
    %v574 = vld [vmem:[#allocation7 + $0xa20] sm:$0xff]
    %v575 = vld [vmem:[#allocation7 + $0xa28] sm:$0xff]
    %v576 = vld [vmem:[#allocation7 + $0xa30] sm:$0xff]
    %v577 = vld [vmem:[#allocation7 + $0xa38] sm:$0xff]
    %v578 = vld [vmem:[#allocation7 + $0xa40] sm:$0xff]
    %v579 = vld [vmem:[#allocation7 + $0xa48] sm:$0xff]
    %v580 = vld [vmem:[#allocation7 + $0xa50] sm:$0xff]
    %v581 = vld [vmem:[#allocation7 + $0xa58] sm:$0xff]
    %v582 = vld [vmem:[#allocation7 + $0xa60] sm:$0xff]
    %v583 = vld [vmem:[#allocation7 + $0xa68] sm:$0xff]
    %v584 = vld [vmem:[#allocation7 + $0xa70] sm:$0xff]
    %v585 = vld [vmem:[#allocation7 + $0xa78] sm:$0xff]
    %v586 = vld [vmem:[#allocation7 + $0xa80] sm:$0xff]
    %v587 = vld [vmem:[#allocation7 + $0xa88] sm:$0xff]
    %v588 = vld [vmem:[#allocation7 + $0xa90] sm:$0xff]
    %v589 = vld [vmem:[#allocation7 + $0xa98] sm:$0xff]
    %v590 = vld [vmem:[#allocation7 + $0xaa0] sm:$0xff]
    %v591 = vld [vmem:[#allocation7 + $0xaa8] sm:$0xff]
    %v592 = vld [vmem:[#allocation7 + $0xab0] sm:$0xff]
    %v593 = vld [vmem:[#allocation7 + $0xab8] sm:$0xff]
    %v594 = vld [vmem:[#allocation7 + $0xac0] sm:$0xff]
    %v595 = vld [vmem:[#allocation7 + $0xac8] sm:$0xff]
    %v596 = vld [vmem:[#allocation7 + $0xad0] sm:$0xff]
    %v597 = vld [vmem:[#allocation7 + $0xad8] sm:$0xff]
    %v598 = vld [vmem:[#allocation7 + $0xae0] sm:$0xff]
    %v599 = vld [vmem:[#allocation7 + $0xae8] sm:$0xff]
    %v600 = vld [vmem:[#allocation7 + $0xaf0] sm:$0xff]
    %v601 = vld [vmem:[#allocation7 + $0xaf8] sm:$0xff]
    %v602 = vld [vmem:[#allocation7 + $0xb00] sm:$0xff]
    %v603 = vld [vmem:[#allocation7 + $0xb08] sm:$0xff]
    %v604 = vld [vmem:[#allocation7 + $0xb10] sm:$0xff]
    %v605 = vld [vmem:[#allocation7 + $0xb18] sm:$0xff]
    %v606 = vld [vmem:[#allocation7 + $0xb20] sm:$0xff]
    %v607 = vld [vmem:[#allocation7 + $0xb28] sm:$0xff]
    %v608 = vld [vmem:[#allocation7 + $0xb30] sm:$0xff]
    %v609 = vld [vmem:[#allocation7 + $0xb38] sm:$0xff]
    %v610 = vld [vmem:[#allocation7 + $0xb40] sm:$0xff]
    %v611 = vld [vmem:[#allocation7 + $0xb48] sm:$0xff]
    %v612 = vld [vmem:[#allocation7 + $0xb50] sm:$0xff]
    %v613 = vld [vmem:[#allocation7 + $0xb58] sm:$0xff]
    %v614 = vld [vmem:[#allocation7 + $0xb60] sm:$0xff]
    %v615 = vld [vmem:[#allocation7 + $0xb68] sm:$0xff]
    %v616 = vld [vmem:[#allocation7 + $0xb70] sm:$0xff]
    %v617 = vld [vmem:[#allocation7 + $0xb78] sm:$0xff]
    %v618 = vld [vmem:[#allocation7 + $0xb80] sm:$0xff]
    %v619 = vld [vmem:[#allocation7 + $0xb88] sm:$0xff]
    %v620 = vld [vmem:[#allocation7 + $0xb90] sm:$0xff]
    %v621 = vld [vmem:[#allocation7 + $0xb98] sm:$0xff]
    %v622 = vld [vmem:[#allocation7 + $0xba0] sm:$0xff]
    %v623 = vld [vmem:[#allocation7 + $0xba8] sm:$0xff]
    %v624 = vld [vmem:[#allocation7 + $0xbb0] sm:$0xff]
    %v625 = vld [vmem:[#allocation7 + $0xbb8] sm:$0xff]
    %v626 = vld [vmem:[#allocation7 + $0xbc0] sm:$0xff]
    %v627 = vld [vmem:[#allocation7 + $0xbc8] sm:$0xff]
    %v628 = vld [vmem:[#allocation7 + $0xbd0] sm:$0xff]
    %v629 = vld [vmem:[#allocation7 + $0xbd8] sm:$0xff]
    %v630 = vld [vmem:[#allocation7 + $0xbe0] sm:$0xff]
    %v631 = vld [vmem:[#allocation7 + $0xbe8] sm:$0xff]
    %v632 = vld [vmem:[#allocation7 + $0xbf0] sm:$0xff]
    %v633 = vld [vmem:[#allocation7 + $0xbf8] sm:$0xff]
    %v634 = vld [vmem:[#allocation7 + $0xc00] sm:$0xff]
    %v635 = vld [vmem:[#allocation7 + $0xc08] sm:$0xff]
    %v636 = vld [vmem:[#allocation7 + $0xc10] sm:$0xff]
    %v637 = vld [vmem:[#allocation7 + $0xc18] sm:$0xff]
    %v638 = vld [vmem:[#allocation7 + $0xc20] sm:$0xff]
    %v639 = vld [vmem:[#allocation7 + $0xc28] sm:$0xff]
    %v640 = vld [vmem:[#allocation7 + $0xc30] sm:$0xff]
    %v641 = vld [vmem:[#allocation7 + $0xc38] sm:$0xff]
    %v642 = vld [vmem:[#allocation7 + $0xc40] sm:$0xff]
    %v643 = vld [vmem:[#allocation7 + $0xc48] sm:$0xff]
    %v644 = vld [vmem:[#allocation7 + $0xc50] sm:$0xff]
    %v645 = vld [vmem:[#allocation7 + $0xc58] sm:$0xff]
    %v646 = vld [vmem:[#allocation7 + $0xc60] sm:$0xff]
    %v647 = vld [vmem:[#allocation7 + $0xc68] sm:$0xff]
    %v648 = vld [vmem:[#allocation7 + $0xc70] sm:$0xff]
    %v649 = vld [vmem:[#allocation7 + $0xc78] sm:$0xff]
    %v650 = vld [vmem:[#allocation7 + $0xc80] sm:$0xff]
    %v651 = vld [vmem:[#allocation7 + $0xc88] sm:$0xff]
    %v652 = vld [vmem:[#allocation7 + $0xc90] sm:$0xff]
    %v653 = vld [vmem:[#allocation7 + $0xc98] sm:$0xff]
    %v654 = vld [vmem:[#allocation7 + $0xca0] sm:$0xff]
    %v655 = vld [vmem:[#allocation7 + $0xca8] sm:$0xff]
    %v656 = vld [vmem:[#allocation7 + $0xcb0] sm:$0xff]
    %v657 = vld [vmem:[#allocation7 + $0xcb8] sm:$0xff]
    %v658 = vld [vmem:[#allocation7 + $0xcc0] sm:$0xff]
    %v659 = vld [vmem:[#allocation7 + $0xcc8] sm:$0xff]
    %v660 = vld [vmem:[#allocation7 + $0xcd0] sm:$0xff]
    %v661 = vld [vmem:[#allocation7 + $0xcd8] sm:$0xff]
    %v662 = vld [vmem:[#allocation7 + $0xce0] sm:$0xff]
    %v663 = vld [vmem:[#allocation7 + $0xce8] sm:$0xff]
    %v664 = vld [vmem:[#allocation7 + $0xcf0] sm:$0xff]
    %v665 = vld [vmem:[#allocation7 + $0xcf8] sm:$0xff]
    %v666 = vld [vmem:[#allocation7 + $0xd00] sm:$0xff]
    %v667 = vld [vmem:[#allocation7 + $0xd08] sm:$0xff]
    %v668 = vld [vmem:[#allocation7 + $0xd10] sm:$0xff]
    %v669 = vld [vmem:[#allocation7 + $0xd18] sm:$0xff]
    %v670 = vld [vmem:[#allocation7 + $0xd20] sm:$0xff]
    %v671 = vld [vmem:[#allocation7 + $0xd28] sm:$0xff]
    %v672 = vld [vmem:[#allocation7 + $0xd30] sm:$0xff]
    %v673 = vld [vmem:[#allocation7 + $0xd38] sm:$0xff]
    %v674 = vld [vmem:[#allocation7 + $0xd40] sm:$0xff]
    %v675 = vld [vmem:[#allocation7 + $0xd48] sm:$0xff]
    %v676 = vld [vmem:[#allocation7 + $0xd50] sm:$0xff]
    %v677 = vld [vmem:[#allocation7 + $0xd58] sm:$0xff]
    %v678 = vld [vmem:[#allocation7 + $0xd60] sm:$0xff]
    %v679 = vld [vmem:[#allocation7 + $0xd68] sm:$0xff]
    %v680 = vld [vmem:[#allocation7 + $0xd70] sm:$0xff]
    %v681 = vld [vmem:[#allocation7 + $0xd78] sm:$0xff]
    %v682 = vld [vmem:[#allocation7 + $0xd80] sm:$0xff]
    %v683 = vld [vmem:[#allocation7 + $0xd88] sm:$0xff]
    %v684 = vld [vmem:[#allocation7 + $0xd90] sm:$0xff]
    %v685 = vld [vmem:[#allocation7 + $0xd98] sm:$0xff]
    %v686 = vld [vmem:[#allocation7 + $0xda0] sm:$0xff]
    %v687 = vld [vmem:[#allocation7 + $0xda8] sm:$0xff]
    %v688 = vld [vmem:[#allocation7 + $0xdb0] sm:$0xff]
    %v689 = vld [vmem:[#allocation7 + $0xdb8] sm:$0xff]
    %v690 = vld [vmem:[#allocation7 + $0xdc0] sm:$0xff]
    %v691 = vld [vmem:[#allocation7 + $0xdc8] sm:$0xff]
    %v692 = vld [vmem:[#allocation7 + $0xdd0] sm:$0xff]
    %v693 = vld [vmem:[#allocation7 + $0xdd8] sm:$0xff]
    %v694 = vld [vmem:[#allocation7 + $0xde0] sm:$0xff]
    %v695 = vld [vmem:[#allocation7 + $0xde8] sm:$0xff]
    %v696 = vld [vmem:[#allocation7 + $0xdf0] sm:$0xff]
    %v697 = vld [vmem:[#allocation7 + $0xdf8] sm:$0xff]
    %v698 = vld [vmem:[#allocation7 + $0xe00] sm:$0xff]
    %v699 = vld [vmem:[#allocation7 + $0xe08] sm:$0xff]
    %v700 = vld [vmem:[#allocation7 + $0xe10] sm:$0xff]
    %v701 = vld [vmem:[#allocation7 + $0xe18] sm:$0xff]
    %v702 = vld [vmem:[#allocation7 + $0xe20] sm:$0xff]
    %v703 = vld [vmem:[#allocation7 + $0xe28] sm:$0xff]
    %v704 = vld [vmem:[#allocation7 + $0xe30] sm:$0xff]
    %v705 = vld [vmem:[#allocation7 + $0xe38] sm:$0xff]
    %v706 = vld [vmem:[#allocation7 + $0xe40] sm:$0xff]
    %v707 = vld [vmem:[#allocation7 + $0xe48] sm:$0xff]
    %v708 = vld [vmem:[#allocation7 + $0xe50] sm:$0xff]
    %v709 = vld [vmem:[#allocation7 + $0xe58] sm:$0xff]
    %v710 = vld [vmem:[#allocation7 + $0xe60] sm:$0xff]
    %v711 = vld [vmem:[#allocation7 + $0xe68] sm:$0xff]
    %v712 = vld [vmem:[#allocation7 + $0xe70] sm:$0xff]
    %v713 = vld [vmem:[#allocation7 + $0xe78] sm:$0xff]
    %v714 = vld [vmem:[#allocation7 + $0xe80] sm:$0xff]
    %v715 = vld [vmem:[#allocation7 + $0xe88] sm:$0xff]
    %v716 = vld [vmem:[#allocation7 + $0xe90] sm:$0xff]
    %v717 = vld [vmem:[#allocation7 + $0xe98] sm:$0xff]
    %v718 = vld [vmem:[#allocation7 + $0xea0] sm:$0xff]
    %v719 = vld [vmem:[#allocation7 + $0xea8] sm:$0xff]
    %v720 = vld [vmem:[#allocation7 + $0xeb0] sm:$0xff]
    %v721 = vld [vmem:[#allocation7 + $0xeb8] sm:$0xff]
    %v722 = vld [vmem:[#allocation7 + $0xec0] sm:$0xff]
    %v723 = vld [vmem:[#allocation7 + $0xec8] sm:$0xff]
    %v724 = vld [vmem:[#allocation7 + $0xed0] sm:$0xff]
    %v725 = vld [vmem:[#allocation7 + $0xed8] sm:$0xff]
    %v726 = vld [vmem:[#allocation7 + $0xee0] sm:$0xff]
    %v727 = vld [vmem:[#allocation7 + $0xee8] sm:$0xff]
    %v728 = vld [vmem:[#allocation7 + $0xef0] sm:$0xff]
    %v729 = vld [vmem:[#allocation7 + $0xef8] sm:$0xff]
    %v730 = vld [vmem:[#allocation7 + $0xf00] sm:$0xff]
    %v731 = vld [vmem:[#allocation7 + $0xf08] sm:$0xff]
    %v732 = vld [vmem:[#allocation7 + $0xf10] sm:$0xff]
    %v733 = vld [vmem:[#allocation7 + $0xf18] sm:$0xff]
    %v734 = vld [vmem:[#allocation7 + $0xf20] sm:$0xff]
    %v735 = vld [vmem:[#allocation7 + $0xf28] sm:$0xff]
    %v736 = vld [vmem:[#allocation7 + $0xf30] sm:$0xff]
    %v737 = vld [vmem:[#allocation7 + $0xf38] sm:$0xff]
    %v738 = vld [vmem:[#allocation7 + $0xf40] sm:$0xff]
    %v739 = vld [vmem:[#allocation7 + $0xf48] sm:$0xff]
    %v740 = vld [vmem:[#allocation7 + $0xf50] sm:$0xff]
    %v741 = vld [vmem:[#allocation7 + $0xf58] sm:$0xff]
    %v742 = vld [vmem:[#allocation7 + $0xf60] sm:$0xff]
    %v743 = vld [vmem:[#allocation7 + $0xf68] sm:$0xff]
    %v744 = vld [vmem:[#allocation7 + $0xf70] sm:$0xff]
    %v745 = vld [vmem:[#allocation7 + $0xf78] sm:$0xff]
    %v746 = vld [vmem:[#allocation7 + $0xf80] sm:$0xff]
    %v747 = vld [vmem:[#allocation7 + $0xf88] sm:$0xff]
    %v748 = vld [vmem:[#allocation7 + $0xf90] sm:$0xff]
    %v749 = vld [vmem:[#allocation7 + $0xf98] sm:$0xff]
    %v750 = vld [vmem:[#allocation7 + $0xfa0] sm:$0xff]
    %v751 = vld [vmem:[#allocation7 + $0xfa8] sm:$0xff]
    %v752 = vld [vmem:[#allocation7 + $0xfb0] sm:$0xff]
    %v753 = vld [vmem:[#allocation7 + $0xfb8] sm:$0xff]
    %v754 = vld [vmem:[#allocation7 + $0xfc0] sm:$0xff]
    %v755 = vld [vmem:[#allocation7 + $0xfc8] sm:$0xff]
    %v756 = vld [vmem:[#allocation7 + $0xfd0] sm:$0xff]
    %v757 = vld [vmem:[#allocation7 + $0xfd8] sm:$0xff]
    %v758 = vld [vmem:[#allocation7 + $0xfe0] sm:$0xff]
    %v759 = vld [vmem:[#allocation7 + $0xfe8] sm:$0xff]
    %v760 = vld [vmem:[#allocation7 + $0xff0] sm:$0xff]
    %v761 = vld [vmem:[#allocation7 + $0xff8] sm:$0xff]
    %v762 = vld [vmem:[#allocation7 + $0x1000] sm:$0xff]
    %v763 = vld [vmem:[#allocation7 + $0x1008] sm:$0xff]
    %v764 = vld [vmem:[#allocation7 + $0x1010] sm:$0xff]
    %v765 = vld [vmem:[#allocation7 + $0x1018] sm:$0xff]
    %v766 = vld [vmem:[#allocation7 + $0x1020] sm:$0xff]
    %v767 = vld [vmem:[#allocation7 + $0x1028] sm:$0xff]
    %v768 = vld [vmem:[#allocation7 + $0x1030] sm:$0xff]
    %v769 = vld [vmem:[#allocation7 + $0x1038] sm:$0xff]
    %v770 = vld [vmem:[#allocation7 + $0x1040] sm:$0xff]
    %v771 = vld [vmem:[#allocation7 + $0x1048] sm:$0xff]
    %v772 = vld [vmem:[#allocation7 + $0x1050] sm:$0xff]
    %v773 = vld [vmem:[#allocation7 + $0x1058] sm:$0xff]
    %v774 = vld [vmem:[#allocation7 + $0x1060] sm:$0xff]
    %v775 = vld [vmem:[#allocation7 + $0x1068] sm:$0xff]
    %v776 = vld [vmem:[#allocation7 + $0x1070] sm:$0xff]
    %v777 = vld [vmem:[#allocation7 + $0x1078] sm:$0xff]
    %v778 = vld [vmem:[#allocation7 + $0x1080] sm:$0xff]
    %v779 = vld [vmem:[#allocation7 + $0x1088] sm:$0xff]
    %v780 = vld [vmem:[#allocation7 + $0x1090] sm:$0xff]
    %v781 = vld [vmem:[#allocation7 + $0x1098] sm:$0xff]
    %v782 = vld [vmem:[#allocation7 + $0x10a0] sm:$0xff]
    %v783 = vld [vmem:[#allocation7 + $0x10a8] sm:$0xff]
    %v784 = vld [vmem:[#allocation7 + $0x10b0] sm:$0xff]
    %v785 = vld [vmem:[#allocation7 + $0x10b8] sm:$0xff]
    %v786 = vld [vmem:[#allocation7 + $0x10c0] sm:$0xff]
    %v787 = vld [vmem:[#allocation7 + $0x10c8] sm:$0xff]
    %v788 = vld [vmem:[#allocation7 + $0x10d0] sm:$0xff]
    %v789 = vld [vmem:[#allocation7 + $0x10d8] sm:$0xff]
    %v790 = vld [vmem:[#allocation7 + $0x10e0] sm:$0xff]
    %v791 = vld [vmem:[#allocation7 + $0x10e8] sm:$0xff]
    %v792 = vld [vmem:[#allocation7 + $0x10f0] sm:$0xff]
    %v793 = vld [vmem:[#allocation7 + $0x10f8] sm:$0xff]
    %v794 = vld [vmem:[#allocation7 + $0x1100] sm:$0xff]
    %v795 = vld [vmem:[#allocation7 + $0x1108] sm:$0xff]
    %v796 = vld [vmem:[#allocation7 + $0x1110] sm:$0xff]
    %v797 = vld [vmem:[#allocation7 + $0x1118] sm:$0xff]
    %v798 = vld [vmem:[#allocation7 + $0x1120] sm:$0xff]
    %v799 = vld [vmem:[#allocation7 + $0x1128] sm:$0xff]
    %v800 = vld [vmem:[#allocation7 + $0x1130] sm:$0xff]
    %v801 = vld [vmem:[#allocation7 + $0x1138] sm:$0xff]
    %v802 = vld [vmem:[#allocation7 + $0x1140] sm:$0xff]
    %v803 = vld [vmem:[#allocation7 + $0x1148] sm:$0xff]
    %v804 = vld [vmem:[#allocation7 + $0x1150] sm:$0xff]
    %v805 = vld [vmem:[#allocation7 + $0x1158] sm:$0xff]
    %v806 = vld [vmem:[#allocation7 + $0x1160] sm:$0xff]
    %v807 = vld [vmem:[#allocation7 + $0x1168] sm:$0xff]
    %v808 = vld [vmem:[#allocation7 + $0x1170] sm:$0xff]
    %v809 = vld [vmem:[#allocation7 + $0x1178] sm:$0xff]
    %v810 = vld [vmem:[#allocation7 + $0x1180] sm:$0xff]
    %v811 = vld [vmem:[#allocation7 + $0x1188] sm:$0xff]
    %v812 = vld [vmem:[#allocation7 + $0x1190] sm:$0xff]
    %v813 = vld [vmem:[#allocation7 + $0x1198] sm:$0xff]
    %v814 = vld [vmem:[#allocation7 + $0x11a0] sm:$0xff]
    %v815 = vld [vmem:[#allocation7 + $0x11a8] sm:$0xff]
    %v816 = vld [vmem:[#allocation7 + $0x11b0] sm:$0xff]
    %v817 = vld [vmem:[#allocation7 + $0x11b8] sm:$0xff]
    %v818 = vld [vmem:[#allocation7 + $0x11c0] sm:$0xff]
    %v819 = vld [vmem:[#allocation7 + $0x11c8] sm:$0xff]
    %v820 = vld [vmem:[#allocation7 + $0x11d0] sm:$0xff]
    %v821 = vld [vmem:[#allocation7 + $0x11d8] sm:$0xff]
    %v822 = vld [vmem:[#allocation7 + $0x11e0] sm:$0xff]
    %v823 = vld [vmem:[#allocation7 + $0x11e8] sm:$0xff]
    %v824 = vld [vmem:[#allocation7 + $0x11f0] sm:$0xff]
    %v825 = vld [vmem:[#allocation7 + $0x11f8] sm:$0xff]
    %v838 = vunpack.c.l.b16 %v238
    %v839 = vunpack.c.l.b16 %v239
    %v840 = vunpack.c.l.b16 %v240
    %v841 = vunpack.c.l.b16 %v241
    %v842 = vunpack.c.l.b16 %v242
    %v843 = vunpack.c.l.b16 %v243
    %v844 = vunpack.c.l.b16 %v244
    %v845 = vunpack.c.l.b16 %v245
    %v846 = vunpack.c.l.b16 %v246
    %v847 = vunpack.c.l.b16 %v247
    %v848 = vunpack.c.l.b16 %v248
    %v849 = vunpack.c.l.b16 %v249
    %v850 = vrot.slane %v844, 7
    %vm851 = vcmask 1041409
    %v852 = vsel %vm851, %v850, %v838
    %v853 = vrot.slane %v845, 7
    %v854 = vsel %vm851, %v853, %v839
    %v855 = vrot.slane %v846, 7
    %v856 = vsel %vm851, %v855, %v840
    %v857 = vrot.slane %v847, 7
    %v858 = vsel %vm851, %v857, %v841
    %v859 = vrot.slane %v848, 7
    %v860 = vsel %vm851, %v859, %v842
    %v861 = vrot.slane %v849, 7
    %v862 = vsel %vm851, %v861, %v843
    %v863 = vpack.c.b16 %v852, %v852
    %v864 = vpack.c.b16 %v854, %v854
    %v865 = vpack.c.b16 %v856, %v856
    %v866 = vpack.c.b16 %v858, %v858
    %v867 = vpack.c.b16 %v860, %v860
    %v868 = vpack.c.b16 %v862, %v862
    %v1163 = vunpack.c.l.b16 %v538
    %v1164 = vunpack.c.h.b16 %v538
    %v1165 = vunpack.c.l.b16 %v539
    %v1166 = vunpack.c.h.b16 %v539
    %v1167 = vunpack.c.l.b16 %v540
    %v1168 = vunpack.c.h.b16 %v540
    %v1169 = vunpack.c.l.b16 %v541
    %v1170 = vunpack.c.h.b16 %v541
    %v1171 = vunpack.c.l.b16 %v542
    %v1172 = vunpack.c.h.b16 %v542
    %v1173 = vunpack.c.l.b16 %v543
    %v1174 = vunpack.c.h.b16 %v543
    %v1175 = vunpack.c.l.b16 %v544
    %v1176 = vunpack.c.h.b16 %v544
    %v1177 = vunpack.c.l.b16 %v545
    %v1178 = vunpack.c.h.b16 %v545
    %v1179 = vunpack.c.l.b16 %v546
    %v1180 = vunpack.c.h.b16 %v546
    %v1181 = vunpack.c.l.b16 %v547
    %v1182 = vunpack.c.h.b16 %v547
    %v1183 = vunpack.c.l.b16 %v548
    %v1184 = vunpack.c.h.b16 %v548
    %v1185 = vunpack.c.l.b16 %v549
    %v1186 = vunpack.c.h.b16 %v549
    %v1187 = vunpack.c.l.b16 %v550
    %v1188 = vunpack.c.h.b16 %v550
    %v1189 = vunpack.c.l.b16 %v551
    %v1190 = vunpack.c.h.b16 %v551
    %v1191 = vunpack.c.l.b16 %v552
    %v1192 = vunpack.c.h.b16 %v552
    %v1193 = vunpack.c.l.b16 %v553
    %v1194 = vunpack.c.h.b16 %v553
    %v1195 = vunpack.c.l.b16 %v554
    %v1196 = vunpack.c.h.b16 %v554
    %v1197 = vunpack.c.l.b16 %v555
    %v1198 = vunpack.c.h.b16 %v555
    %v1199 = vunpack.c.l.b16 %v556
    %v1200 = vunpack.c.h.b16 %v556
    %v1201 = vunpack.c.l.b16 %v557
    %v1202 = vunpack.c.h.b16 %v557
    %v1203 = vunpack.c.l.b16 %v558
    %v1204 = vunpack.c.h.b16 %v558
    %v1205 = vunpack.c.l.b16 %v559
    %v1206 = vunpack.c.h.b16 %v559
    %v1207 = vunpack.c.l.b16 %v560
    %v1208 = vunpack.c.h.b16 %v560
    %v1209 = vunpack.c.l.b16 %v561
    %v1210 = vunpack.c.h.b16 %v561
    %v1211 = vunpack.c.l.b16 %v562
    %v1212 = vunpack.c.h.b16 %v562
    %v1213 = vunpack.c.l.b16 %v563
    %v1214 = vunpack.c.h.b16 %v563
    %v1215 = vunpack.c.l.b16 %v564
    %v1216 = vunpack.c.h.b16 %v564
    %v1217 = vunpack.c.l.b16 %v565
    %v1218 = vunpack.c.h.b16 %v565
    %v1219 = vunpack.c.l.b16 %v566
    %v1220 = vunpack.c.h.b16 %v566
    %v1221 = vunpack.c.l.b16 %v567
    %v1222 = vunpack.c.h.b16 %v567
    %v1223 = vunpack.c.l.b16 %v568
    %v1224 = vunpack.c.h.b16 %v568
    %v1225 = vunpack.c.l.b16 %v569
    %v1226 = vunpack.c.h.b16 %v569
    %v1227 = vunpack.c.l.b16 %v570
    %v1228 = vunpack.c.h.b16 %v570
    %v1229 = vunpack.c.l.b16 %v571
    %v1230 = vunpack.c.h.b16 %v571
    %v1231 = vunpack.c.l.b16 %v572
    %v1232 = vunpack.c.h.b16 %v572
    %v1233 = vunpack.c.l.b16 %v573
    %v1234 = vunpack.c.h.b16 %v573
    %v1235 = vunpack.c.l.b16 %v574
    %v1236 = vunpack.c.h.b16 %v574
    %v1237 = vunpack.c.l.b16 %v575
    %v1238 = vunpack.c.h.b16 %v575
    %v1239 = vunpack.c.l.b16 %v576
    %v1240 = vunpack.c.h.b16 %v576
    %v1241 = vunpack.c.l.b16 %v577
    %v1242 = vunpack.c.h.b16 %v577
    %v1243 = vunpack.c.l.b16 %v578
    %v1244 = vunpack.c.h.b16 %v578
    %v1245 = vunpack.c.l.b16 %v579
    %v1246 = vunpack.c.h.b16 %v579
    %v1247 = vunpack.c.l.b16 %v580
    %v1248 = vunpack.c.h.b16 %v580
    %v1249 = vunpack.c.l.b16 %v581
    %v1250 = vunpack.c.h.b16 %v581
    %v1251 = vunpack.c.l.b16 %v582
    %v1252 = vunpack.c.h.b16 %v582
    %v1253 = vunpack.c.l.b16 %v583
    %v1254 = vunpack.c.h.b16 %v583
    %v1255 = vunpack.c.l.b16 %v584
    %v1256 = vunpack.c.h.b16 %v584
    %v1257 = vunpack.c.l.b16 %v585
    %v1258 = vunpack.c.h.b16 %v585
    %v1259 = vunpack.c.l.b16 %v586
    %v1260 = vunpack.c.h.b16 %v586
    %v1261 = vunpack.c.l.b16 %v587
    %v1262 = vunpack.c.h.b16 %v587
    %v1263 = vunpack.c.l.b16 %v588
    %v1264 = vunpack.c.h.b16 %v588
    %v1265 = vunpack.c.l.b16 %v589
    %v1266 = vunpack.c.h.b16 %v589
    %v1267 = vunpack.c.l.b16 %v590
    %v1268 = vunpack.c.h.b16 %v590
    %v1269 = vunpack.c.l.b16 %v591
    %v1270 = vunpack.c.h.b16 %v591
    %v1271 = vunpack.c.l.b16 %v592
    %v1272 = vunpack.c.h.b16 %v592
    %v1273 = vunpack.c.l.b16 %v593
    %v1274 = vunpack.c.h.b16 %v593
    %v1275 = vunpack.c.l.b16 %v594
    %v1276 = vunpack.c.h.b16 %v594
    %v1277 = vunpack.c.l.b16 %v595
    %v1278 = vunpack.c.h.b16 %v595
    %v1279 = vunpack.c.l.b16 %v596
    %v1280 = vunpack.c.h.b16 %v596
    %v1281 = vunpack.c.l.b16 %v597
    %v1282 = vunpack.c.h.b16 %v597
    %v1283 = vunpack.c.l.b16 %v598
    %v1284 = vunpack.c.h.b16 %v598
    %v1285 = vunpack.c.l.b16 %v599
    %v1286 = vunpack.c.h.b16 %v599
    %v1287 = vunpack.c.l.b16 %v600
    %v1288 = vunpack.c.h.b16 %v600
    %v1289 = vunpack.c.l.b16 %v601
    %v1290 = vunpack.c.h.b16 %v601
    %v1291 = vunpack.c.l.b16 %v602
    %v1292 = vunpack.c.h.b16 %v602
    %v1293 = vunpack.c.l.b16 %v603
    %v1294 = vunpack.c.h.b16 %v603
    %v1295 = vunpack.c.l.b16 %v604
    %v1296 = vunpack.c.h.b16 %v604
    %v1297 = vunpack.c.l.b16 %v605
    %v1298 = vunpack.c.h.b16 %v605
    %v1299 = vunpack.c.l.b16 %v606
    %v1300 = vunpack.c.h.b16 %v606
    %v1301 = vunpack.c.l.b16 %v607
    %v1302 = vunpack.c.h.b16 %v607
    %v1303 = vunpack.c.l.b16 %v608
    %v1304 = vunpack.c.h.b16 %v608
    %v1305 = vunpack.c.l.b16 %v609
    %v1306 = vunpack.c.h.b16 %v609
    %v1307 = vunpack.c.l.b16 %v610
    %v1308 = vunpack.c.h.b16 %v610
    %v1309 = vunpack.c.l.b16 %v611
    %v1310 = vunpack.c.h.b16 %v611
    %v1311 = vunpack.c.l.b16 %v612
    %v1312 = vunpack.c.h.b16 %v612
    %v1313 = vunpack.c.l.b16 %v613
    %v1314 = vunpack.c.h.b16 %v613
    %v1315 = vunpack.c.l.b16 %v614
    %v1316 = vunpack.c.h.b16 %v614
    %v1317 = vunpack.c.l.b16 %v615
    %v1318 = vunpack.c.h.b16 %v615
    %v1319 = vunpack.c.l.b16 %v616
    %v1320 = vunpack.c.h.b16 %v616
    %v1321 = vunpack.c.l.b16 %v617
    %v1322 = vunpack.c.h.b16 %v617
    %v1323 = vunpack.c.l.b16 %v618
    %v1324 = vunpack.c.h.b16 %v618
    %v1325 = vunpack.c.l.b16 %v619
    %v1326 = vunpack.c.h.b16 %v619
    %v1327 = vunpack.c.l.b16 %v620
    %v1328 = vunpack.c.h.b16 %v620
    %v1329 = vunpack.c.l.b16 %v621
    %v1330 = vunpack.c.h.b16 %v621
    %v1331 = vunpack.c.l.b16 %v622
    %v1332 = vunpack.c.h.b16 %v622
    %v1333 = vunpack.c.l.b16 %v623
    %v1334 = vunpack.c.h.b16 %v623
    %v1335 = vunpack.c.l.b16 %v624
    %v1336 = vunpack.c.h.b16 %v624
    %v1337 = vunpack.c.l.b16 %v625
    %v1338 = vunpack.c.h.b16 %v625
    %v1339 = vunpack.c.l.b16 %v626
    %v1340 = vunpack.c.h.b16 %v626
    %v1341 = vunpack.c.l.b16 %v627
    %v1342 = vunpack.c.h.b16 %v627
    %v1343 = vunpack.c.l.b16 %v628
    %v1344 = vunpack.c.h.b16 %v628
    %v1345 = vunpack.c.l.b16 %v629
    %v1346 = vunpack.c.h.b16 %v629
    %v1347 = vunpack.c.l.b16 %v630
    %v1348 = vunpack.c.h.b16 %v630
    %v1349 = vunpack.c.l.b16 %v631
    %v1350 = vunpack.c.h.b16 %v631
    %v1351 = vunpack.c.l.b16 %v632
    %v1352 = vunpack.c.h.b16 %v632
    %v1353 = vunpack.c.l.b16 %v633
    %v1354 = vunpack.c.h.b16 %v633
    %v1355 = vunpack.c.l.b16 %v634
    %v1356 = vunpack.c.h.b16 %v634
    %v1357 = vunpack.c.l.b16 %v635
    %v1358 = vunpack.c.h.b16 %v635
    %v1359 = vunpack.c.l.b16 %v636
    %v1360 = vunpack.c.h.b16 %v636
    %v1361 = vunpack.c.l.b16 %v637
    %v1362 = vunpack.c.h.b16 %v637
    %v1363 = vunpack.c.l.b16 %v638
    %v1364 = vunpack.c.h.b16 %v638
    %v1365 = vunpack.c.l.b16 %v639
    %v1366 = vunpack.c.h.b16 %v639
    %v1367 = vunpack.c.l.b16 %v640
    %v1368 = vunpack.c.h.b16 %v640
    %v1369 = vunpack.c.l.b16 %v641
    %v1370 = vunpack.c.h.b16 %v641
    %v1371 = vunpack.c.l.b16 %v642
    %v1372 = vunpack.c.h.b16 %v642
    %v1373 = vunpack.c.l.b16 %v643
    %v1374 = vunpack.c.h.b16 %v643
    %v1375 = vunpack.c.l.b16 %v644
    %v1376 = vunpack.c.h.b16 %v644
    %v1377 = vunpack.c.l.b16 %v645
    %v1378 = vunpack.c.h.b16 %v645
    %v1379 = vunpack.c.l.b16 %v646
    %v1380 = vunpack.c.h.b16 %v646
    %v1381 = vunpack.c.l.b16 %v647
    %v1382 = vunpack.c.h.b16 %v647
    %v1383 = vunpack.c.l.b16 %v648
    %v1384 = vunpack.c.h.b16 %v648
    %v1385 = vunpack.c.l.b16 %v649
    %v1386 = vunpack.c.h.b16 %v649
    %v1387 = vunpack.c.l.b16 %v650
    %v1388 = vunpack.c.h.b16 %v650
    %v1389 = vunpack.c.l.b16 %v651
    %v1390 = vunpack.c.h.b16 %v651
    %v1391 = vunpack.c.l.b16 %v652
    %v1392 = vunpack.c.h.b16 %v652
    %v1393 = vunpack.c.l.b16 %v653
    %v1394 = vunpack.c.h.b16 %v653
    %v1395 = vunpack.c.l.b16 %v654
    %v1396 = vunpack.c.h.b16 %v654
    %v1397 = vunpack.c.l.b16 %v655
    %v1398 = vunpack.c.h.b16 %v655
    %v1399 = vunpack.c.l.b16 %v656
    %v1400 = vunpack.c.h.b16 %v656
    %v1401 = vunpack.c.l.b16 %v657
    %v1402 = vunpack.c.h.b16 %v657
    %v1403 = vunpack.c.l.b16 %v658
    %v1404 = vunpack.c.h.b16 %v658
    %v1405 = vunpack.c.l.b16 %v659
    %v1406 = vunpack.c.h.b16 %v659
    %v1407 = vunpack.c.l.b16 %v660
    %v1408 = vunpack.c.h.b16 %v660
    %v1409 = vunpack.c.l.b16 %v661
    %v1410 = vunpack.c.h.b16 %v661
    %v1411 = vunpack.c.l.b16 %v662
    %v1412 = vunpack.c.h.b16 %v662
    %v1413 = vunpack.c.l.b16 %v663
    %v1414 = vunpack.c.h.b16 %v663
    %v1415 = vunpack.c.l.b16 %v664
    %v1416 = vunpack.c.h.b16 %v664
    %v1417 = vunpack.c.l.b16 %v665
    %v1418 = vunpack.c.h.b16 %v665
    %v1419 = vunpack.c.l.b16 %v666
    %v1420 = vunpack.c.h.b16 %v666
    %v1421 = vunpack.c.l.b16 %v667
    %v1422 = vunpack.c.h.b16 %v667
    %v1423 = vunpack.c.l.b16 %v668
    %v1424 = vunpack.c.h.b16 %v668
    %v1425 = vunpack.c.l.b16 %v669
    %v1426 = vunpack.c.h.b16 %v669
    %v1427 = vunpack.c.l.b16 %v670
    %v1428 = vunpack.c.h.b16 %v670
    %v1429 = vunpack.c.l.b16 %v671
    %v1430 = vunpack.c.h.b16 %v671
    %v1431 = vunpack.c.l.b16 %v672
    %v1432 = vunpack.c.h.b16 %v672
    %v1433 = vunpack.c.l.b16 %v673
    %v1434 = vunpack.c.h.b16 %v673
    %v1435 = vunpack.c.l.b16 %v674
    %v1436 = vunpack.c.h.b16 %v674
    %v1437 = vunpack.c.l.b16 %v675
    %v1438 = vunpack.c.h.b16 %v675
    %v1439 = vunpack.c.l.b16 %v676
    %v1440 = vunpack.c.h.b16 %v676
    %v1441 = vunpack.c.l.b16 %v677
    %v1442 = vunpack.c.h.b16 %v677
    %v1443 = vunpack.c.l.b16 %v678
    %v1444 = vunpack.c.h.b16 %v678
    %v1445 = vunpack.c.l.b16 %v679
    %v1446 = vunpack.c.h.b16 %v679
    %v1447 = vunpack.c.l.b16 %v680
    %v1448 = vunpack.c.h.b16 %v680
    %v1449 = vunpack.c.l.b16 %v681
    %v1450 = vunpack.c.h.b16 %v681
    %v1451 = vunpack.c.l.b16 %v682
    %v1452 = vunpack.c.h.b16 %v682
    %v1453 = vunpack.c.l.b16 %v683
    %v1454 = vunpack.c.h.b16 %v683
    %v1455 = vunpack.c.l.b16 %v684
    %v1456 = vunpack.c.h.b16 %v684
    %v1457 = vunpack.c.l.b16 %v685
    %v1458 = vunpack.c.h.b16 %v685
    %v1459 = vunpack.c.l.b16 %v686
    %v1460 = vunpack.c.h.b16 %v686
    %v1461 = vunpack.c.l.b16 %v687
    %v1462 = vunpack.c.h.b16 %v687
    %v1463 = vunpack.c.l.b16 %v688
    %v1464 = vunpack.c.h.b16 %v688
    %v1465 = vunpack.c.l.b16 %v689
    %v1466 = vunpack.c.h.b16 %v689
    %v1467 = vunpack.c.l.b16 %v690
    %v1468 = vunpack.c.h.b16 %v690
    %v1469 = vunpack.c.l.b16 %v691
    %v1470 = vunpack.c.h.b16 %v691
    %v1471 = vunpack.c.l.b16 %v692
    %v1472 = vunpack.c.h.b16 %v692
    %v1473 = vunpack.c.l.b16 %v693
    %v1474 = vunpack.c.h.b16 %v693
    %v1475 = vunpack.c.l.b16 %v694
    %v1476 = vunpack.c.h.b16 %v694
    %v1477 = vunpack.c.l.b16 %v695
    %v1478 = vunpack.c.h.b16 %v695
    %v1479 = vunpack.c.l.b16 %v696
    %v1480 = vunpack.c.h.b16 %v696
    %v1481 = vunpack.c.l.b16 %v697
    %v1482 = vunpack.c.h.b16 %v697
    %v1483 = vunpack.c.l.b16 %v698
    %v1484 = vunpack.c.h.b16 %v698
    %v1485 = vunpack.c.l.b16 %v699
    %v1486 = vunpack.c.h.b16 %v699
    %v1487 = vunpack.c.l.b16 %v700
    %v1488 = vunpack.c.h.b16 %v700
    %v1489 = vunpack.c.l.b16 %v701
    %v1490 = vunpack.c.h.b16 %v701
    %v1491 = vunpack.c.l.b16 %v702
    %v1492 = vunpack.c.h.b16 %v702
    %v1493 = vunpack.c.l.b16 %v703
    %v1494 = vunpack.c.h.b16 %v703
    %v1495 = vunpack.c.l.b16 %v704
    %v1496 = vunpack.c.h.b16 %v704
    %v1497 = vunpack.c.l.b16 %v705
    %v1498 = vunpack.c.h.b16 %v705
    %v1499 = vunpack.c.l.b16 %v706
    %v1500 = vunpack.c.h.b16 %v706
    %v1501 = vunpack.c.l.b16 %v707
    %v1502 = vunpack.c.h.b16 %v707
    %v1503 = vunpack.c.l.b16 %v708
    %v1504 = vunpack.c.h.b16 %v708
    %v1505 = vunpack.c.l.b16 %v709
    %v1506 = vunpack.c.h.b16 %v709
    %v1507 = vunpack.c.l.b16 %v710
    %v1508 = vunpack.c.h.b16 %v710
    %v1509 = vunpack.c.l.b16 %v711
    %v1510 = vunpack.c.h.b16 %v711
    %v1511 = vunpack.c.l.b16 %v712
    %v1512 = vunpack.c.h.b16 %v712
    %v1513 = vunpack.c.l.b16 %v713
    %v1514 = vunpack.c.h.b16 %v713
    %v1515 = vunpack.c.l.b16 %v714
    %v1516 = vunpack.c.h.b16 %v714
    %v1517 = vunpack.c.l.b16 %v715
    %v1518 = vunpack.c.h.b16 %v715
    %v1519 = vunpack.c.l.b16 %v716
    %v1520 = vunpack.c.h.b16 %v716
    %v1521 = vunpack.c.l.b16 %v717
    %v1522 = vunpack.c.h.b16 %v717
    %v1523 = vunpack.c.l.b16 %v718
    %v1524 = vunpack.c.h.b16 %v718
    %v1525 = vunpack.c.l.b16 %v719
    %v1526 = vunpack.c.h.b16 %v719
    %v1527 = vunpack.c.l.b16 %v720
    %v1528 = vunpack.c.h.b16 %v720
    %v1529 = vunpack.c.l.b16 %v721
    %v1530 = vunpack.c.h.b16 %v721
    %v1531 = vunpack.c.l.b16 %v722
    %v1532 = vunpack.c.h.b16 %v722
    %v1533 = vunpack.c.l.b16 %v723
    %v1534 = vunpack.c.h.b16 %v723
    %v1535 = vunpack.c.l.b16 %v724
    %v1536 = vunpack.c.h.b16 %v724
    %v1537 = vunpack.c.l.b16 %v725
    %v1538 = vunpack.c.h.b16 %v725
    %v1539 = vunpack.c.l.b16 %v726
    %v1540 = vunpack.c.h.b16 %v726
    %v1541 = vunpack.c.l.b16 %v727
    %v1542 = vunpack.c.h.b16 %v727
    %v1543 = vunpack.c.l.b16 %v728
    %v1544 = vunpack.c.h.b16 %v728
    %v1545 = vunpack.c.l.b16 %v729
    %v1546 = vunpack.c.h.b16 %v729
    %v1547 = vunpack.c.l.b16 %v730
    %v1548 = vunpack.c.h.b16 %v730
    %v1549 = vunpack.c.l.b16 %v731
    %v1550 = vunpack.c.h.b16 %v731
    %v1551 = vunpack.c.l.b16 %v732
    %v1552 = vunpack.c.h.b16 %v732
    %v1553 = vunpack.c.l.b16 %v733
    %v1554 = vunpack.c.h.b16 %v733
    %v1555 = vunpack.c.l.b16 %v734
    %v1556 = vunpack.c.h.b16 %v734
    %v1557 = vunpack.c.l.b16 %v735
    %v1558 = vunpack.c.h.b16 %v735
    %v1559 = vunpack.c.l.b16 %v736
    %v1560 = vunpack.c.h.b16 %v736
    %v1561 = vunpack.c.l.b16 %v737
    %v1562 = vunpack.c.h.b16 %v737
    %v1563 = vunpack.c.l.b16 %v738
    %v1564 = vunpack.c.h.b16 %v738
    %v1565 = vunpack.c.l.b16 %v739
    %v1566 = vunpack.c.h.b16 %v739
    %v1567 = vunpack.c.l.b16 %v740
    %v1568 = vunpack.c.h.b16 %v740
    %v1569 = vunpack.c.l.b16 %v741
    %v1570 = vunpack.c.h.b16 %v741
    %v1571 = vunpack.c.l.b16 %v742
    %v1572 = vunpack.c.h.b16 %v742
    %v1573 = vunpack.c.l.b16 %v743
    %v1574 = vunpack.c.h.b16 %v743
    %v1575 = vunpack.c.l.b16 %v744
    %v1576 = vunpack.c.h.b16 %v744
    %v1577 = vunpack.c.l.b16 %v745
    %v1578 = vunpack.c.h.b16 %v745
    %v1579 = vunpack.c.l.b16 %v746
    %v1580 = vunpack.c.h.b16 %v746
    %v1581 = vunpack.c.l.b16 %v747
    %v1582 = vunpack.c.h.b16 %v747
    %v1583 = vunpack.c.l.b16 %v748
    %v1584 = vunpack.c.h.b16 %v748
    %v1585 = vunpack.c.l.b16 %v749
    %v1586 = vunpack.c.h.b16 %v749
    %v1587 = vunpack.c.l.b16 %v750
    %v1588 = vunpack.c.h.b16 %v750
    %v1589 = vunpack.c.l.b16 %v751
    %v1590 = vunpack.c.h.b16 %v751
    %v1591 = vunpack.c.l.b16 %v752
    %v1592 = vunpack.c.h.b16 %v752
    %v1593 = vunpack.c.l.b16 %v753
    %v1594 = vunpack.c.h.b16 %v753
    %v1595 = vunpack.c.l.b16 %v754
    %v1596 = vunpack.c.h.b16 %v754
    %v1597 = vunpack.c.l.b16 %v755
    %v1598 = vunpack.c.h.b16 %v755
    %v1599 = vunpack.c.l.b16 %v756
    %v1600 = vunpack.c.h.b16 %v756
    %v1601 = vunpack.c.l.b16 %v757
    %v1602 = vunpack.c.h.b16 %v757
    %v1603 = vunpack.c.l.b16 %v758
    %v1604 = vunpack.c.h.b16 %v758
    %v1605 = vunpack.c.l.b16 %v759
    %v1606 = vunpack.c.h.b16 %v759
    %v1607 = vunpack.c.l.b16 %v760
    %v1608 = vunpack.c.h.b16 %v760
    %v1609 = vunpack.c.l.b16 %v761
    %v1610 = vunpack.c.h.b16 %v761
    %v1611 = vunpack.c.l.b16 %v762
    %v1612 = vunpack.c.h.b16 %v762
    %v1613 = vunpack.c.l.b16 %v763
    %v1614 = vunpack.c.h.b16 %v763
    %v1615 = vunpack.c.l.b16 %v764
    %v1616 = vunpack.c.h.b16 %v764
    %v1617 = vunpack.c.l.b16 %v765
    %v1618 = vunpack.c.h.b16 %v765
    %v1619 = vunpack.c.l.b16 %v766
    %v1620 = vunpack.c.h.b16 %v766
    %v1621 = vunpack.c.l.b16 %v767
    %v1622 = vunpack.c.h.b16 %v767
    %v1623 = vunpack.c.l.b16 %v768
    %v1624 = vunpack.c.h.b16 %v768
    %v1625 = vunpack.c.l.b16 %v769
    %v1626 = vunpack.c.h.b16 %v769
    %v1627 = vunpack.c.l.b16 %v770
    %v1628 = vunpack.c.h.b16 %v770
    %v1629 = vunpack.c.l.b16 %v771
    %v1630 = vunpack.c.h.b16 %v771
    %v1631 = vunpack.c.l.b16 %v772
    %v1632 = vunpack.c.h.b16 %v772
    %v1633 = vunpack.c.l.b16 %v773
    %v1634 = vunpack.c.h.b16 %v773
    %v1635 = vunpack.c.l.b16 %v774
    %v1636 = vunpack.c.h.b16 %v774
    %v1637 = vunpack.c.l.b16 %v775
    %v1638 = vunpack.c.h.b16 %v775
    %v1639 = vunpack.c.l.b16 %v776
    %v1640 = vunpack.c.h.b16 %v776
    %v1641 = vunpack.c.l.b16 %v777
    %v1642 = vunpack.c.h.b16 %v777
    %v1643 = vunpack.c.l.b16 %v778
    %v1644 = vunpack.c.h.b16 %v778
    %v1645 = vunpack.c.l.b16 %v779
    %v1646 = vunpack.c.h.b16 %v779
    %v1647 = vunpack.c.l.b16 %v780
    %v1648 = vunpack.c.h.b16 %v780
    %v1649 = vunpack.c.l.b16 %v781
    %v1650 = vunpack.c.h.b16 %v781
    %v1651 = vunpack.c.l.b16 %v782
    %v1652 = vunpack.c.h.b16 %v782
    %v1653 = vunpack.c.l.b16 %v783
    %v1654 = vunpack.c.h.b16 %v783
    %v1655 = vunpack.c.l.b16 %v784
    %v1656 = vunpack.c.h.b16 %v784
    %v1657 = vunpack.c.l.b16 %v785
    %v1658 = vunpack.c.h.b16 %v785
    %v1659 = vunpack.c.l.b16 %v786
    %v1660 = vunpack.c.h.b16 %v786
    %v1661 = vunpack.c.l.b16 %v787
    %v1662 = vunpack.c.h.b16 %v787
    %v1663 = vunpack.c.l.b16 %v788
    %v1664 = vunpack.c.h.b16 %v788
    %v1665 = vunpack.c.l.b16 %v789
    %v1666 = vunpack.c.h.b16 %v789
    %v1667 = vunpack.c.l.b16 %v790
    %v1668 = vunpack.c.h.b16 %v790
    %v1669 = vunpack.c.l.b16 %v791
    %v1670 = vunpack.c.h.b16 %v791
    %v1671 = vunpack.c.l.b16 %v792
    %v1672 = vunpack.c.h.b16 %v792
    %v1673 = vunpack.c.l.b16 %v793
    %v1674 = vunpack.c.h.b16 %v793
    %v1675 = vunpack.c.l.b16 %v794
    %v1676 = vunpack.c.h.b16 %v794
    %v1677 = vunpack.c.l.b16 %v795
    %v1678 = vunpack.c.h.b16 %v795
    %v1679 = vunpack.c.l.b16 %v796
    %v1680 = vunpack.c.h.b16 %v796
    %v1681 = vunpack.c.l.b16 %v797
    %v1682 = vunpack.c.h.b16 %v797
    %v1683 = vunpack.c.l.b16 %v798
    %v1684 = vunpack.c.h.b16 %v798
    %v1685 = vunpack.c.l.b16 %v799
    %v1686 = vunpack.c.h.b16 %v799
    %v1687 = vunpack.c.l.b16 %v800
    %v1688 = vunpack.c.h.b16 %v800
    %v1689 = vunpack.c.l.b16 %v801
    %v1690 = vunpack.c.h.b16 %v801
    %v1691 = vunpack.c.l.b16 %v802
    %v1692 = vunpack.c.h.b16 %v802
    %v1693 = vunpack.c.l.b16 %v803
    %v1694 = vunpack.c.h.b16 %v803
    %v1695 = vunpack.c.l.b16 %v804
    %v1696 = vunpack.c.h.b16 %v804
    %v1697 = vunpack.c.l.b16 %v805
    %v1698 = vunpack.c.h.b16 %v805
    %v1699 = vunpack.c.l.b16 %v806
    %v1700 = vunpack.c.h.b16 %v806
    %v1701 = vunpack.c.l.b16 %v807
    %v1702 = vunpack.c.h.b16 %v807
    %v1703 = vunpack.c.l.b16 %v808
    %v1704 = vunpack.c.h.b16 %v808
    %v1705 = vunpack.c.l.b16 %v809
    %v1706 = vunpack.c.h.b16 %v809
    %v1707 = vunpack.c.l.b16 %v810
    %v1708 = vunpack.c.h.b16 %v810
    %v1709 = vunpack.c.l.b16 %v811
    %v1710 = vunpack.c.h.b16 %v811
    %v1711 = vunpack.c.l.b16 %v812
    %v1712 = vunpack.c.h.b16 %v812
    %v1713 = vunpack.c.l.b16 %v813
    %v1714 = vunpack.c.h.b16 %v813
    %v1715 = vunpack.c.l.b16 %v814
    %v1716 = vunpack.c.h.b16 %v814
    %v1717 = vunpack.c.l.b16 %v815
    %v1718 = vunpack.c.h.b16 %v815
    %v1719 = vunpack.c.l.b16 %v816
    %v1720 = vunpack.c.h.b16 %v816
    %v1721 = vunpack.c.l.b16 %v817
    %v1722 = vunpack.c.h.b16 %v817
    %v1723 = vunpack.c.l.b16 %v818
    %v1724 = vunpack.c.h.b16 %v818
    %v1725 = vunpack.c.l.b16 %v819
    %v1726 = vunpack.c.h.b16 %v819
    %v1727 = vunpack.c.l.b16 %v820
    %v1728 = vunpack.c.h.b16 %v820
    %v1729 = vunpack.c.l.b16 %v821
    %v1730 = vunpack.c.h.b16 %v821
    %v1731 = vunpack.c.l.b16 %v822
    %v1732 = vunpack.c.h.b16 %v822
    %v1733 = vunpack.c.l.b16 %v823
    %v1734 = vunpack.c.h.b16 %v823
    %v1735 = vunpack.c.l.b16 %v824
    %v1736 = vunpack.c.h.b16 %v824
    %v1737 = vunpack.c.l.b16 %v825
    %v1738 = vunpack.c.h.b16 %v825
    %v1739 = vpack.c.b16 %v1169, %v1163
    %v1740 = vpack.c.b16 %v1170, %v1164
    %v1741 = vpack.c.b16 %v1171, %v1165
    %v1742 = vpack.c.b16 %v1172, %v1166
    %v1743 = vpack.c.b16 %v1173, %v1167
    %v1744 = vpack.c.b16 %v1174, %v1168
    %v1745 = vpack.c.b16 %v1181, %v1175
    %v1746 = vpack.c.b16 %v1182, %v1176
    %v1747 = vpack.c.b16 %v1183, %v1177
    %v1748 = vpack.c.b16 %v1184, %v1178
    %v1749 = vpack.c.b16 %v1185, %v1179
    %v1750 = vpack.c.b16 %v1186, %v1180
    %v1751 = vpack.c.b16 %v1193, %v1187
    %v1752 = vpack.c.b16 %v1194, %v1188
    %v1753 = vpack.c.b16 %v1195, %v1189
    %v1754 = vpack.c.b16 %v1196, %v1190
    %v1755 = vpack.c.b16 %v1197, %v1191
    %v1756 = vpack.c.b16 %v1198, %v1192
    %v1757 = vpack.c.b16 %v1205, %v1199
    %v1758 = vpack.c.b16 %v1206, %v1200
    %v1759 = vpack.c.b16 %v1207, %v1201
    %v1760 = vpack.c.b16 %v1208, %v1202
    %v1761 = vpack.c.b16 %v1209, %v1203
    %v1762 = vpack.c.b16 %v1210, %v1204
    %v1763 = vpack.c.b16 %v1217, %v1211
    %v1764 = vpack.c.b16 %v1218, %v1212
    %v1765 = vpack.c.b16 %v1219, %v1213
    %v1766 = vpack.c.b16 %v1220, %v1214
    %v1767 = vpack.c.b16 %v1221, %v1215
    %v1768 = vpack.c.b16 %v1222, %v1216
    %v1769 = vpack.c.b16 %v1229, %v1223
    %v1770 = vpack.c.b16 %v1230, %v1224
    %v1771 = vpack.c.b16 %v1231, %v1225
    %v1772 = vpack.c.b16 %v1232, %v1226
    %v1773 = vpack.c.b16 %v1233, %v1227
    %v1774 = vpack.c.b16 %v1234, %v1228
    %v1775 = vpack.c.b16 %v1241, %v1235
    %v1776 = vpack.c.b16 %v1242, %v1236
    %v1777 = vpack.c.b16 %v1243, %v1237
    %v1778 = vpack.c.b16 %v1244, %v1238
    %v1779 = vpack.c.b16 %v1245, %v1239
    %v1780 = vpack.c.b16 %v1246, %v1240
    %v1781 = vpack.c.b16 %v1253, %v1247
    %v1782 = vpack.c.b16 %v1254, %v1248
    %v1783 = vpack.c.b16 %v1255, %v1249
    %v1784 = vpack.c.b16 %v1256, %v1250
    %v1785 = vpack.c.b16 %v1257, %v1251
    %v1786 = vpack.c.b16 %v1258, %v1252
    %v1787 = vpack.c.b16 %v1265, %v1259
    %v1788 = vpack.c.b16 %v1266, %v1260
    %v1789 = vpack.c.b16 %v1267, %v1261
    %v1790 = vpack.c.b16 %v1268, %v1262
    %v1791 = vpack.c.b16 %v1269, %v1263
    %v1792 = vpack.c.b16 %v1270, %v1264
    %v1793 = vpack.c.b16 %v1277, %v1271
    %v1794 = vpack.c.b16 %v1278, %v1272
    %v1795 = vpack.c.b16 %v1279, %v1273
    %v1796 = vpack.c.b16 %v1280, %v1274
    %v1797 = vpack.c.b16 %v1281, %v1275
    %v1798 = vpack.c.b16 %v1282, %v1276
    %v1799 = vpack.c.b16 %v1289, %v1283
    %v1800 = vpack.c.b16 %v1290, %v1284
    %v1801 = vpack.c.b16 %v1291, %v1285
    %v1802 = vpack.c.b16 %v1292, %v1286
    %v1803 = vpack.c.b16 %v1293, %v1287
    %v1804 = vpack.c.b16 %v1294, %v1288
    %v1805 = vpack.c.b16 %v1301, %v1295
    %v1806 = vpack.c.b16 %v1302, %v1296
    %v1807 = vpack.c.b16 %v1303, %v1297
    %v1808 = vpack.c.b16 %v1304, %v1298
    %v1809 = vpack.c.b16 %v1305, %v1299
    %v1810 = vpack.c.b16 %v1306, %v1300
    %v1811 = vpack.c.b16 %v1313, %v1307
    %v1812 = vpack.c.b16 %v1314, %v1308
    %v1813 = vpack.c.b16 %v1315, %v1309
    %v1814 = vpack.c.b16 %v1316, %v1310
    %v1815 = vpack.c.b16 %v1317, %v1311
    %v1816 = vpack.c.b16 %v1318, %v1312
    %v1817 = vpack.c.b16 %v1325, %v1319
    %v1818 = vpack.c.b16 %v1326, %v1320
    %v1819 = vpack.c.b16 %v1327, %v1321
    %v1820 = vpack.c.b16 %v1328, %v1322
    %v1821 = vpack.c.b16 %v1329, %v1323
    %v1822 = vpack.c.b16 %v1330, %v1324
    %v1823 = vpack.c.b16 %v1337, %v1331
    %v1824 = vpack.c.b16 %v1338, %v1332
    %v1825 = vpack.c.b16 %v1339, %v1333
    %v1826 = vpack.c.b16 %v1340, %v1334
    %v1827 = vpack.c.b16 %v1341, %v1335
    %v1828 = vpack.c.b16 %v1342, %v1336
    %v1829 = vpack.c.b16 %v1349, %v1343
    %v1830 = vpack.c.b16 %v1350, %v1344
    %v1831 = vpack.c.b16 %v1351, %v1345
    %v1832 = vpack.c.b16 %v1352, %v1346
    %v1833 = vpack.c.b16 %v1353, %v1347
    %v1834 = vpack.c.b16 %v1354, %v1348
    %v1835 = vpack.c.b16 %v1361, %v1355
    %v1836 = vpack.c.b16 %v1362, %v1356
    %v1837 = vpack.c.b16 %v1363, %v1357
    %v1838 = vpack.c.b16 %v1364, %v1358
    %v1839 = vpack.c.b16 %v1365, %v1359
    %v1840 = vpack.c.b16 %v1366, %v1360
    %v1841 = vpack.c.b16 %v1373, %v1367
    %v1842 = vpack.c.b16 %v1374, %v1368
    %v1843 = vpack.c.b16 %v1375, %v1369
    %v1844 = vpack.c.b16 %v1376, %v1370
    %v1845 = vpack.c.b16 %v1377, %v1371
    %v1846 = vpack.c.b16 %v1378, %v1372
    %v1847 = vpack.c.b16 %v1385, %v1379
    %v1848 = vpack.c.b16 %v1386, %v1380
    %v1849 = vpack.c.b16 %v1387, %v1381
    %v1850 = vpack.c.b16 %v1388, %v1382
    %v1851 = vpack.c.b16 %v1389, %v1383
    %v1852 = vpack.c.b16 %v1390, %v1384
    %v1853 = vpack.c.b16 %v1397, %v1391
    %v1854 = vpack.c.b16 %v1398, %v1392
    %v1855 = vpack.c.b16 %v1399, %v1393
    %v1856 = vpack.c.b16 %v1400, %v1394
    %v1857 = vpack.c.b16 %v1401, %v1395
    %v1858 = vpack.c.b16 %v1402, %v1396
    %v1859 = vpack.c.b16 %v1409, %v1403
    %v1860 = vpack.c.b16 %v1410, %v1404
    %v1861 = vpack.c.b16 %v1411, %v1405
    %v1862 = vpack.c.b16 %v1412, %v1406
    %v1863 = vpack.c.b16 %v1413, %v1407
    %v1864 = vpack.c.b16 %v1414, %v1408
    %v1865 = vpack.c.b16 %v1421, %v1415
    %v1866 = vpack.c.b16 %v1422, %v1416
    %v1867 = vpack.c.b16 %v1423, %v1417
    %v1868 = vpack.c.b16 %v1424, %v1418
    %v1869 = vpack.c.b16 %v1425, %v1419
    %v1870 = vpack.c.b16 %v1426, %v1420
    %v1871 = vpack.c.b16 %v1433, %v1427
    %v1872 = vpack.c.b16 %v1434, %v1428
    %v1873 = vpack.c.b16 %v1435, %v1429
    %v1874 = vpack.c.b16 %v1436, %v1430
    %v1875 = vpack.c.b16 %v1437, %v1431
    %v1876 = vpack.c.b16 %v1438, %v1432
    %v1877 = vpack.c.b16 %v1445, %v1439
    %v1878 = vpack.c.b16 %v1446, %v1440
    %v1879 = vpack.c.b16 %v1447, %v1441
    %v1880 = vpack.c.b16 %v1448, %v1442
    %v1881 = vpack.c.b16 %v1449, %v1443
    %v1882 = vpack.c.b16 %v1450, %v1444
    %v1883 = vpack.c.b16 %v1457, %v1451
    %v1884 = vpack.c.b16 %v1458, %v1452
    %v1885 = vpack.c.b16 %v1459, %v1453
    %v1886 = vpack.c.b16 %v1460, %v1454
    %v1887 = vpack.c.b16 %v1461, %v1455
    %v1888 = vpack.c.b16 %v1462, %v1456
    %v1889 = vpack.c.b16 %v1469, %v1463
    %v1890 = vpack.c.b16 %v1470, %v1464
    %v1891 = vpack.c.b16 %v1471, %v1465
    %v1892 = vpack.c.b16 %v1472, %v1466
    %v1893 = vpack.c.b16 %v1473, %v1467
    %v1894 = vpack.c.b16 %v1474, %v1468
    %v1895 = vpack.c.b16 %v1481, %v1475
    %v1896 = vpack.c.b16 %v1482, %v1476
    %v1897 = vpack.c.b16 %v1483, %v1477
    %v1898 = vpack.c.b16 %v1484, %v1478
    %v1899 = vpack.c.b16 %v1485, %v1479
    %v1900 = vpack.c.b16 %v1486, %v1480
    %v1901 = vpack.c.b16 %v1493, %v1487
    %v1902 = vpack.c.b16 %v1494, %v1488
    %v1903 = vpack.c.b16 %v1495, %v1489
    %v1904 = vpack.c.b16 %v1496, %v1490
    %v1905 = vpack.c.b16 %v1497, %v1491
    %v1906 = vpack.c.b16 %v1498, %v1492
    %v1907 = vpack.c.b16 %v1505, %v1499
    %v1908 = vpack.c.b16 %v1506, %v1500
    %v1909 = vpack.c.b16 %v1507, %v1501
    %v1910 = vpack.c.b16 %v1508, %v1502
    %v1911 = vpack.c.b16 %v1509, %v1503
    %v1912 = vpack.c.b16 %v1510, %v1504
    %v1913 = vpack.c.b16 %v1517, %v1511
    %v1914 = vpack.c.b16 %v1518, %v1512
    %v1915 = vpack.c.b16 %v1519, %v1513
    %v1916 = vpack.c.b16 %v1520, %v1514
    %v1917 = vpack.c.b16 %v1521, %v1515
    %v1918 = vpack.c.b16 %v1522, %v1516
    %v1919 = vpack.c.b16 %v1529, %v1523
    %v1920 = vpack.c.b16 %v1530, %v1524
    %v1921 = vpack.c.b16 %v1531, %v1525
    %v1922 = vpack.c.b16 %v1532, %v1526
    %v1923 = vpack.c.b16 %v1533, %v1527
    %v1924 = vpack.c.b16 %v1534, %v1528
    %v1925 = vpack.c.b16 %v1541, %v1535
    %v1926 = vpack.c.b16 %v1542, %v1536
    %v1927 = vpack.c.b16 %v1543, %v1537
    %v1928 = vpack.c.b16 %v1544, %v1538
    %v1929 = vpack.c.b16 %v1545, %v1539
    %v1930 = vpack.c.b16 %v1546, %v1540
    %v1931 = vpack.c.b16 %v1553, %v1547
    %v1932 = vpack.c.b16 %v1554, %v1548
    %v1933 = vpack.c.b16 %v1555, %v1549
    %v1934 = vpack.c.b16 %v1556, %v1550
    %v1935 = vpack.c.b16 %v1557, %v1551
    %v1936 = vpack.c.b16 %v1558, %v1552
    %v1937 = vpack.c.b16 %v1565, %v1559
    %v1938 = vpack.c.b16 %v1566, %v1560
    %v1939 = vpack.c.b16 %v1567, %v1561
    %v1940 = vpack.c.b16 %v1568, %v1562
    %v1941 = vpack.c.b16 %v1569, %v1563
    %v1942 = vpack.c.b16 %v1570, %v1564
    %v1943 = vpack.c.b16 %v1577, %v1571
    %v1944 = vpack.c.b16 %v1578, %v1572
    %v1945 = vpack.c.b16 %v1579, %v1573
    %v1946 = vpack.c.b16 %v1580, %v1574
    %v1947 = vpack.c.b16 %v1581, %v1575
    %v1948 = vpack.c.b16 %v1582, %v1576
    %v1949 = vpack.c.b16 %v1589, %v1583
    %v1950 = vpack.c.b16 %v1590, %v1584
    %v1951 = vpack.c.b16 %v1591, %v1585
    %v1952 = vpack.c.b16 %v1592, %v1586
    %v1953 = vpack.c.b16 %v1593, %v1587
    %v1954 = vpack.c.b16 %v1594, %v1588
    %v1955 = vpack.c.b16 %v1601, %v1595
    %v1956 = vpack.c.b16 %v1602, %v1596
    %v1957 = vpack.c.b16 %v1603, %v1597
    %v1958 = vpack.c.b16 %v1604, %v1598
    %v1959 = vpack.c.b16 %v1605, %v1599
    %v1960 = vpack.c.b16 %v1606, %v1600
    %v1961 = vpack.c.b16 %v1613, %v1607
    %v1962 = vpack.c.b16 %v1614, %v1608
    %v1963 = vpack.c.b16 %v1615, %v1609
    %v1964 = vpack.c.b16 %v1616, %v1610
    %v1965 = vpack.c.b16 %v1617, %v1611
    %v1966 = vpack.c.b16 %v1618, %v1612
    %v1967 = vpack.c.b16 %v1625, %v1619
    %v1968 = vpack.c.b16 %v1626, %v1620
    %v1969 = vpack.c.b16 %v1627, %v1621
    %v1970 = vpack.c.b16 %v1628, %v1622
    %v1971 = vpack.c.b16 %v1629, %v1623
    %v1972 = vpack.c.b16 %v1630, %v1624
    %v1973 = vpack.c.b16 %v1637, %v1631
    %v1974 = vpack.c.b16 %v1638, %v1632
    %v1975 = vpack.c.b16 %v1639, %v1633
    %v1976 = vpack.c.b16 %v1640, %v1634
    %v1977 = vpack.c.b16 %v1641, %v1635
    %v1978 = vpack.c.b16 %v1642, %v1636
    %v1979 = vpack.c.b16 %v1649, %v1643
    %v1980 = vpack.c.b16 %v1650, %v1644
    %v1981 = vpack.c.b16 %v1651, %v1645
    %v1982 = vpack.c.b16 %v1652, %v1646
    %v1983 = vpack.c.b16 %v1653, %v1647
    %v1984 = vpack.c.b16 %v1654, %v1648
    %v1985 = vpack.c.b16 %v1661, %v1655
    %v1986 = vpack.c.b16 %v1662, %v1656
    %v1987 = vpack.c.b16 %v1663, %v1657
    %v1988 = vpack.c.b16 %v1664, %v1658
    %v1989 = vpack.c.b16 %v1665, %v1659
    %v1990 = vpack.c.b16 %v1666, %v1660
    %v1991 = vpack.c.b16 %v1673, %v1667
    %v1992 = vpack.c.b16 %v1674, %v1668
    %v1993 = vpack.c.b16 %v1675, %v1669
    %v1994 = vpack.c.b16 %v1676, %v1670
    %v1995 = vpack.c.b16 %v1677, %v1671
    %v1996 = vpack.c.b16 %v1678, %v1672
    %v1997 = vpack.c.b16 %v1685, %v1679
    %v1998 = vpack.c.b16 %v1686, %v1680
    %v1999 = vpack.c.b16 %v1687, %v1681
    %v2000 = vpack.c.b16 %v1688, %v1682
    %v2001 = vpack.c.b16 %v1689, %v1683
    %v2002 = vpack.c.b16 %v1690, %v1684
    %v2003 = vpack.c.b16 %v1697, %v1691
    %v2004 = vpack.c.b16 %v1698, %v1692
    %v2005 = vpack.c.b16 %v1699, %v1693
    %v2006 = vpack.c.b16 %v1700, %v1694
    %v2007 = vpack.c.b16 %v1701, %v1695
    %v2008 = vpack.c.b16 %v1702, %v1696
    %v2009 = vpack.c.b16 %v1709, %v1703
    %v2010 = vpack.c.b16 %v1710, %v1704
    %v2011 = vpack.c.b16 %v1711, %v1705
    %v2012 = vpack.c.b16 %v1712, %v1706
    %v2013 = vpack.c.b16 %v1713, %v1707
    %v2014 = vpack.c.b16 %v1714, %v1708
    %v2015 = vpack.c.b16 %v1721, %v1715
    %v2016 = vpack.c.b16 %v1722, %v1716
    %v2017 = vpack.c.b16 %v1723, %v1717
    %v2018 = vpack.c.b16 %v1724, %v1718
    %v2019 = vpack.c.b16 %v1725, %v1719
    %v2020 = vpack.c.b16 %v1726, %v1720
    %v2021 = vpack.c.b16 %v1733, %v1727
    %v2022 = vpack.c.b16 %v1734, %v1728
    %v2023 = vpack.c.b16 %v1735, %v1729
    %v2024 = vpack.c.b16 %v1736, %v1730
    %v2025 = vpack.c.b16 %v1737, %v1731
    %v2026 = vpack.c.b16 %v1738, %v1732
    %2315 = vmatprep.subr.bf16.mxu0 %v1740
    %2316 = vmatpush1.bf16.msra.mxu0 %v1739
    %2317 = vmatprep.subr.bf16.mxu0 %v1746
    %2318 = vmatpush1.bf16.msra.mxu0 %v1745
    %2319 = vmatprep.subr.bf16.mxu0 %v1752
    %2320 = vmatpush1.bf16.msra.mxu0 %v1751
    %2321 = vmatprep.subr.bf16.mxu0 %v1758
    %2322 = vmatpush1.bf16.msra.mxu0 %v1757
    %2323 = vmatprep.subr.bf16.mxu0 %v1764
    %2324 = vmatpush1.bf16.msra.mxu0 %v1763
    %2325 = vmatprep.subr.bf16.mxu0 %v1770
    %2326 = vmatpush1.bf16.msra.mxu0 %v1769
    %2327 = vmatprep.subr.bf16.mxu0 %v1776
    %2328 = vmatpush1.bf16.msra.mxu0 %v1775
    %2329 = vmatprep.subr.bf16.mxu0 %v1782
    %2330 = vmatpush1.bf16.msra.mxu0 %v1781
    %2331 = vmatprep.subr.bf16.mxu0 %v1788
    %2332 = vmatpush1.bf16.msra.mxu0 %v1787
    %2333 = vmatprep.subr.bf16.mxu0 %v1794
    %2334 = vmatpush1.bf16.msra.mxu0 %v1793
    %2335 = vmatprep.subr.bf16.mxu0 %v1800
    %2336 = vmatpush1.bf16.msra.mxu0 %v1799
    %2337 = vmatprep.subr.bf16.mxu0 %v1806
    %2338 = vmatpush1.bf16.msra.mxu0 %v1805
    %2339 = vmatprep.subr.bf16.mxu0 %v1812
    %2340 = vmatpush1.bf16.msra.mxu0 %v1811
    %2341 = vmatprep.subr.bf16.mxu0 %v1818
    %2342 = vmatpush1.bf16.msra.mxu0 %v1817
    %2343 = vmatprep.subr.bf16.mxu0 %v1824
    %2344 = vmatpush1.bf16.msra.mxu0 %v1823
    %2345 = vmatprep.subr.bf16.mxu0 %v1830
    %2346 = vmatpush1.bf16.msra.mxu0 %v1829
    %2347 = vmatprep.mubr.bf16.mxu0 %v864
    %2348 = vmatmul.mubr.bf16.gmra.mrb[0].mxu0 %v863
    %v2349 = vpop.f32.mrb[0].mxu0
    %v2350 = vadd.f32 0.0, %v2349
    %v2351 = vpop.f32.mrb[0].mxu0
    %v2352 = vadd.f32 0.0, %v2351
    %v2353 = vpop.f32.mrb[0].mxu0
    %v2354 = vpop.f32.mrb[0].mxu0
    %2355 = vdwg.mxu0
    %2356 = vmatprep.subr.bf16.mxu0 %v1836
    %2357 = vmatpush1.bf16.msra.mxu0 %v1835
    %2358 = vmatprep.subr.bf16.mxu0 %v1842
    %2359 = vmatpush1.bf16.msra.mxu0 %v1841
    %2360 = vmatprep.subr.bf16.mxu0 %v1848
    %2361 = vmatpush1.bf16.msra.mxu0 %v1847
    %2362 = vmatprep.subr.bf16.mxu0 %v1854
    %2363 = vmatpush1.bf16.msra.mxu0 %v1853
    %2364 = vmatprep.subr.bf16.mxu0 %v1860
    %2365 = vmatpush1.bf16.msra.mxu0 %v1859
    %2366 = vmatprep.subr.bf16.mxu0 %v1866
    %2367 = vmatpush1.bf16.msra.mxu0 %v1865
    %2368 = vmatprep.subr.bf16.mxu0 %v1872
    %2369 = vmatpush1.bf16.msra.mxu0 %v1871
    %2370 = vmatprep.subr.bf16.mxu0 %v1878
    %2371 = vmatpush1.bf16.msra.mxu0 %v1877
    %2372 = vmatprep.subr.bf16.mxu0 %v1884
    %2373 = vmatpush1.bf16.msra.mxu0 %v1883
    %2374 = vmatprep.subr.bf16.mxu0 %v1890
    %2375 = vmatpush1.bf16.msra.mxu0 %v1889
    %2376 = vmatprep.subr.bf16.mxu0 %v1896
    %2377 = vmatpush1.bf16.msra.mxu0 %v1895
    %2378 = vmatprep.subr.bf16.mxu0 %v1902
    %2379 = vmatpush1.bf16.msra.mxu0 %v1901
    %2380 = vmatprep.subr.bf16.mxu0 %v1908
    %2381 = vmatpush1.bf16.msra.mxu0 %v1907
    %2382 = vmatprep.subr.bf16.mxu0 %v1914
    %2383 = vmatpush1.bf16.msra.mxu0 %v1913
    %2384 = vmatprep.subr.bf16.mxu0 %v1920
    %2385 = vmatpush1.bf16.msra.mxu0 %v1919
    %2386 = vmatprep.subr.bf16.mxu0 %v1926
    %2387 = vmatpush1.bf16.msra.mxu0 %v1925
    %2388 = vmatprep.mubr.bf16.mxu0 %v866
    %2389 = vmatmul.mubr.bf16.gmra.mrb[0].mxu0 %v865
    %v2390 = vpop.f32.mrb[0].mxu0
    %v2391 = vadd.f32 %v2350, %v2390
    %v2392 = vpop.f32.mrb[0].mxu0
    %v2393 = vadd.f32 %v2352, %v2392
    %v2394 = vpop.f32.mrb[0].mxu0
    %v2395 = vpop.f32.mrb[0].mxu0
    %2396 = vdwg.mxu0
    %2397 = vmatprep.subr.bf16.mxu0 %v1932
    %2398 = vmatpush1.bf16.msra.mxu0 %v1931
    %2399 = vmatprep.subr.bf16.mxu0 %v1938
    %2400 = vmatpush1.bf16.msra.mxu0 %v1937
    %2401 = vmatprep.subr.bf16.mxu0 %v1944
    %2402 = vmatpush1.bf16.msra.mxu0 %v1943
    %2403 = vmatprep.subr.bf16.mxu0 %v1950
    %2404 = vmatpush1.bf16.msra.mxu0 %v1949
    %2405 = vmatprep.subr.bf16.mxu0 %v1956
    %2406 = vmatpush1.bf16.msra.mxu0 %v1955
    %2407 = vmatprep.subr.bf16.mxu0 %v1962
    %2408 = vmatpush1.bf16.msra.mxu0 %v1961
    %2409 = vmatprep.subr.bf16.mxu0 %v1968
    %2410 = vmatpush1.bf16.msra.mxu0 %v1967
    %2411 = vmatprep.subr.bf16.mxu0 %v1974
    %2412 = vmatpush1.bf16.msra.mxu0 %v1973
    %2413 = vmatprep.subr.bf16.mxu0 %v1980
    %2414 = vmatpush1.bf16.msra.mxu0 %v1979
    %2415 = vmatprep.subr.bf16.mxu0 %v1986
    %2416 = vmatpush1.bf16.msra.mxu0 %v1985
    %2417 = vmatprep.subr.bf16.mxu0 %v1992
    %2418 = vmatpush1.bf16.msra.mxu0 %v1991
    %2419 = vmatprep.subr.bf16.mxu0 %v1998
    %2420 = vmatpush1.bf16.msra.mxu0 %v1997
    %2421 = vmatprep.subr.bf16.mxu0 %v2004
    %2422 = vmatpush1.bf16.msra.mxu0 %v2003
    %2423 = vmatprep.subr.bf16.mxu0 %v2010
    %2424 = vmatpush1.bf16.msra.mxu0 %v2009
    %2425 = vmatprep.subr.bf16.mxu0 %v2016
    %2426 = vmatpush1.bf16.msra.mxu0 %v2015
    %2427 = vmatprep.subr.bf16.mxu0 %v2022
    %2428 = vmatpush1.bf16.msra.mxu0 %v2021
    %2429 = vmatprep.mubr.bf16.mxu0 %v868
    %2430 = vmatmul.mubr.bf16.gmra.mrb[0].mxu0 %v867
    %v2431 = vpop.f32.mrb[0].mxu0
    %v2432 = vadd.f32 %v2391, %v2431
    %v2433 = vpop.f32.mrb[0].mxu0
    %v2434 = vadd.f32 %v2393, %v2433
    %v2435 = vpop.f32.mrb[0].mxu0
    %v2436 = vpop.f32.mrb[0].mxu0
    %2437 = vdwg.mxu0
    %2438 = vmatprep.subr.bf16.mxu0 %v1742
    %2439 = vmatpush1.bf16.msra.mxu0 %v1741
    %2440 = vmatprep.subr.bf16.mxu0 %v1748
    %2441 = vmatpush1.bf16.msra.mxu0 %v1747
    %2442 = vmatprep.subr.bf16.mxu0 %v1754
    %2443 = vmatpush1.bf16.msra.mxu0 %v1753
    %2444 = vmatprep.subr.bf16.mxu0 %v1760
    %2445 = vmatpush1.bf16.msra.mxu0 %v1759
    %2446 = vmatprep.subr.bf16.mxu0 %v1766
    %2447 = vmatpush1.bf16.msra.mxu0 %v1765
    %2448 = vmatprep.subr.bf16.mxu0 %v1772
    %2449 = vmatpush1.bf16.msra.mxu0 %v1771
    %2450 = vmatprep.subr.bf16.mxu0 %v1778
    %2451 = vmatpush1.bf16.msra.mxu0 %v1777
    %2452 = vmatprep.subr.bf16.mxu0 %v1784
    %2453 = vmatpush1.bf16.msra.mxu0 %v1783
    %2454 = vmatprep.subr.bf16.mxu0 %v1790
    %2455 = vmatpush1.bf16.msra.mxu0 %v1789
    %2456 = vmatprep.subr.bf16.mxu0 %v1796
    %2457 = vmatpush1.bf16.msra.mxu0 %v1795
    %2458 = vmatprep.subr.bf16.mxu0 %v1802
    %2459 = vmatpush1.bf16.msra.mxu0 %v1801
    %2460 = vmatprep.subr.bf16.mxu0 %v1808
    %2461 = vmatpush1.bf16.msra.mxu0 %v1807
    %2462 = vmatprep.subr.bf16.mxu0 %v1814
    %2463 = vmatpush1.bf16.msra.mxu0 %v1813
    %2464 = vmatprep.subr.bf16.mxu0 %v1820
    %2465 = vmatpush1.bf16.msra.mxu0 %v1819
    %2466 = vmatprep.subr.bf16.mxu0 %v1826
    %2467 = vmatpush1.bf16.msra.mxu0 %v1825
    %2468 = vmatprep.subr.bf16.mxu0 %v1832
    %2469 = vmatpush1.bf16.msra.mxu0 %v1831
    %2470 = vmatprep.mubr.bf16.mxu0 %v864
    %2471 = vmatmul.mubr.bf16.gmra.mrb[0].mxu0 %v863
    %v2472 = vpop.f32.mrb[0].mxu0
    %v2473 = vadd.f32 0.0, %v2472
    %v2474 = vpop.f32.mrb[0].mxu0
    %v2475 = vadd.f32 0.0, %v2474
    %v2476 = vpop.f32.mrb[0].mxu0
    %v2477 = vpop.f32.mrb[0].mxu0
    %2478 = vdwg.mxu0
    %2479 = vmatprep.subr.bf16.mxu0 %v1838
    %2480 = vmatpush1.bf16.msra.mxu0 %v1837
    %2481 = vmatprep.subr.bf16.mxu0 %v1844
    %2482 = vmatpush1.bf16.msra.mxu0 %v1843
    %2483 = vmatprep.subr.bf16.mxu0 %v1850
    %2484 = vmatpush1.bf16.msra.mxu0 %v1849
    %2485 = vmatprep.subr.bf16.mxu0 %v1856
    %2486 = vmatpush1.bf16.msra.mxu0 %v1855
    %2487 = vmatprep.subr.bf16.mxu0 %v1862
    %2488 = vmatpush1.bf16.msra.mxu0 %v1861
    %2489 = vmatprep.subr.bf16.mxu0 %v1868
    %2490 = vmatpush1.bf16.msra.mxu0 %v1867
    %2491 = vmatprep.subr.bf16.mxu0 %v1874
    %2492 = vmatpush1.bf16.msra.mxu0 %v1873
    %2493 = vmatprep.subr.bf16.mxu0 %v1880
    %2494 = vmatpush1.bf16.msra.mxu0 %v1879
    %2495 = vmatprep.subr.bf16.mxu0 %v1886
    %2496 = vmatpush1.bf16.msra.mxu0 %v1885
    %2497 = vmatprep.subr.bf16.mxu0 %v1892
    %2498 = vmatpush1.bf16.msra.mxu0 %v1891
    %2499 = vmatprep.subr.bf16.mxu0 %v1898
    %2500 = vmatpush1.bf16.msra.mxu0 %v1897
    %2501 = vmatprep.subr.bf16.mxu0 %v1904
    %2502 = vmatpush1.bf16.msra.mxu0 %v1903
    %2503 = vmatprep.subr.bf16.mxu0 %v1910
    %2504 = vmatpush1.bf16.msra.mxu0 %v1909
    %2505 = vmatprep.subr.bf16.mxu0 %v1916
    %2506 = vmatpush1.bf16.msra.mxu0 %v1915
    %2507 = vmatprep.subr.bf16.mxu0 %v1922
    %2508 = vmatpush1.bf16.msra.mxu0 %v1921
    %2509 = vmatprep.subr.bf16.mxu0 %v1928
    %2510 = vmatpush1.bf16.msra.mxu0 %v1927
    %2511 = vmatprep.mubr.bf16.mxu0 %v866
    %2512 = vmatmul.mubr.bf16.gmra.mrb[0].mxu0 %v865
    %v2513 = vpop.f32.mrb[0].mxu0
    %v2514 = vadd.f32 %v2473, %v2513
    %v2515 = vpop.f32.mrb[0].mxu0
    %v2516 = vadd.f32 %v2475, %v2515
    %v2517 = vpop.f32.mrb[0].mxu0
    %v2518 = vpop.f32.mrb[0].mxu0
    %2519 = vdwg.mxu0
    %2520 = vmatprep.subr.bf16.mxu0 %v1934
    %2521 = vmatpush1.bf16.msra.mxu0 %v1933
    %2522 = vmatprep.subr.bf16.mxu0 %v1940
    %2523 = vmatpush1.bf16.msra.mxu0 %v1939
    %2524 = vmatprep.subr.bf16.mxu0 %v1946
    %2525 = vmatpush1.bf16.msra.mxu0 %v1945
    %2526 = vmatprep.subr.bf16.mxu0 %v1952
    %2527 = vmatpush1.bf16.msra.mxu0 %v1951
    %2528 = vmatprep.subr.bf16.mxu0 %v1958
    %2529 = vmatpush1.bf16.msra.mxu0 %v1957
    %2530 = vmatprep.subr.bf16.mxu0 %v1964
    %2531 = vmatpush1.bf16.msra.mxu0 %v1963
    %2532 = vmatprep.subr.bf16.mxu0 %v1970
    %2533 = vmatpush1.bf16.msra.mxu0 %v1969
    %2534 = vmatprep.subr.bf16.mxu0 %v1976
    %2535 = vmatpush1.bf16.msra.mxu0 %v1975
    %2536 = vmatprep.subr.bf16.mxu0 %v1982
    %2537 = vmatpush1.bf16.msra.mxu0 %v1981
    %2538 = vmatprep.subr.bf16.mxu0 %v1988
    %2539 = vmatpush1.bf16.msra.mxu0 %v1987
    %2540 = vmatprep.subr.bf16.mxu0 %v1994
    %2541 = vmatpush1.bf16.msra.mxu0 %v1993
    %2542 = vmatprep.subr.bf16.mxu0 %v2000
    %2543 = vmatpush1.bf16.msra.mxu0 %v1999
    %2544 = vmatprep.subr.bf16.mxu0 %v2006
    %2545 = vmatpush1.bf16.msra.mxu0 %v2005
    %2546 = vmatprep.subr.bf16.mxu0 %v2012
    %2547 = vmatpush1.bf16.msra.mxu0 %v2011
    %2548 = vmatprep.subr.bf16.mxu0 %v2018
    %2549 = vmatpush1.bf16.msra.mxu0 %v2017
    %2550 = vmatprep.subr.bf16.mxu0 %v2024
    %2551 = vmatpush1.bf16.msra.mxu0 %v2023
    %2552 = vmatprep.mubr.bf16.mxu0 %v868
    %2553 = vmatmul.mubr.bf16.gmra.mrb[0].mxu0 %v867
    %v2554 = vpop.f32.mrb[0].mxu0
    %v2555 = vadd.f32 %v2514, %v2554
    %v2556 = vpop.f32.mrb[0].mxu0
    %v2557 = vadd.f32 %v2516, %v2556
    %v2558 = vpop.f32.mrb[0].mxu0
    %v2559 = vpop.f32.mrb[0].mxu0
    %2560 = vdwg.mxu0
    %2561 = vmatprep.subr.bf16.mxu0 %v1744
    %2562 = vmatpush1.bf16.msra.mxu0 %v1743
    %2563 = vmatprep.subr.bf16.mxu0 %v1750
    %2564 = vmatpush1.bf16.msra.mxu0 %v1749
    %2565 = vmatprep.subr.bf16.mxu0 %v1756
    %2566 = vmatpush1.bf16.msra.mxu0 %v1755
    %2567 = vmatprep.subr.bf16.mxu0 %v1762
    %2568 = vmatpush1.bf16.msra.mxu0 %v1761
    %2569 = vmatprep.subr.bf16.mxu0 %v1768
    %2570 = vmatpush1.bf16.msra.mxu0 %v1767
    %2571 = vmatprep.subr.bf16.mxu0 %v1774
    %2572 = vmatpush1.bf16.msra.mxu0 %v1773
    %2573 = vmatprep.subr.bf16.mxu0 %v1780
    %2574 = vmatpush1.bf16.msra.mxu0 %v1779
    %2575 = vmatprep.subr.bf16.mxu0 %v1786
    %2576 = vmatpush1.bf16.msra.mxu0 %v1785
    %2577 = vmatprep.subr.bf16.mxu0 %v1792
    %2578 = vmatpush1.bf16.msra.mxu0 %v1791
    %2579 = vmatprep.subr.bf16.mxu0 %v1798
    %2580 = vmatpush1.bf16.msra.mxu0 %v1797
    %2581 = vmatprep.subr.bf16.mxu0 %v1804
    %2582 = vmatpush1.bf16.msra.mxu0 %v1803
    %2583 = vmatprep.subr.bf16.mxu0 %v1810
    %2584 = vmatpush1.bf16.msra.mxu0 %v1809
    %2585 = vmatprep.subr.bf16.mxu0 %v1816
    %2586 = vmatpush1.bf16.msra.mxu0 %v1815
    %2587 = vmatprep.subr.bf16.mxu0 %v1822
    %2588 = vmatpush1.bf16.msra.mxu0 %v1821
    %2589 = vmatprep.subr.bf16.mxu0 %v1828
    %2590 = vmatpush1.bf16.msra.mxu0 %v1827
    %2591 = vmatprep.subr.bf16.mxu0 %v1834
    %2592 = vmatpush1.bf16.msra.mxu0 %v1833
    %2593 = vmatprep.mubr.bf16.mxu0 %v864
    %2594 = vmatmul.mubr.bf16.gmra.mrb[0].mxu0 %v863
    %v2595 = vpop.f32.mrb[0].mxu0
    %v2596 = vadd.f32 0.0, %v2595
    %v2597 = vpop.f32.mrb[0].mxu0
    %v2598 = vadd.f32 0.0, %v2597
    %v2599 = vpop.f32.mrb[0].mxu0
    %v2600 = vpop.f32.mrb[0].mxu0
    %2601 = vdwg.mxu0
    %2602 = vmatprep.subr.bf16.mxu0 %v1840
    %2603 = vmatpush1.bf16.msra.mxu0 %v1839
    %2604 = vmatprep.subr.bf16.mxu0 %v1846
    %2605 = vmatpush1.bf16.msra.mxu0 %v1845
    %2606 = vmatprep.subr.bf16.mxu0 %v1852
    %2607 = vmatpush1.bf16.msra.mxu0 %v1851
    %2608 = vmatprep.subr.bf16.mxu0 %v1858
    %2609 = vmatpush1.bf16.msra.mxu0 %v1857
    %2610 = vmatprep.subr.bf16.mxu0 %v1864
    %2611 = vmatpush1.bf16.msra.mxu0 %v1863
    %2612 = vmatprep.subr.bf16.mxu0 %v1870
    %2613 = vmatpush1.bf16.msra.mxu0 %v1869
    %2614 = vmatprep.subr.bf16.mxu0 %v1876
    %2615 = vmatpush1.bf16.msra.mxu0 %v1875
    %2616 = vmatprep.subr.bf16.mxu0 %v1882
    %2617 = vmatpush1.bf16.msra.mxu0 %v1881
    %2618 = vmatprep.subr.bf16.mxu0 %v1888
    %2619 = vmatpush1.bf16.msra.mxu0 %v1887
    %2620 = vmatprep.subr.bf16.mxu0 %v1894
    %2621 = vmatpush1.bf16.msra.mxu0 %v1893
    %2622 = vmatprep.subr.bf16.mxu0 %v1900
    %2623 = vmatpush1.bf16.msra.mxu0 %v1899
    %2624 = vmatprep.subr.bf16.mxu0 %v1906
    %2625 = vmatpush1.bf16.msra.mxu0 %v1905
    %2626 = vmatprep.subr.bf16.mxu0 %v1912
    %2627 = vmatpush1.bf16.msra.mxu0 %v1911
    %2628 = vmatprep.subr.bf16.mxu0 %v1918
    %2629 = vmatpush1.bf16.msra.mxu0 %v1917
    %2630 = vmatprep.subr.bf16.mxu0 %v1924
    %2631 = vmatpush1.bf16.msra.mxu0 %v1923
    %2632 = vmatprep.subr.bf16.mxu0 %v1930
    %2633 = vmatpush1.bf16.msra.mxu0 %v1929
    %2634 = vmatprep.mubr.bf16.mxu0 %v866
    %2635 = vmatmul.mubr.bf16.gmra.mrb[0].mxu0 %v865
    %v2636 = vpop.f32.mrb[0].mxu0
    %v2637 = vadd.f32 %v2596, %v2636
    %v2638 = vpop.f32.mrb[0].mxu0
    %v2639 = vadd.f32 %v2598, %v2638
    %v2640 = vpop.f32.mrb[0].mxu0
    %v2641 = vpop.f32.mrb[0].mxu0
    %2642 = vdwg.mxu0
    %2643 = vmatprep.subr.bf16.mxu0 %v1936
    %2644 = vmatpush1.bf16.msra.mxu0 %v1935
    %2645 = vmatprep.subr.bf16.mxu0 %v1942
    %2646 = vmatpush1.bf16.msra.mxu0 %v1941
    %2647 = vmatprep.subr.bf16.mxu0 %v1948
    %2648 = vmatpush1.bf16.msra.mxu0 %v1947
    %2649 = vmatprep.subr.bf16.mxu0 %v1954
    %2650 = vmatpush1.bf16.msra.mxu0 %v1953
    %2651 = vmatprep.subr.bf16.mxu0 %v1960
    %2652 = vmatpush1.bf16.msra.mxu0 %v1959
    %2653 = vmatprep.subr.bf16.mxu0 %v1966
    %2654 = vmatpush1.bf16.msra.mxu0 %v1965
    %2655 = vmatprep.subr.bf16.mxu0 %v1972
    %2656 = vmatpush1.bf16.msra.mxu0 %v1971
    %2657 = vmatprep.subr.bf16.mxu0 %v1978
    %2658 = vmatpush1.bf16.msra.mxu0 %v1977
    %2659 = vmatprep.subr.bf16.mxu0 %v1984
    %2660 = vmatpush1.bf16.msra.mxu0 %v1983
    %2661 = vmatprep.subr.bf16.mxu0 %v1990
    %2662 = vmatpush1.bf16.msra.mxu0 %v1989
    %2663 = vmatprep.subr.bf16.mxu0 %v1996
    %2664 = vmatpush1.bf16.msra.mxu0 %v1995
    %2665 = vmatprep.subr.bf16.mxu0 %v2002
    %2666 = vmatpush1.bf16.msra.mxu0 %v2001
    %2667 = vmatprep.subr.bf16.mxu0 %v2008
    %2668 = vmatpush1.bf16.msra.mxu0 %v2007
    %2669 = vmatprep.subr.bf16.mxu0 %v2014
    %2670 = vmatpush1.bf16.msra.mxu0 %v2013
    %2671 = vmatprep.subr.bf16.mxu0 %v2020
    %2672 = vmatpush1.bf16.msra.mxu0 %v2019
    %2673 = vmatprep.subr.bf16.mxu0 %v2026
    %2674 = vmatpush1.bf16.msra.mxu0 %v2025
    %2675 = vmatprep.mubr.bf16.mxu0 %v868
    %2676 = vmatmul.mubr.bf16.gmra.mrb[0].mxu0 %v867
    %v2677 = vpop.f32.mrb[0].mxu0
    %v2678 = vadd.f32 %v2637, %v2677
    %v2679 = vpop.f32.mrb[0].mxu0
    %v2680 = vadd.f32 %v2639, %v2679
    %v2681 = vpop.f32.mrb[0].mxu0
    %v2682 = vpop.f32.mrb[0].mxu0
    %2683 = vdwg.mxu0
    %v2696 = vunpack.c.l.b16 %v157
    %v2697 = vunpack.c.l.b16 %v158
    %v2698 = vunpack.c.l.b16 %v159
    %v2699 = vunpack.c.l.b16 %v160
    %v2700 = vunpack.c.l.b16 %v161
    %v2701 = vunpack.c.l.b16 %v162
    %v2702 = vunpack.c.l.b16 %v163
    %v2703 = vunpack.c.l.b16 %v164
    %v2704 = vunpack.c.l.b16 %v165
    %v2705 = vunpack.c.l.b16 %v166
    %v2706 = vunpack.c.l.b16 %v167
    %v2707 = vunpack.c.l.b16 %v168
    %v2708 = vrot.slane %v2702, 7
    %v2709 = vsel %vm851, %v2708, %v2696
    %v2710 = vrot.slane %v2703, 7
    %v2711 = vsel %vm851, %v2710, %v2697
    %v2712 = vrot.slane %v2704, 7
    %v2713 = vsel %vm851, %v2712, %v2698
    %v2714 = vrot.slane %v2705, 7
    %v2715 = vsel %vm851, %v2714, %v2699
    %v2716 = vrot.slane %v2706, 7
    %v2717 = vsel %vm851, %v2716, %v2700
    %v2718 = vrot.slane %v2707, 7
    %v2719 = vsel %vm851, %v2718, %v2701
    %v2720 = vpack.c.b16 %v2709, %v2709
    %v2721 = vpack.c.b16 %v2711, %v2711
    %v2722 = vpack.c.b16 %v2713, %v2713
    %v2723 = vpack.c.b16 %v2715, %v2715
    %v2724 = vpack.c.b16 %v2717, %v2717
    %v2725 = vpack.c.b16 %v2719, %v2719
    %v3020 = vunpack.c.l.b16 %v250
    %v3021 = vunpack.c.h.b16 %v250
    %v3022 = vunpack.c.l.b16 %v251
    %v3023 = vunpack.c.h.b16 %v251
    %v3024 = vunpack.c.l.b16 %v252
    %v3025 = vunpack.c.h.b16 %v252
    %v3026 = vunpack.c.l.b16 %v253
    %v3027 = vunpack.c.h.b16 %v253
    %v3028 = vunpack.c.l.b16 %v254
    %v3029 = vunpack.c.h.b16 %v254
    %v3030 = vunpack.c.l.b16 %v255
    %v3031 = vunpack.c.h.b16 %v255
    %v3032 = vunpack.c.l.b16 %v256
    %v3033 = vunpack.c.h.b16 %v256
    %v3034 = vunpack.c.l.b16 %v257
    %v3035 = vunpack.c.h.b16 %v257
    %v3036 = vunpack.c.l.b16 %v258
    %v3037 = vunpack.c.h.b16 %v258
    %v3038 = vunpack.c.l.b16 %v259
    %v3039 = vunpack.c.h.b16 %v259
    %v3040 = vunpack.c.l.b16 %v260
    %v3041 = vunpack.c.h.b16 %v260
    %v3042 = vunpack.c.l.b16 %v261
    %v3043 = vunpack.c.h.b16 %v261
    %v3044 = vunpack.c.l.b16 %v262
    %v3045 = vunpack.c.h.b16 %v262
    %v3046 = vunpack.c.l.b16 %v263
    %v3047 = vunpack.c.h.b16 %v263
    %v3048 = vunpack.c.l.b16 %v264
    %v3049 = vunpack.c.h.b16 %v264
    %v3050 = vunpack.c.l.b16 %v265
    %v3051 = vunpack.c.h.b16 %v265
    %v3052 = vunpack.c.l.b16 %v266
    %v3053 = vunpack.c.h.b16 %v266
    %v3054 = vunpack.c.l.b16 %v267
    %v3055 = vunpack.c.h.b16 %v267
    %v3056 = vunpack.c.l.b16 %v268
    %v3057 = vunpack.c.h.b16 %v268
    %v3058 = vunpack.c.l.b16 %v269
    %v3059 = vunpack.c.h.b16 %v269
    %v3060 = vunpack.c.l.b16 %v270
    %v3061 = vunpack.c.h.b16 %v270
    %v3062 = vunpack.c.l.b16 %v271
    %v3063 = vunpack.c.h.b16 %v271
    %v3064 = vunpack.c.l.b16 %v272
    %v3065 = vunpack.c.h.b16 %v272
    %v3066 = vunpack.c.l.b16 %v273
    %v3067 = vunpack.c.h.b16 %v273
    %v3068 = vunpack.c.l.b16 %v274
    %v3069 = vunpack.c.h.b16 %v274
    %v3070 = vunpack.c.l.b16 %v275
    %v3071 = vunpack.c.h.b16 %v275
    %v3072 = vunpack.c.l.b16 %v276
    %v3073 = vunpack.c.h.b16 %v276
    %v3074 = vunpack.c.l.b16 %v277
    %v3075 = vunpack.c.h.b16 %v277
    %v3076 = vunpack.c.l.b16 %v278
    %v3077 = vunpack.c.h.b16 %v278
    %v3078 = vunpack.c.l.b16 %v279
    %v3079 = vunpack.c.h.b16 %v279
    %v3080 = vunpack.c.l.b16 %v280
    %v3081 = vunpack.c.h.b16 %v280
    %v3082 = vunpack.c.l.b16 %v281
    %v3083 = vunpack.c.h.b16 %v281
    %v3084 = vunpack.c.l.b16 %v282
    %v3085 = vunpack.c.h.b16 %v282
    %v3086 = vunpack.c.l.b16 %v283
    %v3087 = vunpack.c.h.b16 %v283
    %v3088 = vunpack.c.l.b16 %v284
    %v3089 = vunpack.c.h.b16 %v284
    %v3090 = vunpack.c.l.b16 %v285
    %v3091 = vunpack.c.h.b16 %v285
    %v3092 = vunpack.c.l.b16 %v286
    %v3093 = vunpack.c.h.b16 %v286
    %v3094 = vunpack.c.l.b16 %v287
    %v3095 = vunpack.c.h.b16 %v287
    %v3096 = vunpack.c.l.b16 %v288
    %v3097 = vunpack.c.h.b16 %v288
    %v3098 = vunpack.c.l.b16 %v289
    %v3099 = vunpack.c.h.b16 %v289
    %v3100 = vunpack.c.l.b16 %v290
    %v3101 = vunpack.c.h.b16 %v290
    %v3102 = vunpack.c.l.b16 %v291
    %v3103 = vunpack.c.h.b16 %v291
    %v3104 = vunpack.c.l.b16 %v292
    %v3105 = vunpack.c.h.b16 %v292
    %v3106 = vunpack.c.l.b16 %v293
    %v3107 = vunpack.c.h.b16 %v293
    %v3108 = vunpack.c.l.b16 %v294
    %v3109 = vunpack.c.h.b16 %v294
    %v3110 = vunpack.c.l.b16 %v295
    %v3111 = vunpack.c.h.b16 %v295
    %v3112 = vunpack.c.l.b16 %v296
    %v3113 = vunpack.c.h.b16 %v296
    %v3114 = vunpack.c.l.b16 %v297
    %v3115 = vunpack.c.h.b16 %v297
    %v3116 = vunpack.c.l.b16 %v298
    %v3117 = vunpack.c.h.b16 %v298
    %v3118 = vunpack.c.l.b16 %v299
    %v3119 = vunpack.c.h.b16 %v299
    %v3120 = vunpack.c.l.b16 %v300
    %v3121 = vunpack.c.h.b16 %v300
    %v3122 = vunpack.c.l.b16 %v301
    %v3123 = vunpack.c.h.b16 %v301
    %v3124 = vunpack.c.l.b16 %v302
    %v3125 = vunpack.c.h.b16 %v302
    %v3126 = vunpack.c.l.b16 %v303
    %v3127 = vunpack.c.h.b16 %v303
    %v3128 = vunpack.c.l.b16 %v304
    %v3129 = vunpack.c.h.b16 %v304
    %v3130 = vunpack.c.l.b16 %v305
    %v3131 = vunpack.c.h.b16 %v305
    %v3132 = vunpack.c.l.b16 %v306
    %v3133 = vunpack.c.h.b16 %v306
    %v3134 = vunpack.c.l.b16 %v307
    %v3135 = vunpack.c.h.b16 %v307
    %v3136 = vunpack.c.l.b16 %v308
    %v3137 = vunpack.c.h.b16 %v308
    %v3138 = vunpack.c.l.b16 %v309
    %v3139 = vunpack.c.h.b16 %v309
    %v3140 = vunpack.c.l.b16 %v310
    %v3141 = vunpack.c.h.b16 %v310
    %v3142 = vunpack.c.l.b16 %v311
    %v3143 = vunpack.c.h.b16 %v311
    %v3144 = vunpack.c.l.b16 %v312
    %v3145 = vunpack.c.h.b16 %v312
    %v3146 = vunpack.c.l.b16 %v313
    %v3147 = vunpack.c.h.b16 %v313
    %v3148 = vunpack.c.l.b16 %v314
    %v3149 = vunpack.c.h.b16 %v314
    %v3150 = vunpack.c.l.b16 %v315
    %v3151 = vunpack.c.h.b16 %v315
    %v3152 = vunpack.c.l.b16 %v316
    %v3153 = vunpack.c.h.b16 %v316
    %v3154 = vunpack.c.l.b16 %v317
    %v3155 = vunpack.c.h.b16 %v317
    %v3156 = vunpack.c.l.b16 %v318
    %v3157 = vunpack.c.h.b16 %v318
    %v3158 = vunpack.c.l.b16 %v319
    %v3159 = vunpack.c.h.b16 %v319
    %v3160 = vunpack.c.l.b16 %v320
    %v3161 = vunpack.c.h.b16 %v320
    %v3162 = vunpack.c.l.b16 %v321
    %v3163 = vunpack.c.h.b16 %v321
    %v3164 = vunpack.c.l.b16 %v322
    %v3165 = vunpack.c.h.b16 %v322
    %v3166 = vunpack.c.l.b16 %v323
    %v3167 = vunpack.c.h.b16 %v323
    %v3168 = vunpack.c.l.b16 %v324
    %v3169 = vunpack.c.h.b16 %v324
    %v3170 = vunpack.c.l.b16 %v325
    %v3171 = vunpack.c.h.b16 %v325
    %v3172 = vunpack.c.l.b16 %v326
    %v3173 = vunpack.c.h.b16 %v326
    %v3174 = vunpack.c.l.b16 %v327
    %v3175 = vunpack.c.h.b16 %v327
    %v3176 = vunpack.c.l.b16 %v328
    %v3177 = vunpack.c.h.b16 %v328
    %v3178 = vunpack.c.l.b16 %v329
    %v3179 = vunpack.c.h.b16 %v329
    %v3180 = vunpack.c.l.b16 %v330
    %v3181 = vunpack.c.h.b16 %v330
    %v3182 = vunpack.c.l.b16 %v331
    %v3183 = vunpack.c.h.b16 %v331
    %v3184 = vunpack.c.l.b16 %v332
    %v3185 = vunpack.c.h.b16 %v332
    %v3186 = vunpack.c.l.b16 %v333
    %v3187 = vunpack.c.h.b16 %v333
    %v3188 = vunpack.c.l.b16 %v334
    %v3189 = vunpack.c.h.b16 %v334
    %v3190 = vunpack.c.l.b16 %v335
    %v3191 = vunpack.c.h.b16 %v335
    %v3192 = vunpack.c.l.b16 %v336
    %v3193 = vunpack.c.h.b16 %v336
    %v3194 = vunpack.c.l.b16 %v337
    %v3195 = vunpack.c.h.b16 %v337
    %v3196 = vunpack.c.l.b16 %v338
    %v3197 = vunpack.c.h.b16 %v338
    %v3198 = vunpack.c.l.b16 %v339
    %v3199 = vunpack.c.h.b16 %v339
    %v3200 = vunpack.c.l.b16 %v340
    %v3201 = vunpack.c.h.b16 %v340
    %v3202 = vunpack.c.l.b16 %v341
    %v3203 = vunpack.c.h.b16 %v341
    %v3204 = vunpack.c.l.b16 %v342
    %v3205 = vunpack.c.h.b16 %v342
    %v3206 = vunpack.c.l.b16 %v343
    %v3207 = vunpack.c.h.b16 %v343
    %v3208 = vunpack.c.l.b16 %v344
    %v3209 = vunpack.c.h.b16 %v344
    %v3210 = vunpack.c.l.b16 %v345
    %v3211 = vunpack.c.h.b16 %v345
    %v3212 = vunpack.c.l.b16 %v346
    %v3213 = vunpack.c.h.b16 %v346
    %v3214 = vunpack.c.l.b16 %v347
    %v3215 = vunpack.c.h.b16 %v347
    %v3216 = vunpack.c.l.b16 %v348
    %v3217 = vunpack.c.h.b16 %v348
    %v3218 = vunpack.c.l.b16 %v349
    %v3219 = vunpack.c.h.b16 %v349
    %v3220 = vunpack.c.l.b16 %v350
    %v3221 = vunpack.c.h.b16 %v350
    %v3222 = vunpack.c.l.b16 %v351
    %v3223 = vunpack.c.h.b16 %v351
    %v3224 = vunpack.c.l.b16 %v352
    %v3225 = vunpack.c.h.b16 %v352
    %v3226 = vunpack.c.l.b16 %v353
    %v3227 = vunpack.c.h.b16 %v353
    %v3228 = vunpack.c.l.b16 %v354
    %v3229 = vunpack.c.h.b16 %v354
    %v3230 = vunpack.c.l.b16 %v355
    %v3231 = vunpack.c.h.b16 %v355
    %v3232 = vunpack.c.l.b16 %v356
    %v3233 = vunpack.c.h.b16 %v356
    %v3234 = vunpack.c.l.b16 %v357
    %v3235 = vunpack.c.h.b16 %v357
    %v3236 = vunpack.c.l.b16 %v358
    %v3237 = vunpack.c.h.b16 %v358
    %v3238 = vunpack.c.l.b16 %v359
    %v3239 = vunpack.c.h.b16 %v359
    %v3240 = vunpack.c.l.b16 %v360
    %v3241 = vunpack.c.h.b16 %v360
    %v3242 = vunpack.c.l.b16 %v361
    %v3243 = vunpack.c.h.b16 %v361
    %v3244 = vunpack.c.l.b16 %v362
    %v3245 = vunpack.c.h.b16 %v362
    %v3246 = vunpack.c.l.b16 %v363
    %v3247 = vunpack.c.h.b16 %v363
    %v3248 = vunpack.c.l.b16 %v364
    %v3249 = vunpack.c.h.b16 %v364
    %v3250 = vunpack.c.l.b16 %v365
    %v3251 = vunpack.c.h.b16 %v365
    %v3252 = vunpack.c.l.b16 %v366
    %v3253 = vunpack.c.h.b16 %v366
    %v3254 = vunpack.c.l.b16 %v367
    %v3255 = vunpack.c.h.b16 %v367
    %v3256 = vunpack.c.l.b16 %v368
    %v3257 = vunpack.c.h.b16 %v368
    %v3258 = vunpack.c.l.b16 %v369
    %v3259 = vunpack.c.h.b16 %v369
    %v3260 = vunpack.c.l.b16 %v370
    %v3261 = vunpack.c.h.b16 %v370
    %v3262 = vunpack.c.l.b16 %v371
    %v3263 = vunpack.c.h.b16 %v371
    %v3264 = vunpack.c.l.b16 %v372
    %v3265 = vunpack.c.h.b16 %v372
    %v3266 = vunpack.c.l.b16 %v373
    %v3267 = vunpack.c.h.b16 %v373
    %v3268 = vunpack.c.l.b16 %v374
    %v3269 = vunpack.c.h.b16 %v374
    %v3270 = vunpack.c.l.b16 %v375
    %v3271 = vunpack.c.h.b16 %v375
    %v3272 = vunpack.c.l.b16 %v376
    %v3273 = vunpack.c.h.b16 %v376
    %v3274 = vunpack.c.l.b16 %v377
    %v3275 = vunpack.c.h.b16 %v377
    %v3276 = vunpack.c.l.b16 %v378
    %v3277 = vunpack.c.h.b16 %v378
    %v3278 = vunpack.c.l.b16 %v379
    %v3279 = vunpack.c.h.b16 %v379
    %v3280 = vunpack.c.l.b16 %v380
    %v3281 = vunpack.c.h.b16 %v380
    %v3282 = vunpack.c.l.b16 %v381
    %v3283 = vunpack.c.h.b16 %v381
    %v3284 = vunpack.c.l.b16 %v382
    %v3285 = vunpack.c.h.b16 %v382
    %v3286 = vunpack.c.l.b16 %v383
    %v3287 = vunpack.c.h.b16 %v383
    %v3288 = vunpack.c.l.b16 %v384
    %v3289 = vunpack.c.h.b16 %v384
    %v3290 = vunpack.c.l.b16 %v385
    %v3291 = vunpack.c.h.b16 %v385
    %v3292 = vunpack.c.l.b16 %v386
    %v3293 = vunpack.c.h.b16 %v386
    %v3294 = vunpack.c.l.b16 %v387
    %v3295 = vunpack.c.h.b16 %v387
    %v3296 = vunpack.c.l.b16 %v388
    %v3297 = vunpack.c.h.b16 %v388
    %v3298 = vunpack.c.l.b16 %v389
    %v3299 = vunpack.c.h.b16 %v389
    %v3300 = vunpack.c.l.b16 %v390
    %v3301 = vunpack.c.h.b16 %v390
    %v3302 = vunpack.c.l.b16 %v391
    %v3303 = vunpack.c.h.b16 %v391
    %v3304 = vunpack.c.l.b16 %v392
    %v3305 = vunpack.c.h.b16 %v392
    %v3306 = vunpack.c.l.b16 %v393
    %v3307 = vunpack.c.h.b16 %v393
    %v3308 = vunpack.c.l.b16 %v394
    %v3309 = vunpack.c.h.b16 %v394
    %v3310 = vunpack.c.l.b16 %v395
    %v3311 = vunpack.c.h.b16 %v395
    %v3312 = vunpack.c.l.b16 %v396
    %v3313 = vunpack.c.h.b16 %v396
    %v3314 = vunpack.c.l.b16 %v397
    %v3315 = vunpack.c.h.b16 %v397
    %v3316 = vunpack.c.l.b16 %v398
    %v3317 = vunpack.c.h.b16 %v398
    %v3318 = vunpack.c.l.b16 %v399
    %v3319 = vunpack.c.h.b16 %v399
    %v3320 = vunpack.c.l.b16 %v400
    %v3321 = vunpack.c.h.b16 %v400
    %v3322 = vunpack.c.l.b16 %v401
    %v3323 = vunpack.c.h.b16 %v401
    %v3324 = vunpack.c.l.b16 %v402
    %v3325 = vunpack.c.h.b16 %v402
    %v3326 = vunpack.c.l.b16 %v403
    %v3327 = vunpack.c.h.b16 %v403
    %v3328 = vunpack.c.l.b16 %v404
    %v3329 = vunpack.c.h.b16 %v404
    %v3330 = vunpack.c.l.b16 %v405
    %v3331 = vunpack.c.h.b16 %v405
    %v3332 = vunpack.c.l.b16 %v406
    %v3333 = vunpack.c.h.b16 %v406
    %v3334 = vunpack.c.l.b16 %v407
    %v3335 = vunpack.c.h.b16 %v407
    %v3336 = vunpack.c.l.b16 %v408
    %v3337 = vunpack.c.h.b16 %v408
    %v3338 = vunpack.c.l.b16 %v409
    %v3339 = vunpack.c.h.b16 %v409
    %v3340 = vunpack.c.l.b16 %v410
    %v3341 = vunpack.c.h.b16 %v410
    %v3342 = vunpack.c.l.b16 %v411
    %v3343 = vunpack.c.h.b16 %v411
    %v3344 = vunpack.c.l.b16 %v412
    %v3345 = vunpack.c.h.b16 %v412
    %v3346 = vunpack.c.l.b16 %v413
    %v3347 = vunpack.c.h.b16 %v413
    %v3348 = vunpack.c.l.b16 %v414
    %v3349 = vunpack.c.h.b16 %v414
    %v3350 = vunpack.c.l.b16 %v415
    %v3351 = vunpack.c.h.b16 %v415
    %v3352 = vunpack.c.l.b16 %v416
    %v3353 = vunpack.c.h.b16 %v416
    %v3354 = vunpack.c.l.b16 %v417
    %v3355 = vunpack.c.h.b16 %v417
    %v3356 = vunpack.c.l.b16 %v418
    %v3357 = vunpack.c.h.b16 %v418
    %v3358 = vunpack.c.l.b16 %v419
    %v3359 = vunpack.c.h.b16 %v419
    %v3360 = vunpack.c.l.b16 %v420
    %v3361 = vunpack.c.h.b16 %v420
    %v3362 = vunpack.c.l.b16 %v421
    %v3363 = vunpack.c.h.b16 %v421
    %v3364 = vunpack.c.l.b16 %v422
    %v3365 = vunpack.c.h.b16 %v422
    %v3366 = vunpack.c.l.b16 %v423
    %v3367 = vunpack.c.h.b16 %v423
    %v3368 = vunpack.c.l.b16 %v424
    %v3369 = vunpack.c.h.b16 %v424
    %v3370 = vunpack.c.l.b16 %v425
    %v3371 = vunpack.c.h.b16 %v425
    %v3372 = vunpack.c.l.b16 %v426
    %v3373 = vunpack.c.h.b16 %v426
    %v3374 = vunpack.c.l.b16 %v427
    %v3375 = vunpack.c.h.b16 %v427
    %v3376 = vunpack.c.l.b16 %v428
    %v3377 = vunpack.c.h.b16 %v428
    %v3378 = vunpack.c.l.b16 %v429
    %v3379 = vunpack.c.h.b16 %v429
    %v3380 = vunpack.c.l.b16 %v430
    %v3381 = vunpack.c.h.b16 %v430
    %v3382 = vunpack.c.l.b16 %v431
    %v3383 = vunpack.c.h.b16 %v431
    %v3384 = vunpack.c.l.b16 %v432
    %v3385 = vunpack.c.h.b16 %v432
    %v3386 = vunpack.c.l.b16 %v433
    %v3387 = vunpack.c.h.b16 %v433
    %v3388 = vunpack.c.l.b16 %v434
    %v3389 = vunpack.c.h.b16 %v434
    %v3390 = vunpack.c.l.b16 %v435
    %v3391 = vunpack.c.h.b16 %v435
    %v3392 = vunpack.c.l.b16 %v436
    %v3393 = vunpack.c.h.b16 %v436
    %v3394 = vunpack.c.l.b16 %v437
    %v3395 = vunpack.c.h.b16 %v437
    %v3396 = vunpack.c.l.b16 %v438
    %v3397 = vunpack.c.h.b16 %v438
    %v3398 = vunpack.c.l.b16 %v439
    %v3399 = vunpack.c.h.b16 %v439
    %v3400 = vunpack.c.l.b16 %v440
    %v3401 = vunpack.c.h.b16 %v440
    %v3402 = vunpack.c.l.b16 %v441
    %v3403 = vunpack.c.h.b16 %v441
    %v3404 = vunpack.c.l.b16 %v442
    %v3405 = vunpack.c.h.b16 %v442
    %v3406 = vunpack.c.l.b16 %v443
    %v3407 = vunpack.c.h.b16 %v443
    %v3408 = vunpack.c.l.b16 %v444
    %v3409 = vunpack.c.h.b16 %v444
    %v3410 = vunpack.c.l.b16 %v445
    %v3411 = vunpack.c.h.b16 %v445
    %v3412 = vunpack.c.l.b16 %v446
    %v3413 = vunpack.c.h.b16 %v446
    %v3414 = vunpack.c.l.b16 %v447
    %v3415 = vunpack.c.h.b16 %v447
    %v3416 = vunpack.c.l.b16 %v448
    %v3417 = vunpack.c.h.b16 %v448
    %v3418 = vunpack.c.l.b16 %v449
    %v3419 = vunpack.c.h.b16 %v449
    %v3420 = vunpack.c.l.b16 %v450
    %v3421 = vunpack.c.h.b16 %v450
    %v3422 = vunpack.c.l.b16 %v451
    %v3423 = vunpack.c.h.b16 %v451
    %v3424 = vunpack.c.l.b16 %v452
    %v3425 = vunpack.c.h.b16 %v452
    %v3426 = vunpack.c.l.b16 %v453
    %v3427 = vunpack.c.h.b16 %v453
    %v3428 = vunpack.c.l.b16 %v454
    %v3429 = vunpack.c.h.b16 %v454
    %v3430 = vunpack.c.l.b16 %v455
    %v3431 = vunpack.c.h.b16 %v455
    %v3432 = vunpack.c.l.b16 %v456
    %v3433 = vunpack.c.h.b16 %v456
    %v3434 = vunpack.c.l.b16 %v457
    %v3435 = vunpack.c.h.b16 %v457
    %v3436 = vunpack.c.l.b16 %v458
    %v3437 = vunpack.c.h.b16 %v458
    %v3438 = vunpack.c.l.b16 %v459
    %v3439 = vunpack.c.h.b16 %v459
    %v3440 = vunpack.c.l.b16 %v460
    %v3441 = vunpack.c.h.b16 %v460
    %v3442 = vunpack.c.l.b16 %v461
    %v3443 = vunpack.c.h.b16 %v461
    %v3444 = vunpack.c.l.b16 %v462
    %v3445 = vunpack.c.h.b16 %v462
    %v3446 = vunpack.c.l.b16 %v463
    %v3447 = vunpack.c.h.b16 %v463
    %v3448 = vunpack.c.l.b16 %v464
    %v3449 = vunpack.c.h.b16 %v464
    %v3450 = vunpack.c.l.b16 %v465
    %v3451 = vunpack.c.h.b16 %v465
    %v3452 = vunpack.c.l.b16 %v466
    %v3453 = vunpack.c.h.b16 %v466
    %v3454 = vunpack.c.l.b16 %v467
    %v3455 = vunpack.c.h.b16 %v467
    %v3456 = vunpack.c.l.b16 %v468
    %v3457 = vunpack.c.h.b16 %v468
    %v3458 = vunpack.c.l.b16 %v469
    %v3459 = vunpack.c.h.b16 %v469
    %v3460 = vunpack.c.l.b16 %v470
    %v3461 = vunpack.c.h.b16 %v470
    %v3462 = vunpack.c.l.b16 %v471
    %v3463 = vunpack.c.h.b16 %v471
    %v3464 = vunpack.c.l.b16 %v472
    %v3465 = vunpack.c.h.b16 %v472
    %v3466 = vunpack.c.l.b16 %v473
    %v3467 = vunpack.c.h.b16 %v473
    %v3468 = vunpack.c.l.b16 %v474
    %v3469 = vunpack.c.h.b16 %v474
    %v3470 = vunpack.c.l.b16 %v475
    %v3471 = vunpack.c.h.b16 %v475
    %v3472 = vunpack.c.l.b16 %v476
    %v3473 = vunpack.c.h.b16 %v476
    %v3474 = vunpack.c.l.b16 %v477
    %v3475 = vunpack.c.h.b16 %v477
    %v3476 = vunpack.c.l.b16 %v478
    %v3477 = vunpack.c.h.b16 %v478
    %v3478 = vunpack.c.l.b16 %v479
    %v3479 = vunpack.c.h.b16 %v479
    %v3480 = vunpack.c.l.b16 %v480
    %v3481 = vunpack.c.h.b16 %v480
    %v3482 = vunpack.c.l.b16 %v481
    %v3483 = vunpack.c.h.b16 %v481
    %v3484 = vunpack.c.l.b16 %v482
    %v3485 = vunpack.c.h.b16 %v482
    %v3486 = vunpack.c.l.b16 %v483
    %v3487 = vunpack.c.h.b16 %v483
    %v3488 = vunpack.c.l.b16 %v484
    %v3489 = vunpack.c.h.b16 %v484
    %v3490 = vunpack.c.l.b16 %v485
    %v3491 = vunpack.c.h.b16 %v485
    %v3492 = vunpack.c.l.b16 %v486
    %v3493 = vunpack.c.h.b16 %v486
    %v3494 = vunpack.c.l.b16 %v487
    %v3495 = vunpack.c.h.b16 %v487
    %v3496 = vunpack.c.l.b16 %v488
    %v3497 = vunpack.c.h.b16 %v488
    %v3498 = vunpack.c.l.b16 %v489
    %v3499 = vunpack.c.h.b16 %v489
    %v3500 = vunpack.c.l.b16 %v490
    %v3501 = vunpack.c.h.b16 %v490
    %v3502 = vunpack.c.l.b16 %v491
    %v3503 = vunpack.c.h.b16 %v491
    %v3504 = vunpack.c.l.b16 %v492
    %v3505 = vunpack.c.h.b16 %v492
    %v3506 = vunpack.c.l.b16 %v493
    %v3507 = vunpack.c.h.b16 %v493
    %v3508 = vunpack.c.l.b16 %v494
    %v3509 = vunpack.c.h.b16 %v494
    %v3510 = vunpack.c.l.b16 %v495
    %v3511 = vunpack.c.h.b16 %v495
    %v3512 = vunpack.c.l.b16 %v496
    %v3513 = vunpack.c.h.b16 %v496
    %v3514 = vunpack.c.l.b16 %v497
    %v3515 = vunpack.c.h.b16 %v497
    %v3516 = vunpack.c.l.b16 %v498
    %v3517 = vunpack.c.h.b16 %v498
    %v3518 = vunpack.c.l.b16 %v499
    %v3519 = vunpack.c.h.b16 %v499
    %v3520 = vunpack.c.l.b16 %v500
    %v3521 = vunpack.c.h.b16 %v500
    %v3522 = vunpack.c.l.b16 %v501
    %v3523 = vunpack.c.h.b16 %v501
    %v3524 = vunpack.c.l.b16 %v502
    %v3525 = vunpack.c.h.b16 %v502
    %v3526 = vunpack.c.l.b16 %v503
    %v3527 = vunpack.c.h.b16 %v503
    %v3528 = vunpack.c.l.b16 %v504
    %v3529 = vunpack.c.h.b16 %v504
    %v3530 = vunpack.c.l.b16 %v505
    %v3531 = vunpack.c.h.b16 %v505
    %v3532 = vunpack.c.l.b16 %v506
    %v3533 = vunpack.c.h.b16 %v506
    %v3534 = vunpack.c.l.b16 %v507
    %v3535 = vunpack.c.h.b16 %v507
    %v3536 = vunpack.c.l.b16 %v508
    %v3537 = vunpack.c.h.b16 %v508
    %v3538 = vunpack.c.l.b16 %v509
    %v3539 = vunpack.c.h.b16 %v509
    %v3540 = vunpack.c.l.b16 %v510
    %v3541 = vunpack.c.h.b16 %v510
    %v3542 = vunpack.c.l.b16 %v511
    %v3543 = vunpack.c.h.b16 %v511
    %v3544 = vunpack.c.l.b16 %v512
    %v3545 = vunpack.c.h.b16 %v512
    %v3546 = vunpack.c.l.b16 %v513
    %v3547 = vunpack.c.h.b16 %v513
    %v3548 = vunpack.c.l.b16 %v514
    %v3549 = vunpack.c.h.b16 %v514
    %v3550 = vunpack.c.l.b16 %v515
    %v3551 = vunpack.c.h.b16 %v515
    %v3552 = vunpack.c.l.b16 %v516
    %v3553 = vunpack.c.h.b16 %v516
    %v3554 = vunpack.c.l.b16 %v517
    %v3555 = vunpack.c.h.b16 %v517
    %v3556 = vunpack.c.l.b16 %v518
    %v3557 = vunpack.c.h.b16 %v518
    %v3558 = vunpack.c.l.b16 %v519
    %v3559 = vunpack.c.h.b16 %v519
    %v3560 = vunpack.c.l.b16 %v520
    %v3561 = vunpack.c.h.b16 %v520
    %v3562 = vunpack.c.l.b16 %v521
    %v3563 = vunpack.c.h.b16 %v521
    %v3564 = vunpack.c.l.b16 %v522
    %v3565 = vunpack.c.h.b16 %v522
    %v3566 = vunpack.c.l.b16 %v523
    %v3567 = vunpack.c.h.b16 %v523
    %v3568 = vunpack.c.l.b16 %v524
    %v3569 = vunpack.c.h.b16 %v524
    %v3570 = vunpack.c.l.b16 %v525
    %v3571 = vunpack.c.h.b16 %v525
    %v3572 = vunpack.c.l.b16 %v526
    %v3573 = vunpack.c.h.b16 %v526
    %v3574 = vunpack.c.l.b16 %v527
    %v3575 = vunpack.c.h.b16 %v527
    %v3576 = vunpack.c.l.b16 %v528
    %v3577 = vunpack.c.h.b16 %v528
    %v3578 = vunpack.c.l.b16 %v529
    %v3579 = vunpack.c.h.b16 %v529
    %v3580 = vunpack.c.l.b16 %v530
    %v3581 = vunpack.c.h.b16 %v530
    %v3582 = vunpack.c.l.b16 %v531
    %v3583 = vunpack.c.h.b16 %v531
    %v3584 = vunpack.c.l.b16 %v532
    %v3585 = vunpack.c.h.b16 %v532
    %v3586 = vunpack.c.l.b16 %v533
    %v3587 = vunpack.c.h.b16 %v533
    %v3588 = vunpack.c.l.b16 %v534
    %v3589 = vunpack.c.h.b16 %v534
    %v3590 = vunpack.c.l.b16 %v535
    %v3591 = vunpack.c.h.b16 %v535
    %v3592 = vunpack.c.l.b16 %v536
    %v3593 = vunpack.c.h.b16 %v536
    %v3594 = vunpack.c.l.b16 %v537
    %v3595 = vunpack.c.h.b16 %v537
    %v3596 = vpack.c.b16 %v3026, %v3020
    %v3597 = vpack.c.b16 %v3027, %v3021
    %v3598 = vpack.c.b16 %v3028, %v3022
    %v3599 = vpack.c.b16 %v3029, %v3023
    %v3600 = vpack.c.b16 %v3030, %v3024
    %v3601 = vpack.c.b16 %v3031, %v3025
    %v3602 = vpack.c.b16 %v3038, %v3032
    %v3603 = vpack.c.b16 %v3039, %v3033
    %v3604 = vpack.c.b16 %v3040, %v3034
    %v3605 = vpack.c.b16 %v3041, %v3035
    %v3606 = vpack.c.b16 %v3042, %v3036
    %v3607 = vpack.c.b16 %v3043, %v3037
    %v3608 = vpack.c.b16 %v3050, %v3044
    %v3609 = vpack.c.b16 %v3051, %v3045
    %v3610 = vpack.c.b16 %v3052, %v3046
    %v3611 = vpack.c.b16 %v3053, %v3047
    %v3612 = vpack.c.b16 %v3054, %v3048
    %v3613 = vpack.c.b16 %v3055, %v3049
    %v3614 = vpack.c.b16 %v3062, %v3056
    %v3615 = vpack.c.b16 %v3063, %v3057
    %v3616 = vpack.c.b16 %v3064, %v3058
    %v3617 = vpack.c.b16 %v3065, %v3059
    %v3618 = vpack.c.b16 %v3066, %v3060
    %v3619 = vpack.c.b16 %v3067, %v3061
    %v3620 = vpack.c.b16 %v3074, %v3068
    %v3621 = vpack.c.b16 %v3075, %v3069
    %v3622 = vpack.c.b16 %v3076, %v3070
    %v3623 = vpack.c.b16 %v3077, %v3071
    %v3624 = vpack.c.b16 %v3078, %v3072
    %v3625 = vpack.c.b16 %v3079, %v3073
    %v3626 = vpack.c.b16 %v3086, %v3080
    %v3627 = vpack.c.b16 %v3087, %v3081
    %v3628 = vpack.c.b16 %v3088, %v3082
    %v3629 = vpack.c.b16 %v3089, %v3083
    %v3630 = vpack.c.b16 %v3090, %v3084
    %v3631 = vpack.c.b16 %v3091, %v3085
    %v3632 = vpack.c.b16 %v3098, %v3092
    %v3633 = vpack.c.b16 %v3099, %v3093
    %v3634 = vpack.c.b16 %v3100, %v3094
    %v3635 = vpack.c.b16 %v3101, %v3095
    %v3636 = vpack.c.b16 %v3102, %v3096
    %v3637 = vpack.c.b16 %v3103, %v3097
    %v3638 = vpack.c.b16 %v3110, %v3104
    %v3639 = vpack.c.b16 %v3111, %v3105
    %v3640 = vpack.c.b16 %v3112, %v3106
    %v3641 = vpack.c.b16 %v3113, %v3107
    %v3642 = vpack.c.b16 %v3114, %v3108
    %v3643 = vpack.c.b16 %v3115, %v3109
    %v3644 = vpack.c.b16 %v3122, %v3116
    %v3645 = vpack.c.b16 %v3123, %v3117
    %v3646 = vpack.c.b16 %v3124, %v3118
    %v3647 = vpack.c.b16 %v3125, %v3119
    %v3648 = vpack.c.b16 %v3126, %v3120
    %v3649 = vpack.c.b16 %v3127, %v3121
    %v3650 = vpack.c.b16 %v3134, %v3128
    %v3651 = vpack.c.b16 %v3135, %v3129
    %v3652 = vpack.c.b16 %v3136, %v3130
    %v3653 = vpack.c.b16 %v3137, %v3131
    %v3654 = vpack.c.b16 %v3138, %v3132
    %v3655 = vpack.c.b16 %v3139, %v3133
    %v3656 = vpack.c.b16 %v3146, %v3140
    %v3657 = vpack.c.b16 %v3147, %v3141
    %v3658 = vpack.c.b16 %v3148, %v3142
    %v3659 = vpack.c.b16 %v3149, %v3143
    %v3660 = vpack.c.b16 %v3150, %v3144
    %v3661 = vpack.c.b16 %v3151, %v3145
    %v3662 = vpack.c.b16 %v3158, %v3152
    %v3663 = vpack.c.b16 %v3159, %v3153
    %v3664 = vpack.c.b16 %v3160, %v3154
    %v3665 = vpack.c.b16 %v3161, %v3155
    %v3666 = vpack.c.b16 %v3162, %v3156
    %v3667 = vpack.c.b16 %v3163, %v3157
    %v3668 = vpack.c.b16 %v3170, %v3164
    %v3669 = vpack.c.b16 %v3171, %v3165
    %v3670 = vpack.c.b16 %v3172, %v3166
    %v3671 = vpack.c.b16 %v3173, %v3167
    %v3672 = vpack.c.b16 %v3174, %v3168
    %v3673 = vpack.c.b16 %v3175, %v3169
    %v3674 = vpack.c.b16 %v3182, %v3176
    %v3675 = vpack.c.b16 %v3183, %v3177
    %v3676 = vpack.c.b16 %v3184, %v3178
    %v3677 = vpack.c.b16 %v3185, %v3179
    %v3678 = vpack.c.b16 %v3186, %v3180
    %v3679 = vpack.c.b16 %v3187, %v3181
    %v3680 = vpack.c.b16 %v3194, %v3188
    %v3681 = vpack.c.b16 %v3195, %v3189
    %v3682 = vpack.c.b16 %v3196, %v3190
    %v3683 = vpack.c.b16 %v3197, %v3191
    %v3684 = vpack.c.b16 %v3198, %v3192
    %v3685 = vpack.c.b16 %v3199, %v3193
    %v3686 = vpack.c.b16 %v3206, %v3200
    %v3687 = vpack.c.b16 %v3207, %v3201
    %v3688 = vpack.c.b16 %v3208, %v3202
    %v3689 = vpack.c.b16 %v3209, %v3203
    %v3690 = vpack.c.b16 %v3210, %v3204
    %v3691 = vpack.c.b16 %v3211, %v3205
    %v3692 = vpack.c.b16 %v3218, %v3212
    %v3693 = vpack.c.b16 %v3219, %v3213
    %v3694 = vpack.c.b16 %v3220, %v3214
    %v3695 = vpack.c.b16 %v3221, %v3215
    %v3696 = vpack.c.b16 %v3222, %v3216
    %v3697 = vpack.c.b16 %v3223, %v3217
    %v3698 = vpack.c.b16 %v3230, %v3224
    %v3699 = vpack.c.b16 %v3231, %v3225
    %v3700 = vpack.c.b16 %v3232, %v3226
    %v3701 = vpack.c.b16 %v3233, %v3227
    %v3702 = vpack.c.b16 %v3234, %v3228
    %v3703 = vpack.c.b16 %v3235, %v3229
    %v3704 = vpack.c.b16 %v3242, %v3236
    %v3705 = vpack.c.b16 %v3243, %v3237
    %v3706 = vpack.c.b16 %v3244, %v3238
    %v3707 = vpack.c.b16 %v3245, %v3239
    %v3708 = vpack.c.b16 %v3246, %v3240
    %v3709 = vpack.c.b16 %v3247, %v3241
    %v3710 = vpack.c.b16 %v3254, %v3248
    %v3711 = vpack.c.b16 %v3255, %v3249
    %v3712 = vpack.c.b16 %v3256, %v3250
    %v3713 = vpack.c.b16 %v3257, %v3251
    %v3714 = vpack.c.b16 %v3258, %v3252
    %v3715 = vpack.c.b16 %v3259, %v3253
    %v3716 = vpack.c.b16 %v3266, %v3260
    %v3717 = vpack.c.b16 %v3267, %v3261
    %v3718 = vpack.c.b16 %v3268, %v3262
    %v3719 = vpack.c.b16 %v3269, %v3263
    %v3720 = vpack.c.b16 %v3270, %v3264
    %v3721 = vpack.c.b16 %v3271, %v3265
    %v3722 = vpack.c.b16 %v3278, %v3272
    %v3723 = vpack.c.b16 %v3279, %v3273
    %v3724 = vpack.c.b16 %v3280, %v3274
    %v3725 = vpack.c.b16 %v3281, %v3275
    %v3726 = vpack.c.b16 %v3282, %v3276
    %v3727 = vpack.c.b16 %v3283, %v3277
    %v3728 = vpack.c.b16 %v3290, %v3284
    %v3729 = vpack.c.b16 %v3291, %v3285
    %v3730 = vpack.c.b16 %v3292, %v3286
    %v3731 = vpack.c.b16 %v3293, %v3287
    %v3732 = vpack.c.b16 %v3294, %v3288
    %v3733 = vpack.c.b16 %v3295, %v3289
    %v3734 = vpack.c.b16 %v3302, %v3296
    %v3735 = vpack.c.b16 %v3303, %v3297
    %v3736 = vpack.c.b16 %v3304, %v3298
    %v3737 = vpack.c.b16 %v3305, %v3299
    %v3738 = vpack.c.b16 %v3306, %v3300
    %v3739 = vpack.c.b16 %v3307, %v3301
    %v3740 = vpack.c.b16 %v3314, %v3308
    %v3741 = vpack.c.b16 %v3315, %v3309
    %v3742 = vpack.c.b16 %v3316, %v3310
    %v3743 = vpack.c.b16 %v3317, %v3311
    %v3744 = vpack.c.b16 %v3318, %v3312
    %v3745 = vpack.c.b16 %v3319, %v3313
    %v3746 = vpack.c.b16 %v3326, %v3320
    %v3747 = vpack.c.b16 %v3327, %v3321
    %v3748 = vpack.c.b16 %v3328, %v3322
    %v3749 = vpack.c.b16 %v3329, %v3323
    %v3750 = vpack.c.b16 %v3330, %v3324
    %v3751 = vpack.c.b16 %v3331, %v3325
    %v3752 = vpack.c.b16 %v3338, %v3332
    %v3753 = vpack.c.b16 %v3339, %v3333
    %v3754 = vpack.c.b16 %v3340, %v3334
    %v3755 = vpack.c.b16 %v3341, %v3335
    %v3756 = vpack.c.b16 %v3342, %v3336
    %v3757 = vpack.c.b16 %v3343, %v3337
    %v3758 = vpack.c.b16 %v3350, %v3344
    %v3759 = vpack.c.b16 %v3351, %v3345
    %v3760 = vpack.c.b16 %v3352, %v3346
    %v3761 = vpack.c.b16 %v3353, %v3347
    %v3762 = vpack.c.b16 %v3354, %v3348
    %v3763 = vpack.c.b16 %v3355, %v3349
    %v3764 = vpack.c.b16 %v3362, %v3356
    %v3765 = vpack.c.b16 %v3363, %v3357
    %v3766 = vpack.c.b16 %v3364, %v3358
    %v3767 = vpack.c.b16 %v3365, %v3359
    %v3768 = vpack.c.b16 %v3366, %v3360
    %v3769 = vpack.c.b16 %v3367, %v3361
    %v3770 = vpack.c.b16 %v3374, %v3368
    %v3771 = vpack.c.b16 %v3375, %v3369
    %v3772 = vpack.c.b16 %v3376, %v3370
    %v3773 = vpack.c.b16 %v3377, %v3371
    %v3774 = vpack.c.b16 %v3378, %v3372
    %v3775 = vpack.c.b16 %v3379, %v3373
    %v3776 = vpack.c.b16 %v3386, %v3380
    %v3777 = vpack.c.b16 %v3387, %v3381
    %v3778 = vpack.c.b16 %v3388, %v3382
    %v3779 = vpack.c.b16 %v3389, %v3383
    %v3780 = vpack.c.b16 %v3390, %v3384
    %v3781 = vpack.c.b16 %v3391, %v3385
    %v3782 = vpack.c.b16 %v3398, %v3392
    %v3783 = vpack.c.b16 %v3399, %v3393
    %v3784 = vpack.c.b16 %v3400, %v3394
    %v3785 = vpack.c.b16 %v3401, %v3395
    %v3786 = vpack.c.b16 %v3402, %v3396
    %v3787 = vpack.c.b16 %v3403, %v3397
    %v3788 = vpack.c.b16 %v3410, %v3404
    %v3789 = vpack.c.b16 %v3411, %v3405
    %v3790 = vpack.c.b16 %v3412, %v3406
    %v3791 = vpack.c.b16 %v3413, %v3407
    %v3792 = vpack.c.b16 %v3414, %v3408
    %v3793 = vpack.c.b16 %v3415, %v3409
    %v3794 = vpack.c.b16 %v3422, %v3416
    %v3795 = vpack.c.b16 %v3423, %v3417
    %v3796 = vpack.c.b16 %v3424, %v3418
    %v3797 = vpack.c.b16 %v3425, %v3419
    %v3798 = vpack.c.b16 %v3426, %v3420
    %v3799 = vpack.c.b16 %v3427, %v3421
    %v3800 = vpack.c.b16 %v3434, %v3428
    %v3801 = vpack.c.b16 %v3435, %v3429
    %v3802 = vpack.c.b16 %v3436, %v3430
    %v3803 = vpack.c.b16 %v3437, %v3431
    %v3804 = vpack.c.b16 %v3438, %v3432
    %v3805 = vpack.c.b16 %v3439, %v3433
    %v3806 = vpack.c.b16 %v3446, %v3440
    %v3807 = vpack.c.b16 %v3447, %v3441
    %v3808 = vpack.c.b16 %v3448, %v3442
    %v3809 = vpack.c.b16 %v3449, %v3443
    %v3810 = vpack.c.b16 %v3450, %v3444
    %v3811 = vpack.c.b16 %v3451, %v3445
    %v3812 = vpack.c.b16 %v3458, %v3452
    %v3813 = vpack.c.b16 %v3459, %v3453
    %v3814 = vpack.c.b16 %v3460, %v3454
    %v3815 = vpack.c.b16 %v3461, %v3455
    %v3816 = vpack.c.b16 %v3462, %v3456
    %v3817 = vpack.c.b16 %v3463, %v3457
    %v3818 = vpack.c.b16 %v3470, %v3464
    %v3819 = vpack.c.b16 %v3471, %v3465
    %v3820 = vpack.c.b16 %v3472, %v3466
    %v3821 = vpack.c.b16 %v3473, %v3467
    %v3822 = vpack.c.b16 %v3474, %v3468
    %v3823 = vpack.c.b16 %v3475, %v3469
    %v3824 = vpack.c.b16 %v3482, %v3476
    %v3825 = vpack.c.b16 %v3483, %v3477
    %v3826 = vpack.c.b16 %v3484, %v3478
    %v3827 = vpack.c.b16 %v3485, %v3479
    %v3828 = vpack.c.b16 %v3486, %v3480
    %v3829 = vpack.c.b16 %v3487, %v3481
    %v3830 = vpack.c.b16 %v3494, %v3488
    %v3831 = vpack.c.b16 %v3495, %v3489
    %v3832 = vpack.c.b16 %v3496, %v3490
    %v3833 = vpack.c.b16 %v3497, %v3491
    %v3834 = vpack.c.b16 %v3498, %v3492
    %v3835 = vpack.c.b16 %v3499, %v3493
    %v3836 = vpack.c.b16 %v3506, %v3500
    %v3837 = vpack.c.b16 %v3507, %v3501
    %v3838 = vpack.c.b16 %v3508, %v3502
    %v3839 = vpack.c.b16 %v3509, %v3503
    %v3840 = vpack.c.b16 %v3510, %v3504
    %v3841 = vpack.c.b16 %v3511, %v3505
    %v3842 = vpack.c.b16 %v3518, %v3512
    %v3843 = vpack.c.b16 %v3519, %v3513
    %v3844 = vpack.c.b16 %v3520, %v3514
    %v3845 = vpack.c.b16 %v3521, %v3515
    %v3846 = vpack.c.b16 %v3522, %v3516
    %v3847 = vpack.c.b16 %v3523, %v3517
    %v3848 = vpack.c.b16 %v3530, %v3524
    %v3849 = vpack.c.b16 %v3531, %v3525
    %v3850 = vpack.c.b16 %v3532, %v3526
    %v3851 = vpack.c.b16 %v3533, %v3527
    %v3852 = vpack.c.b16 %v3534, %v3528
    %v3853 = vpack.c.b16 %v3535, %v3529
    %v3854 = vpack.c.b16 %v3542, %v3536
    %v3855 = vpack.c.b16 %v3543, %v3537
    %v3856 = vpack.c.b16 %v3544, %v3538
    %v3857 = vpack.c.b16 %v3545, %v3539
    %v3858 = vpack.c.b16 %v3546, %v3540
    %v3859 = vpack.c.b16 %v3547, %v3541
    %v3860 = vpack.c.b16 %v3554, %v3548
    %v3861 = vpack.c.b16 %v3555, %v3549
    %v3862 = vpack.c.b16 %v3556, %v3550
    %v3863 = vpack.c.b16 %v3557, %v3551
    %v3864 = vpack.c.b16 %v3558, %v3552
    %v3865 = vpack.c.b16 %v3559, %v3553
    %v3866 = vpack.c.b16 %v3566, %v3560
    %v3867 = vpack.c.b16 %v3567, %v3561
    %v3868 = vpack.c.b16 %v3568, %v3562
    %v3869 = vpack.c.b16 %v3569, %v3563
    %v3870 = vpack.c.b16 %v3570, %v3564
    %v3871 = vpack.c.b16 %v3571, %v3565
    %v3872 = vpack.c.b16 %v3578, %v3572
    %v3873 = vpack.c.b16 %v3579, %v3573
    %v3874 = vpack.c.b16 %v3580, %v3574
    %v3875 = vpack.c.b16 %v3581, %v3575
    %v3876 = vpack.c.b16 %v3582, %v3576
    %v3877 = vpack.c.b16 %v3583, %v3577
    %v3878 = vpack.c.b16 %v3590, %v3584
    %v3879 = vpack.c.b16 %v3591, %v3585
    %v3880 = vpack.c.b16 %v3592, %v3586
    %v3881 = vpack.c.b16 %v3593, %v3587
    %v3882 = vpack.c.b16 %v3594, %v3588
    %v3883 = vpack.c.b16 %v3595, %v3589
    %4172 = vmatprep.subr.bf16.mxu0 %v3597
    %4173 = vmatpush1.bf16.msra.mxu0 %v3596
    %4174 = vmatprep.subr.bf16.mxu0 %v3603
    %4175 = vmatpush1.bf16.msra.mxu0 %v3602
    %4176 = vmatprep.subr.bf16.mxu0 %v3609
    %4177 = vmatpush1.bf16.msra.mxu0 %v3608
    %4178 = vmatprep.subr.bf16.mxu0 %v3615
    %4179 = vmatpush1.bf16.msra.mxu0 %v3614
    %4180 = vmatprep.subr.bf16.mxu0 %v3621
    %4181 = vmatpush1.bf16.msra.mxu0 %v3620
    %4182 = vmatprep.subr.bf16.mxu0 %v3627
    %4183 = vmatpush1.bf16.msra.mxu0 %v3626
    %4184 = vmatprep.subr.bf16.mxu0 %v3633
    %4185 = vmatpush1.bf16.msra.mxu0 %v3632
    %4186 = vmatprep.subr.bf16.mxu0 %v3639
    %4187 = vmatpush1.bf16.msra.mxu0 %v3638
    %4188 = vmatprep.subr.bf16.mxu0 %v3645
    %4189 = vmatpush1.bf16.msra.mxu0 %v3644
    %4190 = vmatprep.subr.bf16.mxu0 %v3651
    %4191 = vmatpush1.bf16.msra.mxu0 %v3650
    %4192 = vmatprep.subr.bf16.mxu0 %v3657
    %4193 = vmatpush1.bf16.msra.mxu0 %v3656
    %4194 = vmatprep.subr.bf16.mxu0 %v3663
    %4195 = vmatpush1.bf16.msra.mxu0 %v3662
    %4196 = vmatprep.subr.bf16.mxu0 %v3669
    %4197 = vmatpush1.bf16.msra.mxu0 %v3668
    %4198 = vmatprep.subr.bf16.mxu0 %v3675
    %4199 = vmatpush1.bf16.msra.mxu0 %v3674
    %4200 = vmatprep.subr.bf16.mxu0 %v3681
    %4201 = vmatpush1.bf16.msra.mxu0 %v3680
    %4202 = vmatprep.subr.bf16.mxu0 %v3687
    %4203 = vmatpush1.bf16.msra.mxu0 %v3686
    %4204 = vmatprep.mubr.bf16.mxu0 %v2721
    %4205 = vmatmul.mubr.bf16.gmra.mrb[0].mxu0 %v2720
    %v4206 = vpop.f32.mrb[0].mxu0
    %v4207 = vadd.f32 %v2432, %v4206
    %v4208 = vpop.f32.mrb[0].mxu0
    %v4209 = vadd.f32 %v2434, %v4208
    %v4210 = vpop.f32.mrb[0].mxu0
    %v4211 = vpop.f32.mrb[0].mxu0
    %4212 = vdwg.mxu0
    %4213 = vmatprep.subr.bf16.mxu0 %v3693
    %4214 = vmatpush1.bf16.msra.mxu0 %v3692
    %4215 = vmatprep.subr.bf16.mxu0 %v3699
    %4216 = vmatpush1.bf16.msra.mxu0 %v3698
    %4217 = vmatprep.subr.bf16.mxu0 %v3705
    %4218 = vmatpush1.bf16.msra.mxu0 %v3704
    %4219 = vmatprep.subr.bf16.mxu0 %v3711
    %4220 = vmatpush1.bf16.msra.mxu0 %v3710
    %4221 = vmatprep.subr.bf16.mxu0 %v3717
    %4222 = vmatpush1.bf16.msra.mxu0 %v3716
    %4223 = vmatprep.subr.bf16.mxu0 %v3723
    %4224 = vmatpush1.bf16.msra.mxu0 %v3722
    %4225 = vmatprep.subr.bf16.mxu0 %v3729
    %4226 = vmatpush1.bf16.msra.mxu0 %v3728
    %4227 = vmatprep.subr.bf16.mxu0 %v3735
    %4228 = vmatpush1.bf16.msra.mxu0 %v3734
    %4229 = vmatprep.subr.bf16.mxu0 %v3741
    %4230 = vmatpush1.bf16.msra.mxu0 %v3740
    %4231 = vmatprep.subr.bf16.mxu0 %v3747
    %4232 = vmatpush1.bf16.msra.mxu0 %v3746
    %4233 = vmatprep.subr.bf16.mxu0 %v3753
    %4234 = vmatpush1.bf16.msra.mxu0 %v3752
    %4235 = vmatprep.subr.bf16.mxu0 %v3759
    %4236 = vmatpush1.bf16.msra.mxu0 %v3758
    %4237 = vmatprep.subr.bf16.mxu0 %v3765
    %4238 = vmatpush1.bf16.msra.mxu0 %v3764
    %4239 = vmatprep.subr.bf16.mxu0 %v3771
    %4240 = vmatpush1.bf16.msra.mxu0 %v3770
    %4241 = vmatprep.subr.bf16.mxu0 %v3777
    %4242 = vmatpush1.bf16.msra.mxu0 %v3776
    %4243 = vmatprep.subr.bf16.mxu0 %v3783
    %4244 = vmatpush1.bf16.msra.mxu0 %v3782
    %4245 = vmatprep.mubr.bf16.mxu0 %v2723
    %4246 = vmatmul.mubr.bf16.gmra.mrb[0].mxu0 %v2722
    %v4247 = vpop.f32.mrb[0].mxu0
    %v4248 = vadd.f32 %v4207, %v4247
    %v4249 = vpop.f32.mrb[0].mxu0
    %v4250 = vadd.f32 %v4209, %v4249
    %v4251 = vpop.f32.mrb[0].mxu0
    %v4252 = vpop.f32.mrb[0].mxu0
    %4253 = vdwg.mxu0
    %4254 = vmatprep.subr.bf16.mxu0 %v3789
    %4255 = vmatpush1.bf16.msra.mxu0 %v3788
    %4256 = vmatprep.subr.bf16.mxu0 %v3795
    %4257 = vmatpush1.bf16.msra.mxu0 %v3794
    %4258 = vmatprep.subr.bf16.mxu0 %v3801
    %4259 = vmatpush1.bf16.msra.mxu0 %v3800
    %4260 = vmatprep.subr.bf16.mxu0 %v3807
    %4261 = vmatpush1.bf16.msra.mxu0 %v3806
    %4262 = vmatprep.subr.bf16.mxu0 %v3813
    %4263 = vmatpush1.bf16.msra.mxu0 %v3812
    %4264 = vmatprep.subr.bf16.mxu0 %v3819
    %4265 = vmatpush1.bf16.msra.mxu0 %v3818
    %4266 = vmatprep.subr.bf16.mxu0 %v3825
    %4267 = vmatpush1.bf16.msra.mxu0 %v3824
    %4268 = vmatprep.subr.bf16.mxu0 %v3831
    %4269 = vmatpush1.bf16.msra.mxu0 %v3830
    %4270 = vmatprep.subr.bf16.mxu0 %v3837
    %4271 = vmatpush1.bf16.msra.mxu0 %v3836
    %4272 = vmatprep.subr.bf16.mxu0 %v3843
    %4273 = vmatpush1.bf16.msra.mxu0 %v3842
    %4274 = vmatprep.subr.bf16.mxu0 %v3849
    %4275 = vmatpush1.bf16.msra.mxu0 %v3848
    %4276 = vmatprep.subr.bf16.mxu0 %v3855
    %4277 = vmatpush1.bf16.msra.mxu0 %v3854
    %4278 = vmatprep.subr.bf16.mxu0 %v3861
    %4279 = vmatpush1.bf16.msra.mxu0 %v3860
    %4280 = vmatprep.subr.bf16.mxu0 %v3867
    %4281 = vmatpush1.bf16.msra.mxu0 %v3866
    %4282 = vmatprep.subr.bf16.mxu0 %v3873
    %4283 = vmatpush1.bf16.msra.mxu0 %v3872
    %4284 = vmatprep.subr.bf16.mxu0 %v3879
    %4285 = vmatpush1.bf16.msra.mxu0 %v3878
    %4286 = vmatprep.mubr.bf16.mxu0 %v2725
    %4287 = vmatmul.mubr.bf16.gmra.mrb[0].mxu0 %v2724
    %v4288 = vpop.f32.mrb[0].mxu0
    %v4289 = vadd.f32 %v4248, %v4288
    %v4290 = vpop.f32.mrb[0].mxu0
    %v4291 = vadd.f32 %v4250, %v4290
    %v4292 = vpop.f32.mrb[0].mxu0
    %v4293 = vpop.f32.mrb[0].mxu0
    %4294 = vdwg.mxu0
    %4295 = vmatprep.subr.bf16.mxu0 %v3599
    %4296 = vmatpush1.bf16.msra.mxu0 %v3598
    %4297 = vmatprep.subr.bf16.mxu0 %v3605
    %4298 = vmatpush1.bf16.msra.mxu0 %v3604
    %4299 = vmatprep.subr.bf16.mxu0 %v3611
    %4300 = vmatpush1.bf16.msra.mxu0 %v3610
    %4301 = vmatprep.subr.bf16.mxu0 %v3617
    %4302 = vmatpush1.bf16.msra.mxu0 %v3616
    %4303 = vmatprep.subr.bf16.mxu0 %v3623
    %4304 = vmatpush1.bf16.msra.mxu0 %v3622
    %4305 = vmatprep.subr.bf16.mxu0 %v3629
    %4306 = vmatpush1.bf16.msra.mxu0 %v3628
    %4307 = vmatprep.subr.bf16.mxu0 %v3635
    %4308 = vmatpush1.bf16.msra.mxu0 %v3634
    %4309 = vmatprep.subr.bf16.mxu0 %v3641
    %4310 = vmatpush1.bf16.msra.mxu0 %v3640
    %4311 = vmatprep.subr.bf16.mxu0 %v3647
    %4312 = vmatpush1.bf16.msra.mxu0 %v3646
    %4313 = vmatprep.subr.bf16.mxu0 %v3653
    %4314 = vmatpush1.bf16.msra.mxu0 %v3652
    %4315 = vmatprep.subr.bf16.mxu0 %v3659
    %4316 = vmatpush1.bf16.msra.mxu0 %v3658
    %4317 = vmatprep.subr.bf16.mxu0 %v3665
    %4318 = vmatpush1.bf16.msra.mxu0 %v3664
    %4319 = vmatprep.subr.bf16.mxu0 %v3671
    %4320 = vmatpush1.bf16.msra.mxu0 %v3670
    %4321 = vmatprep.subr.bf16.mxu0 %v3677
    %4322 = vmatpush1.bf16.msra.mxu0 %v3676
    %4323 = vmatprep.subr.bf16.mxu0 %v3683
    %4324 = vmatpush1.bf16.msra.mxu0 %v3682
    %4325 = vmatprep.subr.bf16.mxu0 %v3689
    %4326 = vmatpush1.bf16.msra.mxu0 %v3688
    %4327 = vmatprep.mubr.bf16.mxu0 %v2721
    %4328 = vmatmul.mubr.bf16.gmra.mrb[0].mxu0 %v2720
    %v4329 = vpop.f32.mrb[0].mxu0
    %v4330 = vadd.f32 %v2555, %v4329
    %v4331 = vpop.f32.mrb[0].mxu0
    %v4332 = vadd.f32 %v2557, %v4331
    %v4333 = vpop.f32.mrb[0].mxu0
    %v4334 = vpop.f32.mrb[0].mxu0
    %4335 = vdwg.mxu0
    %4336 = vmatprep.subr.bf16.mxu0 %v3695
    %4337 = vmatpush1.bf16.msra.mxu0 %v3694
    %4338 = vmatprep.subr.bf16.mxu0 %v3701
    %4339 = vmatpush1.bf16.msra.mxu0 %v3700
    %4340 = vmatprep.subr.bf16.mxu0 %v3707
    %4341 = vmatpush1.bf16.msra.mxu0 %v3706
    %4342 = vmatprep.subr.bf16.mxu0 %v3713
    %4343 = vmatpush1.bf16.msra.mxu0 %v3712
    %4344 = vmatprep.subr.bf16.mxu0 %v3719
    %4345 = vmatpush1.bf16.msra.mxu0 %v3718
    %4346 = vmatprep.subr.bf16.mxu0 %v3725
    %4347 = vmatpush1.bf16.msra.mxu0 %v3724
    %4348 = vmatprep.subr.bf16.mxu0 %v3731
    %4349 = vmatpush1.bf16.msra.mxu0 %v3730
    %4350 = vmatprep.subr.bf16.mxu0 %v3737
    %4351 = vmatpush1.bf16.msra.mxu0 %v3736
    %4352 = vmatprep.subr.bf16.mxu0 %v3743
    %4353 = vmatpush1.bf16.msra.mxu0 %v3742
    %4354 = vmatprep.subr.bf16.mxu0 %v3749
    %4355 = vmatpush1.bf16.msra.mxu0 %v3748
    %4356 = vmatprep.subr.bf16.mxu0 %v3755
    %4357 = vmatpush1.bf16.msra.mxu0 %v3754
    %4358 = vmatprep.subr.bf16.mxu0 %v3761
    %4359 = vmatpush1.bf16.msra.mxu0 %v3760
    %4360 = vmatprep.subr.bf16.mxu0 %v3767
    %4361 = vmatpush1.bf16.msra.mxu0 %v3766
    %4362 = vmatprep.subr.bf16.mxu0 %v3773
    %4363 = vmatpush1.bf16.msra.mxu0 %v3772
    %4364 = vmatprep.subr.bf16.mxu0 %v3779
    %4365 = vmatpush1.bf16.msra.mxu0 %v3778
    %4366 = vmatprep.subr.bf16.mxu0 %v3785
    %4367 = vmatpush1.bf16.msra.mxu0 %v3784
    %4368 = vmatprep.mubr.bf16.mxu0 %v2723
    %4369 = vmatmul.mubr.bf16.gmra.mrb[0].mxu0 %v2722
    %v4370 = vpop.f32.mrb[0].mxu0
    %v4371 = vadd.f32 %v4330, %v4370
    %v4372 = vpop.f32.mrb[0].mxu0
    %v4373 = vadd.f32 %v4332, %v4372
    %v4374 = vpop.f32.mrb[0].mxu0
    %v4375 = vpop.f32.mrb[0].mxu0
    %4376 = vdwg.mxu0
    %4377 = vmatprep.subr.bf16.mxu0 %v3791
    %4378 = vmatpush1.bf16.msra.mxu0 %v3790
    %4379 = vmatprep.subr.bf16.mxu0 %v3797
    %4380 = vmatpush1.bf16.msra.mxu0 %v3796
    %4381 = vmatprep.subr.bf16.mxu0 %v3803
    %4382 = vmatpush1.bf16.msra.mxu0 %v3802
    %4383 = vmatprep.subr.bf16.mxu0 %v3809
    %4384 = vmatpush1.bf16.msra.mxu0 %v3808
    %4385 = vmatprep.subr.bf16.mxu0 %v3815
    %4386 = vmatpush1.bf16.msra.mxu0 %v3814
    %4387 = vmatprep.subr.bf16.mxu0 %v3821
    %4388 = vmatpush1.bf16.msra.mxu0 %v3820
    %4389 = vmatprep.subr.bf16.mxu0 %v3827
    %4390 = vmatpush1.bf16.msra.mxu0 %v3826
    %4391 = vmatprep.subr.bf16.mxu0 %v3833
    %4392 = vmatpush1.bf16.msra.mxu0 %v3832
    %4393 = vmatprep.subr.bf16.mxu0 %v3839
    %4394 = vmatpush1.bf16.msra.mxu0 %v3838
    %4395 = vmatprep.subr.bf16.mxu0 %v3845
    %4396 = vmatpush1.bf16.msra.mxu0 %v3844
    %4397 = vmatprep.subr.bf16.mxu0 %v3851
    %4398 = vmatpush1.bf16.msra.mxu0 %v3850
    %4399 = vmatprep.subr.bf16.mxu0 %v3857
    %4400 = vmatpush1.bf16.msra.mxu0 %v3856
    %4401 = vmatprep.subr.bf16.mxu0 %v3863
    %4402 = vmatpush1.bf16.msra.mxu0 %v3862
    %4403 = vmatprep.subr.bf16.mxu0 %v3869
    %4404 = vmatpush1.bf16.msra.mxu0 %v3868
    %4405 = vmatprep.subr.bf16.mxu0 %v3875
    %4406 = vmatpush1.bf16.msra.mxu0 %v3874
    %4407 = vmatprep.subr.bf16.mxu0 %v3881
    %4408 = vmatpush1.bf16.msra.mxu0 %v3880
    %4409 = vmatprep.mubr.bf16.mxu0 %v2725
    %4410 = vmatmul.mubr.bf16.gmra.mrb[0].mxu0 %v2724
    %v4411 = vpop.f32.mrb[0].mxu0
    %v4412 = vadd.f32 %v4371, %v4411
    %v4413 = vpop.f32.mrb[0].mxu0
    %v4414 = vadd.f32 %v4373, %v4413
    %v4415 = vpop.f32.mrb[0].mxu0
    %v4416 = vpop.f32.mrb[0].mxu0
    %4417 = vdwg.mxu0
    %4418 = vmatprep.subr.bf16.mxu0 %v3601
    %4419 = vmatpush1.bf16.msra.mxu0 %v3600
    %4420 = vmatprep.subr.bf16.mxu0 %v3607
    %4421 = vmatpush1.bf16.msra.mxu0 %v3606
    %4422 = vmatprep.subr.bf16.mxu0 %v3613
    %4423 = vmatpush1.bf16.msra.mxu0 %v3612
    %4424 = vmatprep.subr.bf16.mxu0 %v3619
    %4425 = vmatpush1.bf16.msra.mxu0 %v3618
    %4426 = vmatprep.subr.bf16.mxu0 %v3625
    %4427 = vmatpush1.bf16.msra.mxu0 %v3624
    %4428 = vmatprep.subr.bf16.mxu0 %v3631
    %4429 = vmatpush1.bf16.msra.mxu0 %v3630
    %4430 = vmatprep.subr.bf16.mxu0 %v3637
    %4431 = vmatpush1.bf16.msra.mxu0 %v3636
    %4432 = vmatprep.subr.bf16.mxu0 %v3643
    %4433 = vmatpush1.bf16.msra.mxu0 %v3642
    %4434 = vmatprep.subr.bf16.mxu0 %v3649
    %4435 = vmatpush1.bf16.msra.mxu0 %v3648
    %4436 = vmatprep.subr.bf16.mxu0 %v3655
    %4437 = vmatpush1.bf16.msra.mxu0 %v3654
    %4438 = vmatprep.subr.bf16.mxu0 %v3661
    %4439 = vmatpush1.bf16.msra.mxu0 %v3660
    %4440 = vmatprep.subr.bf16.mxu0 %v3667
    %4441 = vmatpush1.bf16.msra.mxu0 %v3666
    %4442 = vmatprep.subr.bf16.mxu0 %v3673
    %4443 = vmatpush1.bf16.msra.mxu0 %v3672
    %4444 = vmatprep.subr.bf16.mxu0 %v3679
    %4445 = vmatpush1.bf16.msra.mxu0 %v3678
    %4446 = vmatprep.subr.bf16.mxu0 %v3685
    %4447 = vmatpush1.bf16.msra.mxu0 %v3684
    %4448 = vmatprep.subr.bf16.mxu0 %v3691
    %4449 = vmatpush1.bf16.msra.mxu0 %v3690
    %4450 = vmatprep.mubr.bf16.mxu0 %v2721
    %4451 = vmatmul.mubr.bf16.gmra.mrb[0].mxu0 %v2720
    %v4452 = vpop.f32.mrb[0].mxu0
    %v4453 = vadd.f32 %v2678, %v4452
    %v4454 = vpop.f32.mrb[0].mxu0
    %v4455 = vadd.f32 %v2680, %v4454
    %v4456 = vpop.f32.mrb[0].mxu0
    %v4457 = vpop.f32.mrb[0].mxu0
    %4458 = vdwg.mxu0
    %4459 = vmatprep.subr.bf16.mxu0 %v3697
    %4460 = vmatpush1.bf16.msra.mxu0 %v3696
    %4461 = vmatprep.subr.bf16.mxu0 %v3703
    %4462 = vmatpush1.bf16.msra.mxu0 %v3702
    %4463 = vmatprep.subr.bf16.mxu0 %v3709
    %4464 = vmatpush1.bf16.msra.mxu0 %v3708
    %4465 = vmatprep.subr.bf16.mxu0 %v3715
    %4466 = vmatpush1.bf16.msra.mxu0 %v3714
    %4467 = vmatprep.subr.bf16.mxu0 %v3721
    %4468 = vmatpush1.bf16.msra.mxu0 %v3720
    %4469 = vmatprep.subr.bf16.mxu0 %v3727
    %4470 = vmatpush1.bf16.msra.mxu0 %v3726
    %4471 = vmatprep.subr.bf16.mxu0 %v3733
    %4472 = vmatpush1.bf16.msra.mxu0 %v3732
    %4473 = vmatprep.subr.bf16.mxu0 %v3739
    %4474 = vmatpush1.bf16.msra.mxu0 %v3738
    %4475 = vmatprep.subr.bf16.mxu0 %v3745
    %4476 = vmatpush1.bf16.msra.mxu0 %v3744
    %4477 = vmatprep.subr.bf16.mxu0 %v3751
    %4478 = vmatpush1.bf16.msra.mxu0 %v3750
    %4479 = vmatprep.subr.bf16.mxu0 %v3757
    %4480 = vmatpush1.bf16.msra.mxu0 %v3756
    %4481 = vmatprep.subr.bf16.mxu0 %v3763
    %4482 = vmatpush1.bf16.msra.mxu0 %v3762
    %4483 = vmatprep.subr.bf16.mxu0 %v3769
    %4484 = vmatpush1.bf16.msra.mxu0 %v3768
    %4485 = vmatprep.subr.bf16.mxu0 %v3775
    %4486 = vmatpush1.bf16.msra.mxu0 %v3774
    %4487 = vmatprep.subr.bf16.mxu0 %v3781
    %4488 = vmatpush1.bf16.msra.mxu0 %v3780
    %4489 = vmatprep.subr.bf16.mxu0 %v3787
    %4490 = vmatpush1.bf16.msra.mxu0 %v3786
    %4491 = vmatprep.mubr.bf16.mxu0 %v2723
    %4492 = vmatmul.mubr.bf16.gmra.mrb[0].mxu0 %v2722
    %v4493 = vpop.f32.mrb[0].mxu0
    %v4494 = vadd.f32 %v4453, %v4493
    %v4495 = vpop.f32.mrb[0].mxu0
    %v4496 = vadd.f32 %v4455, %v4495
    %v4497 = vpop.f32.mrb[0].mxu0
    %v4498 = vpop.f32.mrb[0].mxu0
    %4499 = vdwg.mxu0
    %4500 = vmatprep.subr.bf16.mxu0 %v3793
    %4501 = vmatpush1.bf16.msra.mxu0 %v3792
    %4502 = vmatprep.subr.bf16.mxu0 %v3799
    %4503 = vmatpush1.bf16.msra.mxu0 %v3798
    %4504 = vmatprep.subr.bf16.mxu0 %v3805
    %4505 = vmatpush1.bf16.msra.mxu0 %v3804
    %4506 = vmatprep.subr.bf16.mxu0 %v3811
    %4507 = vmatpush1.bf16.msra.mxu0 %v3810
    %4508 = vmatprep.subr.bf16.mxu0 %v3817
    %4509 = vmatpush1.bf16.msra.mxu0 %v3816
    %4510 = vmatprep.subr.bf16.mxu0 %v3823
    %4511 = vmatpush1.bf16.msra.mxu0 %v3822
    %4512 = vmatprep.subr.bf16.mxu0 %v3829
    %4513 = vmatpush1.bf16.msra.mxu0 %v3828
    %4514 = vmatprep.subr.bf16.mxu0 %v3835
    %4515 = vmatpush1.bf16.msra.mxu0 %v3834
    %4516 = vmatprep.subr.bf16.mxu0 %v3841
    %4517 = vmatpush1.bf16.msra.mxu0 %v3840
    %4518 = vmatprep.subr.bf16.mxu0 %v3847
    %4519 = vmatpush1.bf16.msra.mxu0 %v3846
    %4520 = vmatprep.subr.bf16.mxu0 %v3853
    %4521 = vmatpush1.bf16.msra.mxu0 %v3852
    %4522 = vmatprep.subr.bf16.mxu0 %v3859
    %4523 = vmatpush1.bf16.msra.mxu0 %v3858
    %4524 = vmatprep.subr.bf16.mxu0 %v3865
    %4525 = vmatpush1.bf16.msra.mxu0 %v3864
    %4526 = vmatprep.subr.bf16.mxu0 %v3871
    %4527 = vmatpush1.bf16.msra.mxu0 %v3870
    %4528 = vmatprep.subr.bf16.mxu0 %v3877
    %4529 = vmatpush1.bf16.msra.mxu0 %v3876
    %4530 = vmatprep.subr.bf16.mxu0 %v3883
    %4531 = vmatpush1.bf16.msra.mxu0 %v3882
    %4532 = vmatprep.mubr.bf16.mxu0 %v2725
    %4533 = vmatmul.mubr.bf16.gmra.mrb[0].mxu0 %v2724
    %v4534 = vpop.f32.mrb[0].mxu0
    %v4535 = vadd.f32 %v4494, %v4534
    %v4536 = vpop.f32.mrb[0].mxu0
    %v4537 = vadd.f32 %v4496, %v4536
    %v4538 = vpop.f32.mrb[0].mxu0
    %v4539 = vpop.f32.mrb[0].mxu0
    %4540 = vdwg.mxu0
    %v4541 = vld [vmem:[#allocation8] sm:$0x3f]
    %v4543 = vlaneseq
    %v4544 = vshrl.u32 %v4543, 7
    %v4545 = vsub.s32 0, %v4544
    %v4546 = vrot.slane %v4541, %v4545
    %v4547 = vlaneseq
    %v4548 = vshrl.u32 %v4547, 7
    %v4549 = vsub.s32 1, %v4548
    %v4550 = vrot.slane %v4541, %v4549
    %v4551 = vlaneseq
    %v4552 = vshrl.u32 %v4551, 7
    %v4553 = vsub.s32 2, %v4552
    %v4554 = vrot.slane %v4541, %v4553
    %v4555 = vlaneseq
    %v4556 = vshrl.u32 %v4555, 7
    %v4557 = vsub.s32 3, %v4556
    %v4558 = vrot.slane %v4541, %v4557
    %v4559 = vlaneseq
    %v4560 = vshrl.u32 %v4559, 7
    %v4561 = vsub.s32 4, %v4560
    %v4562 = vrot.slane %v4541, %v4561
    %v4563 = vlaneseq
    %v4564 = vshrl.u32 %v4563, 7
    %v4565 = vsub.s32 5, %v4564
    %v4566 = vrot.slane %v4541, %v4565
    %v4573 = vadd.f32 %v4289, %v4546
    %v4574 = vadd.f32 %v4291, %v4550
    %v4575 = vadd.f32 %v4412, %v4554
    %v4576 = vadd.f32 %v4414, %v4558
    %v4577 = vadd.f32 %v4535, %v4562
    %v4578 = vadd.f32 %v4537, %v4566
    %vm4579 = vcmp.gt.f32.partialorder %v4573, 0.0
    %vm4580 = vcmp.gt.f32.partialorder %v4574, 0.0
    %vm4581 = vcmp.gt.f32.partialorder %v4575, 0.0
    %vm4582 = vcmp.gt.f32.partialorder %v4576, 0.0
    %vm4583 = vcmp.gt.f32.partialorder %v4577, 0.0
    %vm4584 = vcmp.gt.f32.partialorder %v4578, 0.0
    %v4585 = vmul.f32 %v4573, 0.01
    %v4586 = vmul.f32 %v4574, 0.01
    %v4587 = vmul.f32 %v4575, 0.01
    %v4588 = vmul.f32 %v4576, 0.01
    %v4589 = vmul.f32 %v4577, 0.01
    %v4590 = vmul.f32 %v4578, 0.01
    %v4591 = vsel %vm4579, %v4573, %v4585
    %v4592 = vsel %vm4580, %v4574, %v4586
    %v4593 = vsel %vm4581, %v4575, %v4587
    %v4594 = vsel %vm4582, %v4576, %v4588
    %v4595 = vsel %vm4583, %v4577, %v4589
    %v4596 = vsel %vm4584, %v4578, %v4590
    %v4597 = vpack.c.bf16 %v4591, %v4591
    %v4598 = vpack.c.bf16 %v4592, %v4592
    %v4599 = vpack.c.bf16 %v4593, %v4593
    %v4600 = vpack.c.bf16 %v4594, %v4594
    %v4601 = vpack.c.bf16 %v4595, %v4595
    %v4602 = vpack.c.bf16 %v4596, %v4596
    %v4603 = vld [vmem:[#allocation10] sm:$0xf]
    %v4604 = vld [vmem:[#allocation10 + $0x4] sm:$0xf]
    %v4605 = vld [vmem:[#allocation10 + $0x8] sm:$0xf]
    %v4606 = vld [vmem:[#allocation10 + $0xc] sm:$0xf]
    %v4607 = vld [vmem:[#allocation10 + $0x10] sm:$0xf]
    %v4608 = vld [vmem:[#allocation10 + $0x14] sm:$0xf]
    %v4609 = vld [vmem:[#allocation10 + $0x18] sm:$0xf]
    %v4610 = vld [vmem:[#allocation10 + $0x1c] sm:$0xf]
    %v4611 = vld [vmem:[#allocation10 + $0x20] sm:$0xf]
    %v4612 = vld [vmem:[#allocation10 + $0x24] sm:$0xf]
    %v4613 = vld [vmem:[#allocation10 + $0x28] sm:$0xf]
    %v4614 = vld [vmem:[#allocation10 + $0x2c] sm:$0xf]
    %v4615 = vld [vmem:[#allocation10 + $0x30] sm:$0xf]
    %v4616 = vld [vmem:[#allocation10 + $0x34] sm:$0xf]
    %v4617 = vld [vmem:[#allocation10 + $0x38] sm:$0xf]
    %v4618 = vld [vmem:[#allocation10 + $0x3c] sm:$0xf]
    %v4619 = vld [vmem:[#allocation10 + $0x40] sm:$0xf]
    %v4620 = vld [vmem:[#allocation10 + $0x44] sm:$0xf]
    %v4621 = vld [vmem:[#allocation10 + $0x48] sm:$0xf]
    %v4622 = vld [vmem:[#allocation10 + $0x4c] sm:$0xf]
    %v4623 = vld [vmem:[#allocation10 + $0x50] sm:$0xf]
    %v4624 = vld [vmem:[#allocation10 + $0x54] sm:$0xf]
    %v4625 = vld [vmem:[#allocation10 + $0x58] sm:$0xf]
    %v4626 = vld [vmem:[#allocation10 + $0x5c] sm:$0xf]
    %v4627 = vld [vmem:[#allocation10 + $0x60] sm:$0xf]
    %v4628 = vld [vmem:[#allocation10 + $0x64] sm:$0xf]
    %v4629 = vld [vmem:[#allocation10 + $0x68] sm:$0xf]
    %v4630 = vld [vmem:[#allocation10 + $0x6c] sm:$0xf]
    %v4631 = vld [vmem:[#allocation10 + $0x70] sm:$0xf]
    %v4632 = vld [vmem:[#allocation10 + $0x74] sm:$0xf]
    %v4633 = vld [vmem:[#allocation10 + $0x78] sm:$0xf]
    %v4634 = vld [vmem:[#allocation10 + $0x7c] sm:$0xf]
    %v4635 = vld [vmem:[#allocation10 + $0x80] sm:$0xf]
    %v4636 = vld [vmem:[#allocation10 + $0x84] sm:$0xf]
    %v4637 = vld [vmem:[#allocation10 + $0x88] sm:$0xf]
    %v4638 = vld [vmem:[#allocation10 + $0x8c] sm:$0xf]
    %v4639 = vld [vmem:[#allocation10 + $0x90] sm:$0xf]
    %v4640 = vld [vmem:[#allocation10 + $0x94] sm:$0xf]
    %v4641 = vld [vmem:[#allocation10 + $0x98] sm:$0xf]
    %v4642 = vld [vmem:[#allocation10 + $0x9c] sm:$0xf]
    %v4643 = vld [vmem:[#allocation10 + $0xa0] sm:$0xf]
    %v4644 = vld [vmem:[#allocation10 + $0xa4] sm:$0xf]
    %v4645 = vld [vmem:[#allocation10 + $0xa8] sm:$0xf]
    %v4646 = vld [vmem:[#allocation10 + $0xac] sm:$0xf]
    %v4647 = vld [vmem:[#allocation10 + $0xb0] sm:$0xf]
    %v4648 = vld [vmem:[#allocation10 + $0xb4] sm:$0xf]
    %v4649 = vld [vmem:[#allocation10 + $0xb8] sm:$0xf]
    %v4650 = vld [vmem:[#allocation10 + $0xbc] sm:$0xf]
    %v4651 = vld [vmem:[#allocation10 + $0xc0] sm:$0xf]
    %v4652 = vld [vmem:[#allocation10 + $0xc4] sm:$0xf]
    %v4653 = vld [vmem:[#allocation10 + $0xc8] sm:$0xf]
    %v4654 = vld [vmem:[#allocation10 + $0xcc] sm:$0xf]
    %v4655 = vld [vmem:[#allocation10 + $0xd0] sm:$0xf]
    %v4656 = vld [vmem:[#allocation10 + $0xd4] sm:$0xf]
    %v4657 = vld [vmem:[#allocation10 + $0xd8] sm:$0xf]
    %v4658 = vld [vmem:[#allocation10 + $0xdc] sm:$0xf]
    %v4659 = vld [vmem:[#allocation10 + $0xe0] sm:$0xf]
    %v4660 = vld [vmem:[#allocation10 + $0xe4] sm:$0xf]
    %v4661 = vld [vmem:[#allocation10 + $0xe8] sm:$0xf]
    %v4662 = vld [vmem:[#allocation10 + $0xec] sm:$0xf]
    %v4663 = vld [vmem:[#allocation10 + $0xf0] sm:$0xf]
    %v4664 = vld [vmem:[#allocation10 + $0xf4] sm:$0xf]
    %v4665 = vld [vmem:[#allocation10 + $0xf8] sm:$0xf]
    %v4666 = vld [vmem:[#allocation10 + $0xfc] sm:$0xf]
    %v4667 = vld [vmem:[#allocation10 + $0x100] sm:$0xf]
    %v4668 = vld [vmem:[#allocation10 + $0x104] sm:$0xf]
    %v4669 = vld [vmem:[#allocation10 + $0x108] sm:$0xf]
    %v4670 = vld [vmem:[#allocation10 + $0x10c] sm:$0xf]
    %v4671 = vld [vmem:[#allocation10 + $0x110] sm:$0xf]
    %v4672 = vld [vmem:[#allocation10 + $0x114] sm:$0xf]
    %v4673 = vld [vmem:[#allocation10 + $0x118] sm:$0xf]
    %v4674 = vld [vmem:[#allocation10 + $0x11c] sm:$0xf]
    %v4675 = vld [vmem:[#allocation10 + $0x120] sm:$0xf]
    %v4676 = vld [vmem:[#allocation10 + $0x124] sm:$0xf]
    %v4677 = vld [vmem:[#allocation10 + $0x128] sm:$0xf]
    %v4678 = vld [vmem:[#allocation10 + $0x12c] sm:$0xf]
    %v4679 = vld [vmem:[#allocation10 + $0x130] sm:$0xf]
    %v4680 = vld [vmem:[#allocation10 + $0x134] sm:$0xf]
    %v4681 = vld [vmem:[#allocation10 + $0x138] sm:$0xf]
    %v4682 = vld [vmem:[#allocation10 + $0x13c] sm:$0xf]
    %v4683 = vld [vmem:[#allocation10 + $0x140] sm:$0xf]
    %v4684 = vld [vmem:[#allocation10 + $0x144] sm:$0xf]
    %v4685 = vld [vmem:[#allocation10 + $0x148] sm:$0xf]
    %v4686 = vld [vmem:[#allocation10 + $0x14c] sm:$0xf]
    %v4687 = vld [vmem:[#allocation10 + $0x150] sm:$0xf]
    %v4688 = vld [vmem:[#allocation10 + $0x154] sm:$0xf]
    %v4689 = vld [vmem:[#allocation10 + $0x158] sm:$0xf]
    %v4690 = vld [vmem:[#allocation10 + $0x15c] sm:$0xf]
    %v4691 = vld [vmem:[#allocation10 + $0x160] sm:$0xf]
    %v4692 = vld [vmem:[#allocation10 + $0x164] sm:$0xf]
    %v4693 = vld [vmem:[#allocation10 + $0x168] sm:$0xf]
    %v4694 = vld [vmem:[#allocation10 + $0x16c] sm:$0xf]
    %v4695 = vld [vmem:[#allocation10 + $0x170] sm:$0xf]
    %v4696 = vld [vmem:[#allocation10 + $0x174] sm:$0xf]
    %v4697 = vld [vmem:[#allocation10 + $0x178] sm:$0xf]
    %v4698 = vld [vmem:[#allocation10 + $0x17c] sm:$0xf]
    %v4699 = vld [vmem:[#allocation8 + $0x6] sm:$0x1]
    %v4701 = vlaneseq
    %v4702 = vshrl.u32 %v4701, 7
    %v4703 = vsub.s32 0, %v4702
    %v4704 = vrot.slane %v4699, %v4703
    %v4802 = vunpack.c.l.b16 %v4603
    %v4803 = vunpack.c.l.b16 %v4604
    %v4804 = vunpack.c.l.b16 %v4605
    %v4805 = vunpack.c.l.b16 %v4606
    %v4806 = vunpack.c.l.b16 %v4607
    %v4807 = vunpack.c.l.b16 %v4608
    %v4808 = vunpack.c.l.b16 %v4609
    %v4809 = vunpack.c.l.b16 %v4610
    %v4810 = vunpack.c.l.b16 %v4611
    %v4811 = vunpack.c.l.b16 %v4612
    %v4812 = vunpack.c.l.b16 %v4613
    %v4813 = vunpack.c.l.b16 %v4614
    %v4814 = vunpack.c.l.b16 %v4615
    %v4815 = vunpack.c.l.b16 %v4616
    %v4816 = vunpack.c.l.b16 %v4617
    %v4817 = vunpack.c.l.b16 %v4618
    %v4818 = vunpack.c.l.b16 %v4619
    %v4819 = vunpack.c.l.b16 %v4620
    %v4820 = vunpack.c.l.b16 %v4621
    %v4821 = vunpack.c.l.b16 %v4622
    %v4822 = vunpack.c.l.b16 %v4623
    %v4823 = vunpack.c.l.b16 %v4624
    %v4824 = vunpack.c.l.b16 %v4625
    %v4825 = vunpack.c.l.b16 %v4626
    %v4826 = vunpack.c.l.b16 %v4627
    %v4827 = vunpack.c.l.b16 %v4628
    %v4828 = vunpack.c.l.b16 %v4629
    %v4829 = vunpack.c.l.b16 %v4630
    %v4830 = vunpack.c.l.b16 %v4631
    %v4831 = vunpack.c.l.b16 %v4632
    %v4832 = vunpack.c.l.b16 %v4633
    %v4833 = vunpack.c.l.b16 %v4634
    %v4834 = vunpack.c.l.b16 %v4635
    %v4835 = vunpack.c.l.b16 %v4636
    %v4836 = vunpack.c.l.b16 %v4637
    %v4837 = vunpack.c.l.b16 %v4638
    %v4838 = vunpack.c.l.b16 %v4639
    %v4839 = vunpack.c.l.b16 %v4640
    %v4840 = vunpack.c.l.b16 %v4641
    %v4841 = vunpack.c.l.b16 %v4642
    %v4842 = vunpack.c.l.b16 %v4643
    %v4843 = vunpack.c.l.b16 %v4644
    %v4844 = vunpack.c.l.b16 %v4645
    %v4845 = vunpack.c.l.b16 %v4646
    %v4846 = vunpack.c.l.b16 %v4647
    %v4847 = vunpack.c.l.b16 %v4648
    %v4848 = vunpack.c.l.b16 %v4649
    %v4849 = vunpack.c.l.b16 %v4650
    %v4850 = vunpack.c.l.b16 %v4651
    %v4851 = vunpack.c.l.b16 %v4652
    %v4852 = vunpack.c.l.b16 %v4653
    %v4853 = vunpack.c.l.b16 %v4654
    %v4854 = vunpack.c.l.b16 %v4655
    %v4855 = vunpack.c.l.b16 %v4656
    %v4856 = vunpack.c.l.b16 %v4657
    %v4857 = vunpack.c.l.b16 %v4658
    %v4858 = vunpack.c.l.b16 %v4659
    %v4859 = vunpack.c.l.b16 %v4660
    %v4860 = vunpack.c.l.b16 %v4661
    %v4861 = vunpack.c.l.b16 %v4662
    %v4862 = vunpack.c.l.b16 %v4663
    %v4863 = vunpack.c.l.b16 %v4664
    %v4864 = vunpack.c.l.b16 %v4665
    %v4865 = vunpack.c.l.b16 %v4666
    %v4866 = vunpack.c.l.b16 %v4667
    %v4867 = vunpack.c.l.b16 %v4668
    %v4868 = vunpack.c.l.b16 %v4669
    %v4869 = vunpack.c.l.b16 %v4670
    %v4870 = vunpack.c.l.b16 %v4671
    %v4871 = vunpack.c.l.b16 %v4672
    %v4872 = vunpack.c.l.b16 %v4673
    %v4873 = vunpack.c.l.b16 %v4674
    %v4874 = vunpack.c.l.b16 %v4675
    %v4875 = vunpack.c.l.b16 %v4676
    %v4876 = vunpack.c.l.b16 %v4677
    %v4877 = vunpack.c.l.b16 %v4678
    %v4878 = vunpack.c.l.b16 %v4679
    %v4879 = vunpack.c.l.b16 %v4680
    %v4880 = vunpack.c.l.b16 %v4681
    %v4881 = vunpack.c.l.b16 %v4682
    %v4882 = vunpack.c.l.b16 %v4683
    %v4883 = vunpack.c.l.b16 %v4684
    %v4884 = vunpack.c.l.b16 %v4685
    %v4885 = vunpack.c.l.b16 %v4686
    %v4886 = vunpack.c.l.b16 %v4687
    %v4887 = vunpack.c.l.b16 %v4688
    %v4888 = vunpack.c.l.b16 %v4689
    %v4889 = vunpack.c.l.b16 %v4690
    %v4890 = vunpack.c.l.b16 %v4691
    %v4891 = vunpack.c.l.b16 %v4692
    %v4892 = vunpack.c.l.b16 %v4693
    %v4893 = vunpack.c.l.b16 %v4694
    %v4894 = vunpack.c.l.b16 %v4695
    %v4895 = vunpack.c.l.b16 %v4696
    %v4896 = vunpack.c.l.b16 %v4697
    %v4897 = vunpack.c.l.b16 %v4698
    %v4898 = vpack.c.b16 %v4803, %v4802
    %v4899 = vpack.c.b16 %v4805, %v4804
    %v4900 = vpack.c.b16 %v4807, %v4806
    %v4901 = vpack.c.b16 %v4809, %v4808
    %v4902 = vpack.c.b16 %v4811, %v4810
    %v4903 = vpack.c.b16 %v4813, %v4812
    %v4904 = vpack.c.b16 %v4815, %v4814
    %v4905 = vpack.c.b16 %v4817, %v4816
    %v4906 = vpack.c.b16 %v4819, %v4818
    %v4907 = vpack.c.b16 %v4821, %v4820
    %v4908 = vpack.c.b16 %v4823, %v4822
    %v4909 = vpack.c.b16 %v4825, %v4824
    %v4910 = vpack.c.b16 %v4827, %v4826
    %v4911 = vpack.c.b16 %v4829, %v4828
    %v4912 = vpack.c.b16 %v4831, %v4830
    %v4913 = vpack.c.b16 %v4833, %v4832
    %v4914 = vpack.c.b16 %v4835, %v4834
    %v4915 = vpack.c.b16 %v4837, %v4836
    %v4916 = vpack.c.b16 %v4839, %v4838
    %v4917 = vpack.c.b16 %v4841, %v4840
    %v4918 = vpack.c.b16 %v4843, %v4842
    %v4919 = vpack.c.b16 %v4845, %v4844
    %v4920 = vpack.c.b16 %v4847, %v4846
    %v4921 = vpack.c.b16 %v4849, %v4848
    %v4922 = vpack.c.b16 %v4851, %v4850
    %v4923 = vpack.c.b16 %v4853, %v4852
    %v4924 = vpack.c.b16 %v4855, %v4854
    %v4925 = vpack.c.b16 %v4857, %v4856
    %v4926 = vpack.c.b16 %v4859, %v4858
    %v4927 = vpack.c.b16 %v4861, %v4860
    %v4928 = vpack.c.b16 %v4863, %v4862
    %v4929 = vpack.c.b16 %v4865, %v4864
    %v4930 = vpack.c.b16 %v4867, %v4866
    %v4931 = vpack.c.b16 %v4869, %v4868
    %v4932 = vpack.c.b16 %v4871, %v4870
    %v4933 = vpack.c.b16 %v4873, %v4872
    %v4934 = vpack.c.b16 %v4875, %v4874
    %v4935 = vpack.c.b16 %v4877, %v4876
    %v4936 = vpack.c.b16 %v4879, %v4878
    %v4937 = vpack.c.b16 %v4881, %v4880
    %v4938 = vpack.c.b16 %v4883, %v4882
    %v4939 = vpack.c.b16 %v4885, %v4884
    %v4940 = vpack.c.b16 %v4887, %v4886
    %v4941 = vpack.c.b16 %v4889, %v4888
    %v4942 = vpack.c.b16 %v4891, %v4890
    %v4943 = vpack.c.b16 %v4893, %v4892
    %v4944 = vpack.c.b16 %v4895, %v4894
    %v4945 = vpack.c.b16 %v4897, %v4896
    %4994 = vmatprep.subr.bf16.mxu0 0
    %4995 = vmatpush1.bf16.msra.mxu0 %v4898
    %4996 = vmatprep.subr.bf16.mxu0 0
    %4997 = vmatpush1.bf16.msra.mxu0 %v4899
    %4998 = vmatprep.subr.bf16.mxu0 0
    %4999 = vmatpush1.bf16.msra.mxu0 %v4900
    %5000 = vmatprep.subr.bf16.mxu0 0
    %5001 = vmatpush1.bf16.msra.mxu0 %v4901
    %5002 = vmatprep.subr.bf16.mxu0 0
    %5003 = vmatpush1.bf16.msra.mxu0 %v4902
    %5004 = vmatprep.subr.bf16.mxu0 0
    %5005 = vmatpush1.bf16.msra.mxu0 %v4903
    %5006 = vmatprep.subr.bf16.mxu0 0
    %5007 = vmatpush1.bf16.msra.mxu0 %v4904
    %5008 = vmatprep.subr.bf16.mxu0 0
    %5009 = vmatpush1.bf16.msra.mxu0 %v4905
    %5010 = vmatprep.subr.bf16.mxu0 0
    %5011 = vmatpush1.bf16.msra.mxu0 %v4906
    %5012 = vmatprep.subr.bf16.mxu0 0
    %5013 = vmatpush1.bf16.msra.mxu0 %v4907
    %5014 = vmatprep.subr.bf16.mxu0 0
    %5015 = vmatpush1.bf16.msra.mxu0 %v4908
    %5016 = vmatprep.subr.bf16.mxu0 0
    %5017 = vmatpush1.bf16.msra.mxu0 %v4909
    %5018 = vmatprep.subr.bf16.mxu0 0
    %5019 = vmatpush1.bf16.msra.mxu0 %v4910
    %5020 = vmatprep.subr.bf16.mxu0 0
    %5021 = vmatpush1.bf16.msra.mxu0 %v4911
    %5022 = vmatprep.subr.bf16.mxu0 0
    %5023 = vmatpush1.bf16.msra.mxu0 %v4912
    %5024 = vmatprep.subr.bf16.mxu0 0
    %5025 = vmatpush1.bf16.msra.mxu0 %v4913
    %5026 = vmatprep.mubr.bf16.mxu0 %v4598
    %5027 = vmatmul.mubr.bf16.gmra.mrb[0].mxu0 %v4597
    %v5028 = vpop.f32.mrb[0].mxu0
    %v5029 = vadd.f32 %v4704, %v5028
    %v5030 = vpop.f32.mrb[0].mxu0
    %v5031 = vpop.f32.mrb[0].mxu0
    %v5032 = vpop.f32.mrb[0].mxu0
    %5033 = vdwg.mxu0
    %5034 = vmatprep.subr.bf16.mxu0 0
    %5035 = vmatpush1.bf16.msra.mxu0 %v4914
    %5036 = vmatprep.subr.bf16.mxu0 0
    %5037 = vmatpush1.bf16.msra.mxu0 %v4915
    %5038 = vmatprep.subr.bf16.mxu0 0
    %5039 = vmatpush1.bf16.msra.mxu0 %v4916
    %5040 = vmatprep.subr.bf16.mxu0 0
    %5041 = vmatpush1.bf16.msra.mxu0 %v4917
    %5042 = vmatprep.subr.bf16.mxu0 0
    %5043 = vmatpush1.bf16.msra.mxu0 %v4918
    %5044 = vmatprep.subr.bf16.mxu0 0
    %5045 = vmatpush1.bf16.msra.mxu0 %v4919
    %5046 = vmatprep.subr.bf16.mxu0 0
    %5047 = vmatpush1.bf16.msra.mxu0 %v4920
    %5048 = vmatprep.subr.bf16.mxu0 0
    %5049 = vmatpush1.bf16.msra.mxu0 %v4921
    %5050 = vmatprep.subr.bf16.mxu0 0
    %5051 = vmatpush1.bf16.msra.mxu0 %v4922
    %5052 = vmatprep.subr.bf16.mxu0 0
    %5053 = vmatpush1.bf16.msra.mxu0 %v4923
    %5054 = vmatprep.subr.bf16.mxu0 0
    %5055 = vmatpush1.bf16.msra.mxu0 %v4924
    %5056 = vmatprep.subr.bf16.mxu0 0
    %5057 = vmatpush1.bf16.msra.mxu0 %v4925
    %5058 = vmatprep.subr.bf16.mxu0 0
    %5059 = vmatpush1.bf16.msra.mxu0 %v4926
    %5060 = vmatprep.subr.bf16.mxu0 0
    %5061 = vmatpush1.bf16.msra.mxu0 %v4927
    %5062 = vmatprep.subr.bf16.mxu0 0
    %5063 = vmatpush1.bf16.msra.mxu0 %v4928
    %5064 = vmatprep.subr.bf16.mxu0 0
    %5065 = vmatpush1.bf16.msra.mxu0 %v4929
    %5066 = vmatprep.mubr.bf16.mxu0 %v4600
    %5067 = vmatmul.mubr.bf16.gmra.mrb[0].mxu0 %v4599
    %v5068 = vpop.f32.mrb[0].mxu0
    %v5069 = vadd.f32 %v5029, %v5068
    %v5070 = vpop.f32.mrb[0].mxu0
    %v5071 = vpop.f32.mrb[0].mxu0
    %v5072 = vpop.f32.mrb[0].mxu0
    %5073 = vdwg.mxu0
    %5074 = vmatprep.subr.bf16.mxu0 0
    %5075 = vmatpush1.bf16.msra.mxu0 %v4930
    %5076 = vmatprep.subr.bf16.mxu0 0
    %5077 = vmatpush1.bf16.msra.mxu0 %v4931
    %5078 = vmatprep.subr.bf16.mxu0 0
    %5079 = vmatpush1.bf16.msra.mxu0 %v4932
    %5080 = vmatprep.subr.bf16.mxu0 0
    %5081 = vmatpush1.bf16.msra.mxu0 %v4933
    %5082 = vmatprep.subr.bf16.mxu0 0
    %5083 = vmatpush1.bf16.msra.mxu0 %v4934
    %5084 = vmatprep.subr.bf16.mxu0 0
    %5085 = vmatpush1.bf16.msra.mxu0 %v4935
    %5086 = vmatprep.subr.bf16.mxu0 0
    %5087 = vmatpush1.bf16.msra.mxu0 %v4936
    %5088 = vmatprep.subr.bf16.mxu0 0
    %5089 = vmatpush1.bf16.msra.mxu0 %v4937
    %5090 = vmatprep.subr.bf16.mxu0 0
    %5091 = vmatpush1.bf16.msra.mxu0 %v4938
    %5092 = vmatprep.subr.bf16.mxu0 0
    %5093 = vmatpush1.bf16.msra.mxu0 %v4939
    %5094 = vmatprep.subr.bf16.mxu0 0
    %5095 = vmatpush1.bf16.msra.mxu0 %v4940
    %5096 = vmatprep.subr.bf16.mxu0 0
    %5097 = vmatpush1.bf16.msra.mxu0 %v4941
    %5098 = vmatprep.subr.bf16.mxu0 0
    %5099 = vmatpush1.bf16.msra.mxu0 %v4942
    %5100 = vmatprep.subr.bf16.mxu0 0
    %5101 = vmatpush1.bf16.msra.mxu0 %v4943
    %5102 = vmatprep.subr.bf16.mxu0 0
    %5103 = vmatpush1.bf16.msra.mxu0 %v4944
    %5104 = vmatprep.subr.bf16.mxu0 0
    %5105 = vmatpush1.bf16.msra.mxu0 %v4945
    %5106 = vmatprep.mubr.bf16.mxu0 %v4602
    %5107 = vmatmul.mubr.bf16.gmra.mrb[0].mxu0 %v4601
    %v5108 = vpop.f32.mrb[0].mxu0
    %v5109 = vadd.f32 %v5069, %v5108
    %v5110 = vpop.f32.mrb[0].mxu0
    %v5111 = vpop.f32.mrb[0].mxu0
    %v5112 = vpop.f32.mrb[0].mxu0
    %5113 = vdwg.mxu0
    %5114 = vst [vmem:[#allocation11] sm:$0x3] %v5109
    // Predicated region
    $region42: #{tpu_custom_call.1} parent=1 // pred_check
      _
    $region43: #{tpu_custom_call.1} parent=1 // pred_check_branch
      %5116 = sbr.rel (0) target = $region45
    $region44: #{tpu_custom_call.1} parent=1 // pred_region
      %s5118 = ssub.s32 32, 32
      %5119 = vsyncadd [#allocation4], %s5118
      %s5121 = sshll.u32 [#allocation11], 4
      %s5122 = int_to_ptr.vmem [resolvable:$true] %s5121
      %5124 = dma.vmem_to_hbm [thread:$0]  %s5122, 32, %s5, [#allocation4]
    $region45: #{tpu_custom_call.1} parent=1 // pred_fallthru
      _
    // Predicated region
    $region46: #{tpu_custom_call.1} parent=1 // pred_check
      _
    $region47: #{tpu_custom_call.1} parent=1 // pred_check_branch
      %5126 = sbr.rel (0) target = $region49
    $region48: #{tpu_custom_call.1} parent=1 // pred_region
      %5127 = dma.done [#allocation4], 32
    $region49: #{tpu_custom_call.1} parent=1 // pred_fallthru
      _
    %5128 = vsyncpa [#allocation3], 1
    %5129 = vsyncpa [#allocation6], 1
    %5130 = vsyncpa [#allocation9], 1
    %5131 = vsyncpa [#allocation4], 1

</llo_original>
